<compile_context>
chip_gen: v5e
topology: v5e:2x2
jax: 0.10.0
libtpu: 0.0.40
codegen_flags: <defaults>
</compile_context>

<pallas_src>
import jax
import jax.numpy as jnp
from jax import lax
from jax.experimental import pallas as pl
from jax.experimental.pallas import tpu as pltpu


def _round_up(x, m):
    return ((x + m - 1) // m) * m


def _cdiv(a, b):
    return -(-a // b)


# ---------------------------------------------------------------------------
# Pallas kernel: one grid step == `bt` batch elements, fully batched.
# ---------------------------------------------------------------------------
def _make_predict_kernel(bt, cin, wp, t_total):
    k9 = 9 * cin

    def predict_kernel(x_ref, wk_ref, convb_ref, fcw_ref, fcb_ref, pool_ref,
                       out_ref, xcol_ref):
        # x_ref    : (1, cin, T)        T = bt*LP, batch concatenated on lanes
        # wk_ref   : (cout, 9*cin)      conv taps, column = (ky*3+kx)*cin + c
        # convb_ref: (cout, 1)
        # fcw_ref  : (cout, NPAD)       zero-padded classifier weights
        # fcb_ref  : (1, NPAD)          bias, -1e30 in padded class columns
        # pool_ref : (bt, T)            block-diag valid-mask * 1/(H*W)
        # out_ref  : (1, bt, NPAD)      softmax probabilities
        # xcol_ref : (9*cin, T)         VMEM scratch: stacked shifted copies
        x = x_ref[0]                                       # (cin, T)

        # Stack the 9 lane-shifted copies (one roll per tap for the whole tile).
        for k in range(9):
            ky, kx = divmod(k, 3)
            off = ky * wp + kx
            xs = x if off == 0 else pltpu.roll(x, shift=t_total - off, axis=1)
            xcol_ref[pl.ds(k * cin, cin), :] = xs

        # 3x3 conv == one MXU dot with K = 9*cin.
        acc = jnp.dot(wk_ref[...], xcol_ref[...],
                      preferred_element_type=jnp.float32)   # (cout, T)
        conv = jnp.maximum(acc + convb_ref[...], 0.0)        # bias + ReLU

        # Global average pool (mask + 1/(H*W) folded into pool matrix):
        # pooled[b, c] = sum_p pool[b, p] * conv[c, p]   (trans-B MXU dot).
        pooled = lax.dot_general(pool_ref[...], conv,
                                 (((1,), (1,)), ((), ())),
                                 preferred_element_type=jnp.float32)  # (bt, cout)

        # Classifier head + numerically stable softmax, whole batch tile at once.
        logits = jnp.dot(pooled, fcw_ref[...],
                         preferred_element_type=jnp.float32) + fcb_ref[...]
        m = jnp.max(logits, axis=1, keepdims=True)
        e = jnp.exp(logits - m)
        s = jnp.sum(e, axis=1, keepdims=True)
        r = pl.reciprocal(s, approx=True)                    # EUP
        r = r * (2.0 - s * r)                                # one Newton step
        out_ref[0] = e * r                                   # (bt, NPAD) dense vst

    return predict_kernel


# ---------------------------------------------------------------------------
# Wrapper: layout glue (pad + flatten + batch-on-lanes) + pallas_call.
# ---------------------------------------------------------------------------
def model_wrapper_forward(x_nchw, conv_w, conv_b, fc_w, fc_b, *, block_b=None):
    """Equivalent of ModelWrapper(model).forward(x) == model.predict(x)."""
    B, Cin, H, W = x_nchw.shape
    Cout = conv_w.shape[0]
    ncls = fc_w.shape[1]
    Hp, Wp = H + 2, W + 2
    LP = _round_up(Hp * Wp, 128)          # lane-aligned flattened spatial size
    NPAD = _round_up(ncls, 128)           # lane-aligned class dimension

    # Roll-wrap contamination invariant: wrapped columns (from the next batch
    # element) must land strictly beyond every valid conv-output position.
    assert LP - (2 * Wp + 2) >= H * Wp, "LP padding too small for roll-based conv"

    # --- batch tile: full batch on 1-TC chips (v5e/v6e), >=2 parallel steps
    #     on v7x; capped by a conservative per-step VMEM budget. -------------
    if block_b is None:
        kind = ""
        try:
            kind = jax.devices()[0].device_kind.lower()
        except Exception:
            pass
        two_cores = "v7" in kind
        per_elem = (2 * Cin + 9 * Cin + 4) * LP * 4          # x(2 bufs)+scratch+pool
        cap = max(1, (16 << 20) // per_elem)
        block_b = min(_cdiv(B, 2) if two_cores else B, cap)
        block_b = max(1, block_b)
    grid_b = _cdiv(B, block_b)
    Bpad = grid_b * block_b
    T = block_b * LP

    # --- glue: SAME zero-pad (stays NCHW), flatten spatial, pad lanes/batch,
    #     concatenate the batch tile on the lane axis. ------------------------
    xp = jnp.pad(x_nchw.astype(jnp.float32), ((0, 0), (0, 0), (1, 1), (1, 1)))
    xflat = xp.reshape(B, Cin, Hp * Wp)
    xflat = jnp.pad(xflat, ((0, Bpad - B), (0, 0), (0, LP - Hp * Wp)))
    xg = (xflat.reshape(grid_b, block_b, Cin, LP)
                .transpose(0, 2, 1, 3)
                .reshape(grid_b, Cin, T))

    # conv weight (Cout, Cin, 3, 3) -> (Cout, 9*Cin), column = (ky*3+kx)*Cin + c
    wk2 = jnp.transpose(conv_w.astype(jnp.float32), (0, 2, 3, 1)).reshape(Cout, 9 * Cin)
    convb_col = conv_b.reshape(Cout, 1).astype(jnp.float32)

    fcw_pad = jnp.pad(fc_w.astype(jnp.float32), ((0, 0), (0, NPAD - ncls)))
    fcb_row = fc_b.reshape(1, ncls).astype(jnp.float32)
    if NPAD > ncls:
        fcb_row = jnp.concatenate(
            [fcb_row, jnp.full((1, NPAD - ncls), -1e30, jnp.float32)], axis=1)

    # Pooling matrix: block-diagonal over batch, valid conv positions only,
    # scaled by 1/(H*W). pool[b, b*LP + p] = mask[p] / (H*W).
    pos = jnp.arange(LP)
    mask_lp = (((pos < H * Wp) & ((pos % Wp) < W)).astype(jnp.float32)
               * (1.0 / (H * W)))
    pool = jnp.kron(jnp.eye(block_b, dtype=jnp.float32), mask_lp.reshape(1, LP))

    kernel = _make_predict_kernel(block_b, Cin, Wp, T)

    out = pl.pallas_call(
        kernel,
        out_shape=jax.ShapeDtypeStruct((grid_b, block_b, NPAD), jnp.float32),
        grid_spec=pltpu.PrefetchScalarGridSpec(
            num_scalar_prefetch=0,
            grid=(grid_b,),
            in_specs=[
                pl.BlockSpec((1, Cin, T), lambda i: (i, 0, 0)),
                pl.BlockSpec((Cout, 9 * Cin), lambda i: (0, 0)),
                pl.BlockSpec((Cout, 1), lambda i: (0, 0)),
                pl.BlockSpec((Cout, NPAD), lambda i: (0, 0)),
                pl.BlockSpec((1, NPAD), lambda i: (0, 0)),
                pl.BlockSpec((block_b, T), lambda i: (0, 0)),
            ],
            out_specs=pl.BlockSpec((1, block_b, NPAD), lambda i: (i, 0, 0)),
            scratch_shapes=[pltpu.VMEM((9 * Cin, T), jnp.float32)],
        ),
        compiler_params=pltpu.CompilerParams(
            dimension_semantics=("parallel",)),
    )(xg, wk2, convb_col, fcw_pad, fcb_row, pool)

    return out.reshape(Bpad, NPAD)[:B, :ncls]                 # (B, NCLS) probs


# ---------------------------------------------------------------------------
# Pure-JAX reference of model.predict (for verification).
# ---------------------------------------------------------------------------
def predict_reference(x_nchw, conv_w, conv_b, fc_w, fc_b):
    y = lax.conv_general_dilated(
        x_nchw, conv_w, window_strides=(1, 1), padding="SAME",
        dimension_numbers=("NCHW", "OIHW", "NCHW"))
    y = y + conv_b[None, :, None, None]
    y = jnp.maximum(y, 0.0)
    pooled = jnp.mean(y, axis=(2, 3))                          # (B, Cout)
    logits = pooled @ fc_w + fc_b[None, :]
    return jax.nn.softmax(logits, axis=-1)


if __name__ == "__main__":
    B, Cin, H, W = 8, 4, 16, 16
    Cout, NCLS = 8, 10

    key = jax.random.PRNGKey(0)
    kx, kw, kb, kfw, kfb = jax.random.split(key, 5)

    x = jax.random.normal(kx, (B, Cin, H, W), dtype=jnp.float32)
    conv_w = 0.1 * jax.random.normal(kw, (Cout, Cin, 3, 3), dtype=jnp.float32)
    conv_b = 0.1 * jax.random.normal(kb, (Cout,), dtype=jnp.float32)
    fc_w = 0.1 * jax.random.normal(kfw, (Cout, NCLS), dtype=jnp.float32)
    fc_b = 0.1 * jax.random.normal(kfb, (NCLS,), dtype=jnp.float32)

    out = model_wrapper_forward(x, conv_w, conv_b, fc_w, fc_b)
    jax.block_until_ready(out)

    ref = predict_reference(x, conv_w, conv_b, fc_w, fc_b)
    assert out.shape == (B, NCLS)
    assert jnp.allclose(out, ref, atol=1e-4, rtol=1e-4), (
        f"max abs err {jnp.max(jnp.abs(out - ref))}")

    print("KERNEL_OK")
</pallas_src>

<mosaic_0001>
module attributes {stable_mosaic.version = 11 : i64} {
  func.func @predict_kernel(%arg0: i32, %arg1: memref<1x4x3072xf32, #tpu.memory_space<vmem>>, %arg2: memref<8x36xf32, #tpu.memory_space<vmem>>, %arg3: memref<8x1xf32, #tpu.memory_space<vmem>>, %arg4: memref<8x128xf32, #tpu.memory_space<vmem>>, %arg5: memref<1x128xf32, #tpu.memory_space<vmem>>, %arg6: memref<8x3072xf32, #tpu.memory_space<vmem>>, %arg7: memref<1x8x128xf32, #tpu.memory_space<vmem>>, %arg8: memref<36x3072xf32, #tpu.memory_space<vmem>>) attributes {dimension_semantics = [#tpu.dimension_semantics<parallel>], iteration_bounds = array<i64: 1>, scalar_prefetch = 0 : i64, scratch_operands = 1 : i64, tpu.core_type = #tpu.core_type<tc>, window_params = [{transform_indices = @transform_0, window_bounds = array<i64: 1, 4, 3072>}, {pipeline_mode = #tpu.pipeline_mode<synchronous>, transform_indices = @transform_1, window_bounds = array<i64: 8, 36>}, {pipeline_mode = #tpu.pipeline_mode<synchronous>, transform_indices = @transform_2, window_bounds = array<i64: 8, 1>}, {pipeline_mode = #tpu.pipeline_mode<synchronous>, transform_indices = @transform_3, window_bounds = array<i64: 8, 128>}, {pipeline_mode = #tpu.pipeline_mode<synchronous>, transform_indices = @transform_4, window_bounds = array<i64: 1, 128>}, {pipeline_mode = #tpu.pipeline_mode<synchronous>, transform_indices = @transform_5, window_bounds = array<i64: 8, 3072>}, {transform_indices = @transform_6, window_bounds = array<i64: 1, 8, 128>}]} {
    %c0 = arith.constant 0 : index
    %c0_0 = arith.constant 0 : index
    %c0_1 = arith.constant 0 : index
    %0 = vector.load %arg1[%c0, %c0_0, %c0_1] : memref<1x4x3072xf32, #tpu.memory_space<vmem>>, vector<1x4x3072xf32>
    %1 = vector.shape_cast %0 : vector<1x4x3072xf32> to vector<4x3072xf32>
    %c0_2 = arith.constant 0 : index
    %c0_3 = arith.constant 0 : index
    %2 = vector.load %arg8[%c0_2, %c0_3] : memref<36x3072xf32, #tpu.memory_space<vmem>>, vector<4x3072xf32>
    tpu.vector_store %arg8[%c0_2, %c0_3], %1 {strides = array<i32>} : memref<36x3072xf32, #tpu.memory_space<vmem>>, vector<4x3072xf32>,
    %c3071_i32 = arith.constant 3071 : i32
    %3 = tpu.dynamic_rotate %1 by %c3071_i32 dim 1 : vector<4x3072xf32>, i32 -> vector<4x3072xf32>
    %c4 = arith.constant 4 : index
    %c0_4 = arith.constant 0 : index
    %4 = vector.load %arg8[%c4, %c0_4] : memref<36x3072xf32, #tpu.memory_space<vmem>>, vector<4x3072xf32>
    tpu.vector_store %arg8[%c4, %c0_4], %3 {strides = array<i32>} : memref<36x3072xf32, #tpu.memory_space<vmem>>, vector<4x3072xf32>,
    %c3070_i32 = arith.constant 3070 : i32
    %5 = tpu.dynamic_rotate %1 by %c3070_i32 dim 1 : vector<4x3072xf32>, i32 -> vector<4x3072xf32>
    %c8 = arith.constant 8 : index
    %c0_5 = arith.constant 0 : index
    %6 = vector.load %arg8[%c8, %c0_5] : memref<36x3072xf32, #tpu.memory_space<vmem>>, vector<4x3072xf32>
    tpu.vector_store %arg8[%c8, %c0_5], %5 {strides = array<i32>} : memref<36x3072xf32, #tpu.memory_space<vmem>>, vector<4x3072xf32>,
    %c3054_i32 = arith.constant 3054 : i32
    %7 = tpu.dynamic_rotate %1 by %c3054_i32 dim 1 : vector<4x3072xf32>, i32 -> vector<4x3072xf32>
    %c12 = arith.constant 12 : index
    %c0_6 = arith.constant 0 : index
    %8 = vector.load %arg8[%c12, %c0_6] : memref<36x3072xf32, #tpu.memory_space<vmem>>, vector<4x3072xf32>
    tpu.vector_store %arg8[%c12, %c0_6], %7 {strides = array<i32>} : memref<36x3072xf32, #tpu.memory_space<vmem>>, vector<4x3072xf32>,
    %c3053_i32 = arith.constant 3053 : i32
    %9 = tpu.dynamic_rotate %1 by %c3053_i32 dim 1 : vector<4x3072xf32>, i32 -> vector<4x3072xf32>
    %c16 = arith.constant 16 : index
    %c0_7 = arith.constant 0 : index
    %10 = vector.load %arg8[%c16, %c0_7] : memref<36x3072xf32, #tpu.memory_space<vmem>>, vector<4x3072xf32>
    tpu.vector_store %arg8[%c16, %c0_7], %9 {strides = array<i32>} : memref<36x3072xf32, #tpu.memory_space<vmem>>, vector<4x3072xf32>,
    %c3052_i32 = arith.constant 3052 : i32
    %11 = tpu.dynamic_rotate %1 by %c3052_i32 dim 1 : vector<4x3072xf32>, i32 -> vector<4x3072xf32>
    %c20 = arith.constant 20 : index
    %c0_8 = arith.constant 0 : index
    %12 = vector.load %arg8[%c20, %c0_8] : memref<36x3072xf32, #tpu.memory_space<vmem>>, vector<4x3072xf32>
    tpu.vector_store %arg8[%c20, %c0_8], %11 {strides = array<i32>} : memref<36x3072xf32, #tpu.memory_space<vmem>>, vector<4x3072xf32>,
    %c3036_i32 = arith.constant 3036 : i32
    %13 = tpu.dynamic_rotate %1 by %c3036_i32 dim 1 : vector<4x3072xf32>, i32 -> vector<4x3072xf32>
    %c24 = arith.constant 24 : index
    %c0_9 = arith.constant 0 : index
    %14 = vector.load %arg8[%c24, %c0_9] : memref<36x3072xf32, #tpu.memory_space<vmem>>, vector<4x3072xf32>
    tpu.vector_store %arg8[%c24, %c0_9], %13 {strides = array<i32>} : memref<36x3072xf32, #tpu.memory_space<vmem>>, vector<4x3072xf32>,
    %c3035_i32 = arith.constant 3035 : i32
    %15 = tpu.dynamic_rotate %1 by %c3035_i32 dim 1 : vector<4x3072xf32>, i32 -> vector<4x3072xf32>
    %c28 = arith.constant 28 : index
    %c0_10 = arith.constant 0 : index
    %16 = vector.load %arg8[%c28, %c0_10] : memref<36x3072xf32, #tpu.memory_space<vmem>>, vector<4x3072xf32>
    tpu.vector_store %arg8[%c28, %c0_10], %15 {strides = array<i32>} : memref<36x3072xf32, #tpu.memory_space<vmem>>, vector<4x3072xf32>,
    %c3034_i32 = arith.constant 3034 : i32
    %17 = tpu.dynamic_rotate %1 by %c3034_i32 dim 1 : vector<4x3072xf32>, i32 -> vector<4x3072xf32>
    %c32 = arith.constant 32 : index
    %c0_11 = arith.constant 0 : index
    %18 = vector.load %arg8[%c32, %c0_11] : memref<36x3072xf32, #tpu.memory_space<vmem>>, vector<4x3072xf32>
    tpu.vector_store %arg8[%c32, %c0_11], %17 {strides = array<i32>} : memref<36x3072xf32, #tpu.memory_space<vmem>>, vector<4x3072xf32>,
    %c0_12 = arith.constant 0 : index
    %c0_13 = arith.constant 0 : index
    %19 = vector.load %arg2[%c0_12, %c0_13] : memref<8x36xf32, #tpu.memory_space<vmem>>, vector<8x36xf32>
    %c0_14 = arith.constant 0 : index
    %c0_15 = arith.constant 0 : index
    %20 = vector.load %arg8[%c0_14, %c0_15] : memref<36x3072xf32, #tpu.memory_space<vmem>>, vector<36x3072xf32>
    %cst = arith.constant dense<0.000000e+00> : vector<8x3072xf32>
    %21 = tpu.matmul %19, %20, %cst {dimension_numbers = #tpu.dot_dimension_numbers<[1], [0], [0], [1], [0, 0, 1, 1], [], []>} : vector<8x36xf32>, vector<36x3072xf32>, vector<8x3072xf32> -> vector<8x3072xf32>
    %c0_16 = arith.constant 0 : index
    %c0_17 = arith.constant 0 : index
    %22 = vector.load %arg3[%c0_16, %c0_17] : memref<8x1xf32, #tpu.memory_space<vmem>>, vector<8x1xf32>
    %23 = vector.broadcast %22 : vector<8x1xf32> to vector<8x3072xf32>
    %24 = arith.addf %21, %23 : vector<8x3072xf32>
    %cst_18 = arith.constant 0.000000e+00 : f32
    %25 = vector.broadcast %cst_18 : f32 to vector<8x3072xf32>
    %26 = arith.maximumf %24, %25 : vector<8x3072xf32>
    %c0_19 = arith.constant 0 : index
    %c0_20 = arith.constant 0 : index
    %27 = vector.load %arg6[%c0_19, %c0_20] : memref<8x3072xf32, #tpu.memory_space<vmem>>, vector<8x3072xf32>
    %cst_21 = arith.constant dense<0.000000e+00> : vector<8x8xf32>
    %28 = tpu.matmul %27, %26, %cst_21 {dimension_numbers = #tpu.dot_dimension_numbers<[1], [1], [0], [0], [0, 0, 1, 0], [], []>} : vector<8x3072xf32>, vector<8x3072xf32>, vector<8x8xf32> -> vector<8x8xf32>
    %c0_22 = arith.constant 0 : index
    %c0_23 = arith.constant 0 : index
    %29 = vector.load %arg4[%c0_22, %c0_23] : memref<8x128xf32, #tpu.memory_space<vmem>>, vector<8x128xf32>
    %cst_24 = arith.constant dense<0.000000e+00> : vector<8x128xf32>
    %30 = tpu.matmul %28, %29, %cst_24 {dimension_numbers = #tpu.dot_dimension_numbers<[1], [0], [0], [1], [0, 0, 1, 1], [], []>} : vector<8x8xf32>, vector<8x128xf32>, vector<8x128xf32> -> vector<8x128xf32>
    %c0_25 = arith.constant 0 : index
    %c0_26 = arith.constant 0 : index
    %31 = vector.load %arg5[%c0_25, %c0_26] : memref<1x128xf32, #tpu.memory_space<vmem>>, vector<1x128xf32>
    %32 = vector.broadcast %31 : vector<1x128xf32> to vector<8x128xf32>
    %33 = arith.addf %30, %32 : vector<8x128xf32>
    %cst_27 = arith.constant dense<0xFF800000> : vector<8xf32>
    %34 = vector.multi_reduction <maximumf>, %33, %cst_27 [1] : vector<8x128xf32> to vector<8xf32>
    %35 = vector.shape_cast %34 : vector<8xf32> to vector<8x1xf32>
    %36 = vector.broadcast %35 : vector<8x1xf32> to vector<8x128xf32>
    %37 = arith.subf %33, %36 : vector<8x128xf32>
    %38 = math.exp %37 : vector<8x128xf32>
    %cst_28 = arith.constant dense<0.000000e+00> : vector<8xf32>
    %39 = vector.multi_reduction <add>, %38, %cst_28 [1] : vector<8x128xf32> to vector<8xf32>
    %40 = vector.shape_cast %39 : vector<8xf32> to vector<8x1xf32>
    %41 = tpu.reciprocal %40 {approx = true} : vector<8x1xf32> -> vector<8x1xf32>
    %42 = arith.mulf %40, %41 : vector<8x1xf32>
    %cst_29 = arith.constant 2.000000e+00 : f32
    %43 = vector.broadcast %cst_29 : f32 to vector<8x1xf32>
    %44 = arith.subf %43, %42 : vector<8x1xf32>
    %45 = arith.mulf %41, %44 : vector<8x1xf32>
    %46 = vector.broadcast %45 : vector<8x1xf32> to vector<8x128xf32>
    %47 = arith.mulf %38, %46 : vector<8x128xf32>
    %c0_30 = arith.constant 0 : index
    %c0_31 = arith.constant 0 : index
    %c0_32 = arith.constant 0 : index
    %48 = vector.load %arg7[%c0_30, %c0_31, %c0_32] : memref<1x8x128xf32, #tpu.memory_space<vmem>>, vector<1x8x128xf32>
    %49 = vector.shape_cast %48 : vector<1x8x128xf32> to vector<8x128xf32>
    %50 = vector.shape_cast %47 : vector<8x128xf32> to vector<1x8x128xf32>
    tpu.vector_store %arg7[%c0_30, %c0_31, %c0_32], %50 {strides = array<i32>} : memref<1x8x128xf32, #tpu.memory_space<vmem>>, vector<1x8x128xf32>,
    return
  }
  func.func @transform_0(%arg0: i32) -> (i32, i32, i32) {
    %c0_i32 = arith.constant 0 : i32
    %c0_i32_0 = arith.constant 0 : i32
    %c0_i32_1 = arith.constant 0 : i32
    return %arg0, %c0_i32, %c0_i32_0 : i32, i32, i32
  }
  func.func @transform_1(%arg0: i32) -> (i32, i32) {
    %c0_i32 = arith.constant 0 : i32
    %c0_i32_0 = arith.constant 0 : i32
    %c0_i32_1 = arith.constant 0 : i32
    return %c0_i32, %c0_i32_0 : i32, i32
  }
  func.func @transform_2(%arg0: i32) -> (i32, i32) {
    %c0_i32 = arith.constant 0 : i32
    %c0_i32_0 = arith.constant 0 : i32
    %c0_i32_1 = arith.constant 0 : i32
    return %c0_i32, %c0_i32_0 : i32, i32
  }
  func.func @transform_3(%arg0: i32) -> (i32, i32) {
    %c0_i32 = arith.constant 0 : i32
    %c0_i32_0 = arith.constant 0 : i32
    %c0_i32_1 = arith.constant 0 : i32
    return %c0_i32, %c0_i32_0 : i32, i32
  }
  func.func @transform_4(%arg0: i32) -> (i32, i32) {
    %c0_i32 = arith.constant 0 : i32
    %c0_i32_0 = arith.constant 0 : i32
    %c0_i32_1 = arith.constant 0 : i32
    return %c0_i32, %c0_i32_0 : i32, i32
  }
  func.func @transform_5(%arg0: i32) -> (i32, i32) {
    %c0_i32 = arith.constant 0 : i32
    %c0_i32_0 = arith.constant 0 : i32
    %c0_i32_1 = arith.constant 0 : i32
    return %c0_i32, %c0_i32_0 : i32, i32
  }
  func.func @transform_6(%arg0: i32) -> (i32, i32, i32) {
    %c0_i32 = arith.constant 0 : i32
    %c0_i32_0 = arith.constant 0 : i32
    %c0_i32_1 = arith.constant 0 : i32
    return %arg0, %c0_i32, %c0_i32_0 : i32, i32, i32
  }
}

</mosaic_0001>

<llo_original>
// kernel: tpu_custom_call.1
$region0: #{tpu_custom_call.1}
  #allocation0 [shape = 'u32[]', space=smem, size = 0x4, offset = 0x4, fixed_abs, tag = 'smem constant byte address 0x4 - core index']
  #allocation1 [shape = 'u32[72,128]{1,0:T(1,128)}', space=vmem, size = 0x9000, scoped, tag = 'internal scratch']
  #allocation2 [shape = 'f32[36,3072]{1,0:T(8,128)}', space=vmem, size = 0x78000, scoped, tag = 'scratch operand']
  %s0 = inlined_call_operand.hbm [shape: f32[1,4,3072], index: 0, kind: input, shape index: {}]
  %s1 = inlined_call_operand.vmem [shape: f32[8,36], index: 1, kind: input, shape index: {}]
  %s2 = inlined_call_operand.vmem [shape: f32[8,1], index: 2, kind: input, shape index: {}]
  %s3 = inlined_call_operand.hbm [shape: f32[8,128], index: 3, kind: input, shape index: {}]
  %s4 = inlined_call_operand.vmem [shape: f32[1,128], index: 4, kind: input, shape index: {}]
  %s5 = inlined_call_operand.hbm [shape: f32[8,3072], index: 5, kind: input, shape index: {}]
  %s6 = inlined_call_operand.hbm [shape: f32[1,8,128], index: 6, kind: output, shape index: {}]
  %s7 = sld [smem:[#allocation0]]
  $region46: #{tpu_custom_call.1} parent=0
    _
  %s9 = ssub.s32 1, %s7
  %s10 = scalar_select 0, %s9, %s7
  $region1: #{tpu_custom_call.1} parent=0
    #allocation3 [shape = 'u8[49152]{0}', space=vmem, size = 0xc000, scoped, tag = 'input window, operand 0, single buffered']
    #allocation4 [shape = 's32[1]{0}', space=sflag, size = 0x4, scoped, tag = 'scoped memory for tpu_custom_call.1']
    #allocation5 [shape = 's32[1]{0}', space=sflag, size = 0x4, scoped, tag = 'scoped memory for tpu_custom_call.1']
    #allocation6 [shape = 'u8[4096]{0}', space=vmem, size = 0x1000, scoped, tag = 'input window, operand 3, single buffered']
    #allocation7 [shape = 's32[1]{0}', space=sflag, size = 0x4, scoped, tag = 'scoped memory for tpu_custom_call.1']
    #allocation8 [shape = 'u8[98304]{0}', space=vmem, size = 0x18000, scoped, tag = 'input window, operand 5, single buffered']
    #allocation9 [shape = 'u8[4096]{0}', space=vmem, size = 0x1000, scoped, tag = 'output window, operand 0, single buffered']
    %11 = vsyncpa [#allocation4], 0
    %12 = vsyncpa [#allocation7], 0
    %13 = vsyncpa [#allocation5], 0
    // Predicated region
    $region2: #{tpu_custom_call.1} parent=1 // pred_check
      _
    $region3: #{tpu_custom_call.1} parent=1 // pred_check_branch
      %15 = sbr.rel (0) target = $region5
    $region4: #{tpu_custom_call.1} parent=1 // pred_region
      %17 = vsyncadd [#allocation4], 0
      %s19 = sshll.u32 %s0, 4
      %s20 = int_to_ptr.hbm [resolvable:$true] %s19
      %s21 = sshll.u32 [#allocation3], 4
      %s22 = int_to_ptr.vmem [resolvable:$true] %s21
      %24 = dma.hbm_to_vmem [thread:$0]  %s20, 1536, %s22, [#allocation4]
    $region5: #{tpu_custom_call.1} parent=1 // pred_fallthru
      _
    // Predicated region
    $region6: #{tpu_custom_call.1} parent=1 // pred_check
      _
    $region7: #{tpu_custom_call.1} parent=1 // pred_check_branch
      %26 = sbr.rel (0) target = $region9
    $region8: #{tpu_custom_call.1} parent=1 // pred_region
      _
    $region9: #{tpu_custom_call.1} parent=1 // pred_fallthru
      _
    // Predicated region
    $region10: #{tpu_custom_call.1} parent=1 // pred_check
      _
    $region11: #{tpu_custom_call.1} parent=1 // pred_check_branch
      %28 = sbr.rel (0) target = $region13
    $region12: #{tpu_custom_call.1} parent=1 // pred_region
      _
    $region13: #{tpu_custom_call.1} parent=1 // pred_fallthru
      _
    // Predicated region
    $region14: #{tpu_custom_call.1} parent=1 // pred_check
      _
    $region15: #{tpu_custom_call.1} parent=1 // pred_check_branch
      %30 = sbr.rel (0) target = $region17
    $region16: #{tpu_custom_call.1} parent=1 // pred_region
      %32 = vsyncadd [#allocation7], 0
      %s34 = sshll.u32 %s3, 4
      %s35 = int_to_ptr.hbm [resolvable:$true] %s34
      %s36 = sshll.u32 [#allocation6], 4
      %s37 = int_to_ptr.vmem [resolvable:$true] %s36
      %39 = dma.hbm_to_vmem [thread:$0]  %s35, 128, %s37, [#allocation7]
    $region17: #{tpu_custom_call.1} parent=1 // pred_fallthru
      _
    // Predicated region
    $region18: #{tpu_custom_call.1} parent=1 // pred_check
      _
    $region19: #{tpu_custom_call.1} parent=1 // pred_check_branch
      %41 = sbr.rel (0) target = $region21
    $region20: #{tpu_custom_call.1} parent=1 // pred_region
      _
    $region21: #{tpu_custom_call.1} parent=1 // pred_fallthru
      _
    // Predicated region
    $region22: #{tpu_custom_call.1} parent=1 // pred_check
      _
    $region23: #{tpu_custom_call.1} parent=1 // pred_check_branch
      %43 = sbr.rel (0) target = $region25
    $region24: #{tpu_custom_call.1} parent=1 // pred_region
      %45 = vsyncadd [#allocation7], 0
      %s47 = sshll.u32 %s5, 4
      %s48 = int_to_ptr.hbm [resolvable:$true] %s47
      %s49 = sshll.u32 [#allocation8], 4
      %s50 = int_to_ptr.vmem [resolvable:$true] %s49
      %52 = dma.hbm_to_vmem [thread:$0]  %s48, 3072, %s50, [#allocation7]
    $region25: #{tpu_custom_call.1} parent=1 // pred_fallthru
      _
    // Predicated region
    $region26: #{tpu_custom_call.1} parent=1 // pred_check
      _
    $region27: #{tpu_custom_call.1} parent=1 // pred_check_branch
      %54 = sbr.rel (0) target = $region29
    $region28: #{tpu_custom_call.1} parent=1 // pred_region
      %56 = dma.done [#allocation4], 1536
    $region29: #{tpu_custom_call.1} parent=1 // pred_fallthru
      _
    // Predicated region
    $region30: #{tpu_custom_call.1} parent=1 // pred_check
      _
    $region31: #{tpu_custom_call.1} parent=1 // pred_check_branch
      %58 = sbr.rel (0) target = $region33
    $region32: #{tpu_custom_call.1} parent=1 // pred_region
      %60 = dma.done [#allocation7], 128
    $region33: #{tpu_custom_call.1} parent=1 // pred_fallthru
      _
    // Predicated region
    $region34: #{tpu_custom_call.1} parent=1 // pred_check
      _
    $region35: #{tpu_custom_call.1} parent=1 // pred_check_branch
      %62 = sbr.rel (0) target = $region37
    $region36: #{tpu_custom_call.1} parent=1 // pred_region
      %64 = dma.done [#allocation7], 3072
    $region37: #{tpu_custom_call.1} parent=1 // pred_fallthru
      _
    %v65 = vld [vmem:[#allocation3] sm:$0xff]
    %v66 = vld [vmem:[#allocation3 + $0x8] sm:$0xff]
    %v67 = vld [vmem:[#allocation3 + $0x10] sm:$0xff]
    %v68 = vld [vmem:[#allocation3 + $0x18] sm:$0xff]
    %v69 = vld [vmem:[#allocation3 + $0x20] sm:$0xff]
    %v70 = vld [vmem:[#allocation3 + $0x28] sm:$0xff]
    %v71 = vld [vmem:[#allocation3 + $0x30] sm:$0xff]
    %v72 = vld [vmem:[#allocation3 + $0x38] sm:$0xff]
    %v73 = vld [vmem:[#allocation3 + $0x40] sm:$0xff]
    %v74 = vld [vmem:[#allocation3 + $0x48] sm:$0xff]
    %v75 = vld [vmem:[#allocation3 + $0x50] sm:$0xff]
    %v76 = vld [vmem:[#allocation3 + $0x58] sm:$0xff]
    %89 = vst [vmem:[#allocation1] ss:$2 sm:$0xff] %v65
    %s90 = scalar_lea.vmem [#allocation1], 16
    %91 = vst [vmem:[%s90] ss:$2 sm:$0xff] %v66
    %s92 = scalar_lea.vmem [#allocation1], 32
    %93 = vst [vmem:[%s92] ss:$2 sm:$0xff] %v67
    %s94 = scalar_lea.vmem [#allocation1], 48
    %95 = vst [vmem:[%s94] ss:$2 sm:$0xff] %v68
    %v96 = vld.sshfl [vmem:[#allocation1] sm:$0xff pattern:$0x75316420]
    %v97 = vld.sshfl [vmem:[#allocation1 + $0x8] sm:$0xff pattern:$0x75316420]
    %v98 = vld.sshfl [vmem:[#allocation1 + $0x10] sm:$0xff pattern:$0x75316420]
    %v99 = vld.sshfl [vmem:[#allocation1 + $0x18] sm:$0xff pattern:$0x75316420]
    %v100 = vld.sshfl [vmem:[#allocation1 + $0x20] sm:$0xff pattern:$0x75316420]
    %v101 = vld.sshfl [vmem:[#allocation1 + $0x28] sm:$0xff pattern:$0x75316420]
    %v102 = vld.sshfl [vmem:[#allocation1 + $0x30] sm:$0xff pattern:$0x75316420]
    %v103 = vld.sshfl [vmem:[#allocation1 + $0x38] sm:$0xff pattern:$0x75316420]
    %104 = vst [vmem:[#allocation1] ss:$2 sm:$0xff] %v69
    %105 = vst [vmem:[%s90] ss:$2 sm:$0xff] %v70
    %106 = vst [vmem:[%s92] ss:$2 sm:$0xff] %v71
    %107 = vst [vmem:[%s94] ss:$2 sm:$0xff] %v72
    %v108 = vld.sshfl [vmem:[#allocation1] sm:$0xff pattern:$0x75316420]
    %v109 = vld.sshfl [vmem:[#allocation1 + $0x8] sm:$0xff pattern:$0x75316420]
    %v110 = vld.sshfl [vmem:[#allocation1 + $0x10] sm:$0xff pattern:$0x75316420]
    %v111 = vld.sshfl [vmem:[#allocation1 + $0x18] sm:$0xff pattern:$0x75316420]
    %v112 = vld.sshfl [vmem:[#allocation1 + $0x20] sm:$0xff pattern:$0x75316420]
    %v113 = vld.sshfl [vmem:[#allocation1 + $0x28] sm:$0xff pattern:$0x75316420]
    %v114 = vld.sshfl [vmem:[#allocation1 + $0x30] sm:$0xff pattern:$0x75316420]
    %v115 = vld.sshfl [vmem:[#allocation1 + $0x38] sm:$0xff pattern:$0x75316420]
    %116 = vst [vmem:[#allocation1] ss:$2 sm:$0xff] %v73
    %117 = vst [vmem:[%s90] ss:$2 sm:$0xff] %v74
    %118 = vst [vmem:[%s92] ss:$2 sm:$0xff] %v75
    %119 = vst [vmem:[%s94] ss:$2 sm:$0xff] %v76
    %v120 = vld.sshfl [vmem:[#allocation1] sm:$0xff pattern:$0x75316420]
    %v121 = vld.sshfl [vmem:[#allocation1 + $0x8] sm:$0xff pattern:$0x75316420]
    %v122 = vld.sshfl [vmem:[#allocation1 + $0x10] sm:$0xff pattern:$0x75316420]
    %v123 = vld.sshfl [vmem:[#allocation1 + $0x18] sm:$0xff pattern:$0x75316420]
    %v124 = vld.sshfl [vmem:[#allocation1 + $0x20] sm:$0xff pattern:$0x75316420]
    %v125 = vld.sshfl [vmem:[#allocation1 + $0x28] sm:$0xff pattern:$0x75316420]
    %v126 = vld.sshfl [vmem:[#allocation1 + $0x30] sm:$0xff pattern:$0x75316420]
    %v127 = vld.sshfl [vmem:[#allocation1 + $0x38] sm:$0xff pattern:$0x75316420]
    %152 = vst [vmem:[#allocation2] sm:$0xf] %v96
    %153 = vst [vmem:[#allocation2 + $0x8] sm:$0xf] %v97
    %154 = vst [vmem:[#allocation2 + $0x10] sm:$0xf] %v98
    %155 = vst [vmem:[#allocation2 + $0x18] sm:$0xf] %v99
    %156 = vst [vmem:[#allocation2 + $0x20] sm:$0xf] %v100
    %157 = vst [vmem:[#allocation2 + $0x28] sm:$0xf] %v101
    %158 = vst [vmem:[#allocation2 + $0x30] sm:$0xf] %v102
    %159 = vst [vmem:[#allocation2 + $0x38] sm:$0xf] %v103
    %160 = vst [vmem:[#allocation2 + $0x40] sm:$0xf] %v108
    %161 = vst [vmem:[#allocation2 + $0x48] sm:$0xf] %v109
    %162 = vst [vmem:[#allocation2 + $0x50] sm:$0xf] %v110
    %163 = vst [vmem:[#allocation2 + $0x58] sm:$0xf] %v111
    %164 = vst [vmem:[#allocation2 + $0x60] sm:$0xf] %v112
    %165 = vst [vmem:[#allocation2 + $0x68] sm:$0xf] %v113
    %166 = vst [vmem:[#allocation2 + $0x70] sm:$0xf] %v114
    %167 = vst [vmem:[#allocation2 + $0x78] sm:$0xf] %v115
    %168 = vst [vmem:[#allocation2 + $0x80] sm:$0xf] %v120
    %169 = vst [vmem:[#allocation2 + $0x88] sm:$0xf] %v121
    %170 = vst [vmem:[#allocation2 + $0x90] sm:$0xf] %v122
    %171 = vst [vmem:[#allocation2 + $0x98] sm:$0xf] %v123
    %172 = vst [vmem:[#allocation2 + $0xa0] sm:$0xf] %v124
    %173 = vst [vmem:[#allocation2 + $0xa8] sm:$0xf] %v125
    %174 = vst [vmem:[#allocation2 + $0xb0] sm:$0xf] %v126
    %175 = vst [vmem:[#allocation2 + $0xb8] sm:$0xf] %v127
    %176 = vst [vmem:[#allocation1] ss:$2 sm:$0xff] %v65
    %s177 = scalar_lea.vmem [#allocation1], 16
    %178 = vst [vmem:[%s177] ss:$2 sm:$0xff] %v66
    %s179 = scalar_lea.vmem [#allocation1], 32
    %180 = vst [vmem:[%s179] ss:$2 sm:$0xff] %v67
    %s181 = scalar_lea.vmem [#allocation1], 48
    %182 = vst [vmem:[%s181] ss:$2 sm:$0xff] %v68
    %v183 = vld.sshfl [vmem:[#allocation1] sm:$0xff pattern:$0x75316420]
    %v184 = vld.sshfl [vmem:[#allocation1 + $0x8] sm:$0xff pattern:$0x75316420]
    %v185 = vld.sshfl [vmem:[#allocation1 + $0x10] sm:$0xff pattern:$0x75316420]
    %v186 = vld.sshfl [vmem:[#allocation1 + $0x18] sm:$0xff pattern:$0x75316420]
    %v187 = vld.sshfl [vmem:[#allocation1 + $0x20] sm:$0xff pattern:$0x75316420]
    %v188 = vld.sshfl [vmem:[#allocation1 + $0x28] sm:$0xff pattern:$0x75316420]
    %v189 = vld.sshfl [vmem:[#allocation1 + $0x30] sm:$0xff pattern:$0x75316420]
    %v190 = vld.sshfl [vmem:[#allocation1 + $0x38] sm:$0xff pattern:$0x75316420]
    %191 = vst [vmem:[#allocation1] ss:$2 sm:$0xff] %v69
    %192 = vst [vmem:[%s177] ss:$2 sm:$0xff] %v70
    %193 = vst [vmem:[%s179] ss:$2 sm:$0xff] %v71
    %194 = vst [vmem:[%s181] ss:$2 sm:$0xff] %v72
    %v195 = vld.sshfl [vmem:[#allocation1] sm:$0xff pattern:$0x75316420]
    %v196 = vld.sshfl [vmem:[#allocation1 + $0x8] sm:$0xff pattern:$0x75316420]
    %v197 = vld.sshfl [vmem:[#allocation1 + $0x10] sm:$0xff pattern:$0x75316420]
    %v198 = vld.sshfl [vmem:[#allocation1 + $0x18] sm:$0xff pattern:$0x75316420]
    %v199 = vld.sshfl [vmem:[#allocation1 + $0x20] sm:$0xff pattern:$0x75316420]
    %v200 = vld.sshfl [vmem:[#allocation1 + $0x28] sm:$0xff pattern:$0x75316420]
    %v201 = vld.sshfl [vmem:[#allocation1 + $0x30] sm:$0xff pattern:$0x75316420]
    %v202 = vld.sshfl [vmem:[#allocation1 + $0x38] sm:$0xff pattern:$0x75316420]
    %203 = vst [vmem:[#allocation1] ss:$2 sm:$0xff] %v73
    %204 = vst [vmem:[%s177] ss:$2 sm:$0xff] %v74
    %205 = vst [vmem:[%s179] ss:$2 sm:$0xff] %v75
    %206 = vst [vmem:[%s181] ss:$2 sm:$0xff] %v76
    %v207 = vld.sshfl [vmem:[#allocation1] sm:$0xff pattern:$0x75316420]
    %v208 = vld.sshfl [vmem:[#allocation1 + $0x8] sm:$0xff pattern:$0x75316420]
    %v209 = vld.sshfl [vmem:[#allocation1 + $0x10] sm:$0xff pattern:$0x75316420]
    %v210 = vld.sshfl [vmem:[#allocation1 + $0x18] sm:$0xff pattern:$0x75316420]
    %v211 = vld.sshfl [vmem:[#allocation1 + $0x20] sm:$0xff pattern:$0x75316420]
    %v212 = vld.sshfl [vmem:[#allocation1 + $0x28] sm:$0xff pattern:$0x75316420]
    %v213 = vld.sshfl [vmem:[#allocation1 + $0x30] sm:$0xff pattern:$0x75316420]
    %v214 = vld.sshfl [vmem:[#allocation1 + $0x38] sm:$0xff pattern:$0x75316420]
    %239 = vrot.lane.b32.xlu0 %v183, 127
    %v240 = vpop.permute.xlu0 %239
    %241 = vrot.lane.b32.xlu0 %v184, 127
    %v242 = vpop.permute.xlu0 %241
    %243 = vrot.lane.b32.xlu0 %v185, 127
    %v244 = vpop.permute.xlu0 %243
    %245 = vrot.lane.b32.xlu0 %v186, 127
    %v246 = vpop.permute.xlu0 %245
    %247 = vrot.lane.b32.xlu0 %v187, 127
    %v248 = vpop.permute.xlu0 %247
    %249 = vrot.lane.b32.xlu0 %v188, 127
    %v250 = vpop.permute.xlu0 %249
    %251 = vrot.lane.b32.xlu0 %v189, 127
    %v252 = vpop.permute.xlu0 %251
    %253 = vrot.lane.b32.xlu0 %v190, 127
    %v254 = vpop.permute.xlu0 %253
    %255 = vrot.lane.b32.xlu0 %v195, 127
    %v256 = vpop.permute.xlu0 %255
    %257 = vrot.lane.b32.xlu0 %v196, 127
    %v258 = vpop.permute.xlu0 %257
    %259 = vrot.lane.b32.xlu0 %v197, 127
    %v260 = vpop.permute.xlu0 %259
    %261 = vrot.lane.b32.xlu0 %v198, 127
    %v262 = vpop.permute.xlu0 %261
    %263 = vrot.lane.b32.xlu0 %v199, 127
    %v264 = vpop.permute.xlu0 %263
    %265 = vrot.lane.b32.xlu0 %v200, 127
    %v266 = vpop.permute.xlu0 %265
    %267 = vrot.lane.b32.xlu0 %v201, 127
    %v268 = vpop.permute.xlu0 %267
    %269 = vrot.lane.b32.xlu0 %v202, 127
    %v270 = vpop.permute.xlu0 %269
    %271 = vrot.lane.b32.xlu0 %v207, 127
    %v272 = vpop.permute.xlu0 %271
    %273 = vrot.lane.b32.xlu0 %v208, 127
    %v274 = vpop.permute.xlu0 %273
    %275 = vrot.lane.b32.xlu0 %v209, 127
    %v276 = vpop.permute.xlu0 %275
    %277 = vrot.lane.b32.xlu0 %v210, 127
    %v278 = vpop.permute.xlu0 %277
    %279 = vrot.lane.b32.xlu0 %v211, 127
    %v280 = vpop.permute.xlu0 %279
    %281 = vrot.lane.b32.xlu0 %v212, 127
    %v282 = vpop.permute.xlu0 %281
    %283 = vrot.lane.b32.xlu0 %v213, 127
    %v284 = vpop.permute.xlu0 %283
    %285 = vrot.lane.b32.xlu0 %v214, 127
    %v286 = vpop.permute.xlu0 %285
    %v287 = vlaneseq
    %v288 = vand.u32 %v287, 127
    %vm289 = vcmp.lt.s32.totalorder %v288, 127
    %v290 = vsel %vm289, %v284, %v286
    %v291 = vsel %vm289, %v282, %v284
    %v292 = vsel %vm289, %v280, %v282
    %v293 = vsel %vm289, %v278, %v280
    %v294 = vsel %vm289, %v276, %v278
    %v295 = vsel %vm289, %v274, %v276
    %v296 = vsel %vm289, %v272, %v274
    %v297 = vsel %vm289, %v270, %v272
    %v298 = vsel %vm289, %v268, %v270
    %v299 = vsel %vm289, %v266, %v268
    %v300 = vsel %vm289, %v264, %v266
    %v301 = vsel %vm289, %v262, %v264
    %v302 = vsel %vm289, %v260, %v262
    %v303 = vsel %vm289, %v258, %v260
    %v304 = vsel %vm289, %v256, %v258
    %v305 = vsel %vm289, %v254, %v256
    %v306 = vsel %vm289, %v252, %v254
    %v307 = vsel %vm289, %v250, %v252
    %v308 = vsel %vm289, %v248, %v250
    %v309 = vsel %vm289, %v246, %v248
    %v310 = vsel %vm289, %v244, %v246
    %v311 = vsel %vm289, %v242, %v244
    %v312 = vsel %vm289, %v240, %v242
    %v313 = vsel %vm289, %v286, %v240
    %v338 = vrot.slane %v312, 4
    %v339 = vrot.slane %v311, 4
    %v340 = vrot.slane %v310, 4
    %v341 = vrot.slane %v309, 4
    %v342 = vrot.slane %v308, 4
    %v343 = vrot.slane %v307, 4
    %v344 = vrot.slane %v306, 4
    %v345 = vrot.slane %v305, 4
    %v346 = vrot.slane %v304, 4
    %v347 = vrot.slane %v303, 4
    %v348 = vrot.slane %v302, 4
    %v349 = vrot.slane %v301, 4
    %v350 = vrot.slane %v300, 4
    %v351 = vrot.slane %v299, 4
    %v352 = vrot.slane %v298, 4
    %v353 = vrot.slane %v297, 4
    %v354 = vrot.slane %v296, 4
    %v355 = vrot.slane %v295, 4
    %v356 = vrot.slane %v294, 4
    %v357 = vrot.slane %v293, 4
    %v358 = vrot.slane %v292, 4
    %v359 = vrot.slane %v291, 4
    %v360 = vrot.slane %v290, 4
    %v361 = vrot.slane %v313, 4
    %386 = vst [vmem:[#allocation2] sm:$0xf0] %v338
    %387 = vst [vmem:[#allocation2 + $0x8] sm:$0xf0] %v339
    %388 = vst [vmem:[#allocation2 + $0x10] sm:$0xf0] %v340
    %389 = vst [vmem:[#allocation2 + $0x18] sm:$0xf0] %v341
    %390 = vst [vmem:[#allocation2 + $0x20] sm:$0xf0] %v342
    %391 = vst [vmem:[#allocation2 + $0x28] sm:$0xf0] %v343
    %392 = vst [vmem:[#allocation2 + $0x30] sm:$0xf0] %v344
    %393 = vst [vmem:[#allocation2 + $0x38] sm:$0xf0] %v345
    %394 = vst [vmem:[#allocation2 + $0x40] sm:$0xf0] %v346
    %395 = vst [vmem:[#allocation2 + $0x48] sm:$0xf0] %v347
    %396 = vst [vmem:[#allocation2 + $0x50] sm:$0xf0] %v348
    %397 = vst [vmem:[#allocation2 + $0x58] sm:$0xf0] %v349
    %398 = vst [vmem:[#allocation2 + $0x60] sm:$0xf0] %v350
    %399 = vst [vmem:[#allocation2 + $0x68] sm:$0xf0] %v351
    %400 = vst [vmem:[#allocation2 + $0x70] sm:$0xf0] %v352
    %401 = vst [vmem:[#allocation2 + $0x78] sm:$0xf0] %v353
    %402 = vst [vmem:[#allocation2 + $0x80] sm:$0xf0] %v354
    %403 = vst [vmem:[#allocation2 + $0x88] sm:$0xf0] %v355
    %404 = vst [vmem:[#allocation2 + $0x90] sm:$0xf0] %v356
    %405 = vst [vmem:[#allocation2 + $0x98] sm:$0xf0] %v357
    %406 = vst [vmem:[#allocation2 + $0xa0] sm:$0xf0] %v358
    %407 = vst [vmem:[#allocation2 + $0xa8] sm:$0xf0] %v359
    %408 = vst [vmem:[#allocation2 + $0xb0] sm:$0xf0] %v360
    %409 = vst [vmem:[#allocation2 + $0xb8] sm:$0xf0] %v361
    %410 = vst [vmem:[#allocation1] ss:$2 sm:$0xff] %v65
    %s411 = scalar_lea.vmem [#allocation1], 16
    %412 = vst [vmem:[%s411] ss:$2 sm:$0xff] %v66
    %s413 = scalar_lea.vmem [#allocation1], 32
    %414 = vst [vmem:[%s413] ss:$2 sm:$0xff] %v67
    %s415 = scalar_lea.vmem [#allocation1], 48
    %416 = vst [vmem:[%s415] ss:$2 sm:$0xff] %v68
    %v417 = vld.sshfl [vmem:[#allocation1] sm:$0xff pattern:$0x75316420]
    %v418 = vld.sshfl [vmem:[#allocation1 + $0x8] sm:$0xff pattern:$0x75316420]
    %v419 = vld.sshfl [vmem:[#allocation1 + $0x10] sm:$0xff pattern:$0x75316420]
    %v420 = vld.sshfl [vmem:[#allocation1 + $0x18] sm:$0xff pattern:$0x75316420]
    %v421 = vld.sshfl [vmem:[#allocation1 + $0x20] sm:$0xff pattern:$0x75316420]
    %v422 = vld.sshfl [vmem:[#allocation1 + $0x28] sm:$0xff pattern:$0x75316420]
    %v423 = vld.sshfl [vmem:[#allocation1 + $0x30] sm:$0xff pattern:$0x75316420]
    %v424 = vld.sshfl [vmem:[#allocation1 + $0x38] sm:$0xff pattern:$0x75316420]
    %425 = vst [vmem:[#allocation1] ss:$2 sm:$0xff] %v69
    %426 = vst [vmem:[%s411] ss:$2 sm:$0xff] %v70
    %427 = vst [vmem:[%s413] ss:$2 sm:$0xff] %v71
    %428 = vst [vmem:[%s415] ss:$2 sm:$0xff] %v72
    %v429 = vld.sshfl [vmem:[#allocation1] sm:$0xff pattern:$0x75316420]
    %v430 = vld.sshfl [vmem:[#allocation1 + $0x8] sm:$0xff pattern:$0x75316420]
    %v431 = vld.sshfl [vmem:[#allocation1 + $0x10] sm:$0xff pattern:$0x75316420]
    %v432 = vld.sshfl [vmem:[#allocation1 + $0x18] sm:$0xff pattern:$0x75316420]
    %v433 = vld.sshfl [vmem:[#allocation1 + $0x20] sm:$0xff pattern:$0x75316420]
    %v434 = vld.sshfl [vmem:[#allocation1 + $0x28] sm:$0xff pattern:$0x75316420]
    %v435 = vld.sshfl [vmem:[#allocation1 + $0x30] sm:$0xff pattern:$0x75316420]
    %v436 = vld.sshfl [vmem:[#allocation1 + $0x38] sm:$0xff pattern:$0x75316420]
    %437 = vst [vmem:[#allocation1] ss:$2 sm:$0xff] %v73
    %438 = vst [vmem:[%s411] ss:$2 sm:$0xff] %v74
    %439 = vst [vmem:[%s413] ss:$2 sm:$0xff] %v75
    %440 = vst [vmem:[%s415] ss:$2 sm:$0xff] %v76
    %v441 = vld.sshfl [vmem:[#allocation1] sm:$0xff pattern:$0x75316420]
    %v442 = vld.sshfl [vmem:[#allocation1 + $0x8] sm:$0xff pattern:$0x75316420]
    %v443 = vld.sshfl [vmem:[#allocation1 + $0x10] sm:$0xff pattern:$0x75316420]
    %v444 = vld.sshfl [vmem:[#allocation1 + $0x18] sm:$0xff pattern:$0x75316420]
    %v445 = vld.sshfl [vmem:[#allocation1 + $0x20] sm:$0xff pattern:$0x75316420]
    %v446 = vld.sshfl [vmem:[#allocation1 + $0x28] sm:$0xff pattern:$0x75316420]
    %v447 = vld.sshfl [vmem:[#allocation1 + $0x30] sm:$0xff pattern:$0x75316420]
    %v448 = vld.sshfl [vmem:[#allocation1 + $0x38] sm:$0xff pattern:$0x75316420]
    %473 = vrot.lane.b32.xlu0 %v417, 126
    %v474 = vpop.permute.xlu0 %473
    %475 = vrot.lane.b32.xlu0 %v418, 126
    %v476 = vpop.permute.xlu0 %475
    %477 = vrot.lane.b32.xlu0 %v419, 126
    %v478 = vpop.permute.xlu0 %477
    %479 = vrot.lane.b32.xlu0 %v420, 126
    %v480 = vpop.permute.xlu0 %479
    %481 = vrot.lane.b32.xlu0 %v421, 126
    %v482 = vpop.permute.xlu0 %481
    %483 = vrot.lane.b32.xlu0 %v422, 126
    %v484 = vpop.permute.xlu0 %483
    %485 = vrot.lane.b32.xlu0 %v423, 126
    %v486 = vpop.permute.xlu0 %485
    %487 = vrot.lane.b32.xlu0 %v424, 126
    %v488 = vpop.permute.xlu0 %487
    %489 = vrot.lane.b32.xlu0 %v429, 126
    %v490 = vpop.permute.xlu0 %489
    %491 = vrot.lane.b32.xlu0 %v430, 126
    %v492 = vpop.permute.xlu0 %491
    %493 = vrot.lane.b32.xlu0 %v431, 126
    %v494 = vpop.permute.xlu0 %493
    %495 = vrot.lane.b32.xlu0 %v432, 126
    %v496 = vpop.permute.xlu0 %495
    %497 = vrot.lane.b32.xlu0 %v433, 126
    %v498 = vpop.permute.xlu0 %497
    %499 = vrot.lane.b32.xlu0 %v434, 126
    %v500 = vpop.permute.xlu0 %499
    %501 = vrot.lane.b32.xlu0 %v435, 126
    %v502 = vpop.permute.xlu0 %501
    %503 = vrot.lane.b32.xlu0 %v436, 126
    %v504 = vpop.permute.xlu0 %503
    %505 = vrot.lane.b32.xlu0 %v441, 126
    %v506 = vpop.permute.xlu0 %505
    %507 = vrot.lane.b32.xlu0 %v442, 126
    %v508 = vpop.permute.xlu0 %507
    %509 = vrot.lane.b32.xlu0 %v443, 126
    %v510 = vpop.permute.xlu0 %509
    %511 = vrot.lane.b32.xlu0 %v444, 126
    %v512 = vpop.permute.xlu0 %511
    %513 = vrot.lane.b32.xlu0 %v445, 126
    %v514 = vpop.permute.xlu0 %513
    %515 = vrot.lane.b32.xlu0 %v446, 126
    %v516 = vpop.permute.xlu0 %515
    %517 = vrot.lane.b32.xlu0 %v447, 126
    %v518 = vpop.permute.xlu0 %517
    %519 = vrot.lane.b32.xlu0 %v448, 126
    %v520 = vpop.permute.xlu0 %519
    %vm521 = vcmp.lt.s32.totalorder %v288, 126
    %v522 = vsel %vm521, %v518, %v520
    %v523 = vsel %vm521, %v516, %v518
    %v524 = vsel %vm521, %v514, %v516
    %v525 = vsel %vm521, %v512, %v514
    %v526 = vsel %vm521, %v510, %v512
    %v527 = vsel %vm521, %v508, %v510
    %v528 = vsel %vm521, %v506, %v508
    %v529 = vsel %vm521, %v504, %v506
    %v530 = vsel %vm521, %v502, %v504
    %v531 = vsel %vm521, %v500, %v502
    %v532 = vsel %vm521, %v498, %v500
    %v533 = vsel %vm521, %v496, %v498
    %v534 = vsel %vm521, %v494, %v496
    %v535 = vsel %vm521, %v492, %v494
    %v536 = vsel %vm521, %v490, %v492
    %v537 = vsel %vm521, %v488, %v490
    %v538 = vsel %vm521, %v486, %v488
    %v539 = vsel %vm521, %v484, %v486
    %v540 = vsel %vm521, %v482, %v484
    %v541 = vsel %vm521, %v480, %v482
    %v542 = vsel %vm521, %v478, %v480
    %v543 = vsel %vm521, %v476, %v478
    %v544 = vsel %vm521, %v474, %v476
    %v545 = vsel %vm521, %v520, %v474
    %546 = vst [vmem:[#allocation2 + $0xc0] sm:$0xf] %v544
    %547 = vst [vmem:[#allocation2 + $0xc8] sm:$0xf] %v543
    %548 = vst [vmem:[#allocation2 + $0xd0] sm:$0xf] %v542
    %549 = vst [vmem:[#allocation2 + $0xd8] sm:$0xf] %v541
    %550 = vst [vmem:[#allocation2 + $0xe0] sm:$0xf] %v540
    %551 = vst [vmem:[#allocation2 + $0xe8] sm:$0xf] %v539
    %552 = vst [vmem:[#allocation2 + $0xf0] sm:$0xf] %v538
    %553 = vst [vmem:[#allocation2 + $0xf8] sm:$0xf] %v537
    %554 = vst [vmem:[#allocation2 + $0x100] sm:$0xf] %v536
    %555 = vst [vmem:[#allocation2 + $0x108] sm:$0xf] %v535
    %556 = vst [vmem:[#allocation2 + $0x110] sm:$0xf] %v534
    %557 = vst [vmem:[#allocation2 + $0x118] sm:$0xf] %v533
    %558 = vst [vmem:[#allocation2 + $0x120] sm:$0xf] %v532
    %559 = vst [vmem:[#allocation2 + $0x128] sm:$0xf] %v531
    %560 = vst [vmem:[#allocation2 + $0x130] sm:$0xf] %v530
    %561 = vst [vmem:[#allocation2 + $0x138] sm:$0xf] %v529
    %562 = vst [vmem:[#allocation2 + $0x140] sm:$0xf] %v528
    %563 = vst [vmem:[#allocation2 + $0x148] sm:$0xf] %v527
    %564 = vst [vmem:[#allocation2 + $0x150] sm:$0xf] %v526
    %565 = vst [vmem:[#allocation2 + $0x158] sm:$0xf] %v525
    %566 = vst [vmem:[#allocation2 + $0x160] sm:$0xf] %v524
    %567 = vst [vmem:[#allocation2 + $0x168] sm:$0xf] %v523
    %568 = vst [vmem:[#allocation2 + $0x170] sm:$0xf] %v522
    %569 = vst [vmem:[#allocation2 + $0x178] sm:$0xf] %v545
    %570 = vst [vmem:[#allocation1] ss:$2 sm:$0xff] %v65
    %s571 = scalar_lea.vmem [#allocation1], 16
    %572 = vst [vmem:[%s571] ss:$2 sm:$0xff] %v66
    %s573 = scalar_lea.vmem [#allocation1], 32
    %574 = vst [vmem:[%s573] ss:$2 sm:$0xff] %v67
    %s575 = scalar_lea.vmem [#allocation1], 48
    %576 = vst [vmem:[%s575] ss:$2 sm:$0xff] %v68
    %v577 = vld.sshfl [vmem:[#allocation1] sm:$0xff pattern:$0x75316420]
    %v578 = vld.sshfl [vmem:[#allocation1 + $0x8] sm:$0xff pattern:$0x75316420]
    %v579 = vld.sshfl [vmem:[#allocation1 + $0x10] sm:$0xff pattern:$0x75316420]
    %v580 = vld.sshfl [vmem:[#allocation1 + $0x18] sm:$0xff pattern:$0x75316420]
    %v581 = vld.sshfl [vmem:[#allocation1 + $0x20] sm:$0xff pattern:$0x75316420]
    %v582 = vld.sshfl [vmem:[#allocation1 + $0x28] sm:$0xff pattern:$0x75316420]
    %v583 = vld.sshfl [vmem:[#allocation1 + $0x30] sm:$0xff pattern:$0x75316420]
    %v584 = vld.sshfl [vmem:[#allocation1 + $0x38] sm:$0xff pattern:$0x75316420]
    %585 = vst [vmem:[#allocation1] ss:$2 sm:$0xff] %v69
    %586 = vst [vmem:[%s571] ss:$2 sm:$0xff] %v70
    %587 = vst [vmem:[%s573] ss:$2 sm:$0xff] %v71
    %588 = vst [vmem:[%s575] ss:$2 sm:$0xff] %v72
    %v589 = vld.sshfl [vmem:[#allocation1] sm:$0xff pattern:$0x75316420]
    %v590 = vld.sshfl [vmem:[#allocation1 + $0x8] sm:$0xff pattern:$0x75316420]
    %v591 = vld.sshfl [vmem:[#allocation1 + $0x10] sm:$0xff pattern:$0x75316420]
    %v592 = vld.sshfl [vmem:[#allocation1 + $0x18] sm:$0xff pattern:$0x75316420]
    %v593 = vld.sshfl [vmem:[#allocation1 + $0x20] sm:$0xff pattern:$0x75316420]
    %v594 = vld.sshfl [vmem:[#allocation1 + $0x28] sm:$0xff pattern:$0x75316420]
    %v595 = vld.sshfl [vmem:[#allocation1 + $0x30] sm:$0xff pattern:$0x75316420]
    %v596 = vld.sshfl [vmem:[#allocation1 + $0x38] sm:$0xff pattern:$0x75316420]
    %597 = vst [vmem:[#allocation1] ss:$2 sm:$0xff] %v73
    %598 = vst [vmem:[%s571] ss:$2 sm:$0xff] %v74
    %599 = vst [vmem:[%s573] ss:$2 sm:$0xff] %v75
    %600 = vst [vmem:[%s575] ss:$2 sm:$0xff] %v76
    %v601 = vld.sshfl [vmem:[#allocation1] sm:$0xff pattern:$0x75316420]
    %v602 = vld.sshfl [vmem:[#allocation1 + $0x8] sm:$0xff pattern:$0x75316420]
    %v603 = vld.sshfl [vmem:[#allocation1 + $0x10] sm:$0xff pattern:$0x75316420]
    %v604 = vld.sshfl [vmem:[#allocation1 + $0x18] sm:$0xff pattern:$0x75316420]
    %v605 = vld.sshfl [vmem:[#allocation1 + $0x20] sm:$0xff pattern:$0x75316420]
    %v606 = vld.sshfl [vmem:[#allocation1 + $0x28] sm:$0xff pattern:$0x75316420]
    %v607 = vld.sshfl [vmem:[#allocation1 + $0x30] sm:$0xff pattern:$0x75316420]
    %v608 = vld.sshfl [vmem:[#allocation1 + $0x38] sm:$0xff pattern:$0x75316420]
    %633 = vrot.lane.b32.xlu0 %v577, 110
    %v634 = vpop.permute.xlu0 %633
    %635 = vrot.lane.b32.xlu0 %v578, 110
    %v636 = vpop.permute.xlu0 %635
    %637 = vrot.lane.b32.xlu0 %v579, 110
    %v638 = vpop.permute.xlu0 %637
    %639 = vrot.lane.b32.xlu0 %v580, 110
    %v640 = vpop.permute.xlu0 %639
    %641 = vrot.lane.b32.xlu0 %v581, 110
    %v642 = vpop.permute.xlu0 %641
    %643 = vrot.lane.b32.xlu0 %v582, 110
    %v644 = vpop.permute.xlu0 %643
    %645 = vrot.lane.b32.xlu0 %v583, 110
    %v646 = vpop.permute.xlu0 %645
    %647 = vrot.lane.b32.xlu0 %v584, 110
    %v648 = vpop.permute.xlu0 %647
    %649 = vrot.lane.b32.xlu0 %v589, 110
    %v650 = vpop.permute.xlu0 %649
    %651 = vrot.lane.b32.xlu0 %v590, 110
    %v652 = vpop.permute.xlu0 %651
    %653 = vrot.lane.b32.xlu0 %v591, 110
    %v654 = vpop.permute.xlu0 %653
    %655 = vrot.lane.b32.xlu0 %v592, 110
    %v656 = vpop.permute.xlu0 %655
    %657 = vrot.lane.b32.xlu0 %v593, 110
    %v658 = vpop.permute.xlu0 %657
    %659 = vrot.lane.b32.xlu0 %v594, 110
    %v660 = vpop.permute.xlu0 %659
    %661 = vrot.lane.b32.xlu0 %v595, 110
    %v662 = vpop.permute.xlu0 %661
    %663 = vrot.lane.b32.xlu0 %v596, 110
    %v664 = vpop.permute.xlu0 %663
    %665 = vrot.lane.b32.xlu0 %v601, 110
    %v666 = vpop.permute.xlu0 %665
    %667 = vrot.lane.b32.xlu0 %v602, 110
    %v668 = vpop.permute.xlu0 %667
    %669 = vrot.lane.b32.xlu0 %v603, 110
    %v670 = vpop.permute.xlu0 %669
    %671 = vrot.lane.b32.xlu0 %v604, 110
    %v672 = vpop.permute.xlu0 %671
    %673 = vrot.lane.b32.xlu0 %v605, 110
    %v674 = vpop.permute.xlu0 %673
    %675 = vrot.lane.b32.xlu0 %v606, 110
    %v676 = vpop.permute.xlu0 %675
    %677 = vrot.lane.b32.xlu0 %v607, 110
    %v678 = vpop.permute.xlu0 %677
    %679 = vrot.lane.b32.xlu0 %v608, 110
    %v680 = vpop.permute.xlu0 %679
    %vm681 = vcmp.lt.s32.totalorder %v288, 110
    %v682 = vsel %vm681, %v678, %v680
    %v683 = vsel %vm681, %v676, %v678
    %v684 = vsel %vm681, %v674, %v676
    %v685 = vsel %vm681, %v672, %v674
    %v686 = vsel %vm681, %v670, %v672
    %v687 = vsel %vm681, %v668, %v670
    %v688 = vsel %vm681, %v666, %v668
    %v689 = vsel %vm681, %v664, %v666
    %v690 = vsel %vm681, %v662, %v664
    %v691 = vsel %vm681, %v660, %v662
    %v692 = vsel %vm681, %v658, %v660
    %v693 = vsel %vm681, %v656, %v658
    %v694 = vsel %vm681, %v654, %v656
    %v695 = vsel %vm681, %v652, %v654
    %v696 = vsel %vm681, %v650, %v652
    %v697 = vsel %vm681, %v648, %v650
    %v698 = vsel %vm681, %v646, %v648
    %v699 = vsel %vm681, %v644, %v646
    %v700 = vsel %vm681, %v642, %v644
    %v701 = vsel %vm681, %v640, %v642
    %v702 = vsel %vm681, %v638, %v640
    %v703 = vsel %vm681, %v636, %v638
    %v704 = vsel %vm681, %v634, %v636
    %v705 = vsel %vm681, %v680, %v634
    %v730 = vrot.slane %v704, 4
    %v731 = vrot.slane %v703, 4
    %v732 = vrot.slane %v702, 4
    %v733 = vrot.slane %v701, 4
    %v734 = vrot.slane %v700, 4
    %v735 = vrot.slane %v699, 4
    %v736 = vrot.slane %v698, 4
    %v737 = vrot.slane %v697, 4
    %v738 = vrot.slane %v696, 4
    %v739 = vrot.slane %v695, 4
    %v740 = vrot.slane %v694, 4
    %v741 = vrot.slane %v693, 4
    %v742 = vrot.slane %v692, 4
    %v743 = vrot.slane %v691, 4
    %v744 = vrot.slane %v690, 4
    %v745 = vrot.slane %v689, 4
    %v746 = vrot.slane %v688, 4
    %v747 = vrot.slane %v687, 4
    %v748 = vrot.slane %v686, 4
    %v749 = vrot.slane %v685, 4
    %v750 = vrot.slane %v684, 4
    %v751 = vrot.slane %v683, 4
    %v752 = vrot.slane %v682, 4
    %v753 = vrot.slane %v705, 4
    %778 = vst [vmem:[#allocation2 + $0xc0] sm:$0xf0] %v730
    %779 = vst [vmem:[#allocation2 + $0xc8] sm:$0xf0] %v731
    %780 = vst [vmem:[#allocation2 + $0xd0] sm:$0xf0] %v732
    %781 = vst [vmem:[#allocation2 + $0xd8] sm:$0xf0] %v733
    %782 = vst [vmem:[#allocation2 + $0xe0] sm:$0xf0] %v734
    %783 = vst [vmem:[#allocation2 + $0xe8] sm:$0xf0] %v735
    %784 = vst [vmem:[#allocation2 + $0xf0] sm:$0xf0] %v736
    %785 = vst [vmem:[#allocation2 + $0xf8] sm:$0xf0] %v737
    %786 = vst [vmem:[#allocation2 + $0x100] sm:$0xf0] %v738
    %787 = vst [vmem:[#allocation2 + $0x108] sm:$0xf0] %v739
    %788 = vst [vmem:[#allocation2 + $0x110] sm:$0xf0] %v740
    %789 = vst [vmem:[#allocation2 + $0x118] sm:$0xf0] %v741
    %790 = vst [vmem:[#allocation2 + $0x120] sm:$0xf0] %v742
    %791 = vst [vmem:[#allocation2 + $0x128] sm:$0xf0] %v743
    %792 = vst [vmem:[#allocation2 + $0x130] sm:$0xf0] %v744
    %793 = vst [vmem:[#allocation2 + $0x138] sm:$0xf0] %v745
    %794 = vst [vmem:[#allocation2 + $0x140] sm:$0xf0] %v746
    %795 = vst [vmem:[#allocation2 + $0x148] sm:$0xf0] %v747
    %796 = vst [vmem:[#allocation2 + $0x150] sm:$0xf0] %v748
    %797 = vst [vmem:[#allocation2 + $0x158] sm:$0xf0] %v749
    %798 = vst [vmem:[#allocation2 + $0x160] sm:$0xf0] %v750
    %799 = vst [vmem:[#allocation2 + $0x168] sm:$0xf0] %v751
    %800 = vst [vmem:[#allocation2 + $0x170] sm:$0xf0] %v752
    %801 = vst [vmem:[#allocation2 + $0x178] sm:$0xf0] %v753
    %802 = vst [vmem:[#allocation1] ss:$2 sm:$0xff] %v65
    %s803 = scalar_lea.vmem [#allocation1], 16
    %804 = vst [vmem:[%s803] ss:$2 sm:$0xff] %v66
    %s805 = scalar_lea.vmem [#allocation1], 32
    %806 = vst [vmem:[%s805] ss:$2 sm:$0xff] %v67
    %s807 = scalar_lea.vmem [#allocation1], 48
    %808 = vst [vmem:[%s807] ss:$2 sm:$0xff] %v68
    %v809 = vld.sshfl [vmem:[#allocation1] sm:$0xff pattern:$0x75316420]
    %v810 = vld.sshfl [vmem:[#allocation1 + $0x8] sm:$0xff pattern:$0x75316420]
    %v811 = vld.sshfl [vmem:[#allocation1 + $0x10] sm:$0xff pattern:$0x75316420]
    %v812 = vld.sshfl [vmem:[#allocation1 + $0x18] sm:$0xff pattern:$0x75316420]
    %v813 = vld.sshfl [vmem:[#allocation1 + $0x20] sm:$0xff pattern:$0x75316420]
    %v814 = vld.sshfl [vmem:[#allocation1 + $0x28] sm:$0xff pattern:$0x75316420]
    %v815 = vld.sshfl [vmem:[#allocation1 + $0x30] sm:$0xff pattern:$0x75316420]
    %v816 = vld.sshfl [vmem:[#allocation1 + $0x38] sm:$0xff pattern:$0x75316420]
    %817 = vst [vmem:[#allocation1] ss:$2 sm:$0xff] %v69
    %818 = vst [vmem:[%s803] ss:$2 sm:$0xff] %v70
    %819 = vst [vmem:[%s805] ss:$2 sm:$0xff] %v71
    %820 = vst [vmem:[%s807] ss:$2 sm:$0xff] %v72
    %v821 = vld.sshfl [vmem:[#allocation1] sm:$0xff pattern:$0x75316420]
    %v822 = vld.sshfl [vmem:[#allocation1 + $0x8] sm:$0xff pattern:$0x75316420]
    %v823 = vld.sshfl [vmem:[#allocation1 + $0x10] sm:$0xff pattern:$0x75316420]
    %v824 = vld.sshfl [vmem:[#allocation1 + $0x18] sm:$0xff pattern:$0x75316420]
    %v825 = vld.sshfl [vmem:[#allocation1 + $0x20] sm:$0xff pattern:$0x75316420]
    %v826 = vld.sshfl [vmem:[#allocation1 + $0x28] sm:$0xff pattern:$0x75316420]
    %v827 = vld.sshfl [vmem:[#allocation1 + $0x30] sm:$0xff pattern:$0x75316420]
    %v828 = vld.sshfl [vmem:[#allocation1 + $0x38] sm:$0xff pattern:$0x75316420]
    %829 = vst [vmem:[#allocation1] ss:$2 sm:$0xff] %v73
    %830 = vst [vmem:[%s803] ss:$2 sm:$0xff] %v74
    %831 = vst [vmem:[%s805] ss:$2 sm:$0xff] %v75
    %832 = vst [vmem:[%s807] ss:$2 sm:$0xff] %v76
    %v833 = vld.sshfl [vmem:[#allocation1] sm:$0xff pattern:$0x75316420]
    %v834 = vld.sshfl [vmem:[#allocation1 + $0x8] sm:$0xff pattern:$0x75316420]
    %v835 = vld.sshfl [vmem:[#allocation1 + $0x10] sm:$0xff pattern:$0x75316420]
    %v836 = vld.sshfl [vmem:[#allocation1 + $0x18] sm:$0xff pattern:$0x75316420]
    %v837 = vld.sshfl [vmem:[#allocation1 + $0x20] sm:$0xff pattern:$0x75316420]
    %v838 = vld.sshfl [vmem:[#allocation1 + $0x28] sm:$0xff pattern:$0x75316420]
    %v839 = vld.sshfl [vmem:[#allocation1 + $0x30] sm:$0xff pattern:$0x75316420]
    %v840 = vld.sshfl [vmem:[#allocation1 + $0x38] sm:$0xff pattern:$0x75316420]
    %865 = vrot.lane.b32.xlu0 %v809, 109
    %v866 = vpop.permute.xlu0 %865
    %867 = vrot.lane.b32.xlu0 %v810, 109
    %v868 = vpop.permute.xlu0 %867
    %869 = vrot.lane.b32.xlu0 %v811, 109
    %v870 = vpop.permute.xlu0 %869
    %871 = vrot.lane.b32.xlu0 %v812, 109
    %v872 = vpop.permute.xlu0 %871
    %873 = vrot.lane.b32.xlu0 %v813, 109
    %v874 = vpop.permute.xlu0 %873
    %875 = vrot.lane.b32.xlu0 %v814, 109
    %v876 = vpop.permute.xlu0 %875
    %877 = vrot.lane.b32.xlu0 %v815, 109
    %v878 = vpop.permute.xlu0 %877
    %879 = vrot.lane.b32.xlu0 %v816, 109
    %v880 = vpop.permute.xlu0 %879
    %881 = vrot.lane.b32.xlu0 %v821, 109
    %v882 = vpop.permute.xlu0 %881
    %883 = vrot.lane.b32.xlu0 %v822, 109
    %v884 = vpop.permute.xlu0 %883
    %885 = vrot.lane.b32.xlu0 %v823, 109
    %v886 = vpop.permute.xlu0 %885
    %887 = vrot.lane.b32.xlu0 %v824, 109
    %v888 = vpop.permute.xlu0 %887
    %889 = vrot.lane.b32.xlu0 %v825, 109
    %v890 = vpop.permute.xlu0 %889
    %891 = vrot.lane.b32.xlu0 %v826, 109
    %v892 = vpop.permute.xlu0 %891
    %893 = vrot.lane.b32.xlu0 %v827, 109
    %v894 = vpop.permute.xlu0 %893
    %895 = vrot.lane.b32.xlu0 %v828, 109
    %v896 = vpop.permute.xlu0 %895
    %897 = vrot.lane.b32.xlu0 %v833, 109
    %v898 = vpop.permute.xlu0 %897
    %899 = vrot.lane.b32.xlu0 %v834, 109
    %v900 = vpop.permute.xlu0 %899
    %901 = vrot.lane.b32.xlu0 %v835, 109
    %v902 = vpop.permute.xlu0 %901
    %903 = vrot.lane.b32.xlu0 %v836, 109
    %v904 = vpop.permute.xlu0 %903
    %905 = vrot.lane.b32.xlu0 %v837, 109
    %v906 = vpop.permute.xlu0 %905
    %907 = vrot.lane.b32.xlu0 %v838, 109
    %v908 = vpop.permute.xlu0 %907
    %909 = vrot.lane.b32.xlu0 %v839, 109
    %v910 = vpop.permute.xlu0 %909
    %911 = vrot.lane.b32.xlu0 %v840, 109
    %v912 = vpop.permute.xlu0 %911
    %vm913 = vcmp.lt.s32.totalorder %v288, 109
    %v914 = vsel %vm913, %v910, %v912
    %v915 = vsel %vm913, %v908, %v910
    %v916 = vsel %vm913, %v906, %v908
    %v917 = vsel %vm913, %v904, %v906
    %v918 = vsel %vm913, %v902, %v904
    %v919 = vsel %vm913, %v900, %v902
    %v920 = vsel %vm913, %v898, %v900
    %v921 = vsel %vm913, %v896, %v898
    %v922 = vsel %vm913, %v894, %v896
    %v923 = vsel %vm913, %v892, %v894
    %v924 = vsel %vm913, %v890, %v892
    %v925 = vsel %vm913, %v888, %v890
    %v926 = vsel %vm913, %v886, %v888
    %v927 = vsel %vm913, %v884, %v886
    %v928 = vsel %vm913, %v882, %v884
    %v929 = vsel %vm913, %v880, %v882
    %v930 = vsel %vm913, %v878, %v880
    %v931 = vsel %vm913, %v876, %v878
    %v932 = vsel %vm913, %v874, %v876
    %v933 = vsel %vm913, %v872, %v874
    %v934 = vsel %vm913, %v870, %v872
    %v935 = vsel %vm913, %v868, %v870
    %v936 = vsel %vm913, %v866, %v868
    %v937 = vsel %vm913, %v912, %v866
    %938 = vst [vmem:[#allocation2 + $0x180] sm:$0xf] %v936
    %939 = vst [vmem:[#allocation2 + $0x188] sm:$0xf] %v935
    %940 = vst [vmem:[#allocation2 + $0x190] sm:$0xf] %v934
    %941 = vst [vmem:[#allocation2 + $0x198] sm:$0xf] %v933
    %942 = vst [vmem:[#allocation2 + $0x1a0] sm:$0xf] %v932
    %943 = vst [vmem:[#allocation2 + $0x1a8] sm:$0xf] %v931
    %944 = vst [vmem:[#allocation2 + $0x1b0] sm:$0xf] %v930
    %945 = vst [vmem:[#allocation2 + $0x1b8] sm:$0xf] %v929
    %946 = vst [vmem:[#allocation2 + $0x1c0] sm:$0xf] %v928
    %947 = vst [vmem:[#allocation2 + $0x1c8] sm:$0xf] %v927
    %948 = vst [vmem:[#allocation2 + $0x1d0] sm:$0xf] %v926
    %949 = vst [vmem:[#allocation2 + $0x1d8] sm:$0xf] %v925
    %950 = vst [vmem:[#allocation2 + $0x1e0] sm:$0xf] %v924
    %951 = vst [vmem:[#allocation2 + $0x1e8] sm:$0xf] %v923
    %952 = vst [vmem:[#allocation2 + $0x1f0] sm:$0xf] %v922
    %953 = vst [vmem:[#allocation2 + $0x1f8] sm:$0xf] %v921
    %954 = vst [vmem:[#allocation2 + $0x200] sm:$0xf] %v920
    %955 = vst [vmem:[#allocation2 + $0x208] sm:$0xf] %v919
    %956 = vst [vmem:[#allocation2 + $0x210] sm:$0xf] %v918
    %957 = vst [vmem:[#allocation2 + $0x218] sm:$0xf] %v917
    %958 = vst [vmem:[#allocation2 + $0x220] sm:$0xf] %v916
    %959 = vst [vmem:[#allocation2 + $0x228] sm:$0xf] %v915
    %960 = vst [vmem:[#allocation2 + $0x230] sm:$0xf] %v914
    %961 = vst [vmem:[#allocation2 + $0x238] sm:$0xf] %v937
    %962 = vst [vmem:[#allocation1] ss:$2 sm:$0xff] %v65
    %s963 = scalar_lea.vmem [#allocation1], 16
    %964 = vst [vmem:[%s963] ss:$2 sm:$0xff] %v66
    %s965 = scalar_lea.vmem [#allocation1], 32
    %966 = vst [vmem:[%s965] ss:$2 sm:$0xff] %v67
    %s967 = scalar_lea.vmem [#allocation1], 48
    %968 = vst [vmem:[%s967] ss:$2 sm:$0xff] %v68
    %v969 = vld.sshfl [vmem:[#allocation1] sm:$0xff pattern:$0x75316420]
    %v970 = vld.sshfl [vmem:[#allocation1 + $0x8] sm:$0xff pattern:$0x75316420]
    %v971 = vld.sshfl [vmem:[#allocation1 + $0x10] sm:$0xff pattern:$0x75316420]
    %v972 = vld.sshfl [vmem:[#allocation1 + $0x18] sm:$0xff pattern:$0x75316420]
    %v973 = vld.sshfl [vmem:[#allocation1 + $0x20] sm:$0xff pattern:$0x75316420]
    %v974 = vld.sshfl [vmem:[#allocation1 + $0x28] sm:$0xff pattern:$0x75316420]
    %v975 = vld.sshfl [vmem:[#allocation1 + $0x30] sm:$0xff pattern:$0x75316420]
    %v976 = vld.sshfl [vmem:[#allocation1 + $0x38] sm:$0xff pattern:$0x75316420]
    %977 = vst [vmem:[#allocation1] ss:$2 sm:$0xff] %v69
    %978 = vst [vmem:[%s963] ss:$2 sm:$0xff] %v70
    %979 = vst [vmem:[%s965] ss:$2 sm:$0xff] %v71
    %980 = vst [vmem:[%s967] ss:$2 sm:$0xff] %v72
    %v981 = vld.sshfl [vmem:[#allocation1] sm:$0xff pattern:$0x75316420]
    %v982 = vld.sshfl [vmem:[#allocation1 + $0x8] sm:$0xff pattern:$0x75316420]
    %v983 = vld.sshfl [vmem:[#allocation1 + $0x10] sm:$0xff pattern:$0x75316420]
    %v984 = vld.sshfl [vmem:[#allocation1 + $0x18] sm:$0xff pattern:$0x75316420]
    %v985 = vld.sshfl [vmem:[#allocation1 + $0x20] sm:$0xff pattern:$0x75316420]
    %v986 = vld.sshfl [vmem:[#allocation1 + $0x28] sm:$0xff pattern:$0x75316420]
    %v987 = vld.sshfl [vmem:[#allocation1 + $0x30] sm:$0xff pattern:$0x75316420]
    %v988 = vld.sshfl [vmem:[#allocation1 + $0x38] sm:$0xff pattern:$0x75316420]
    %989 = vst [vmem:[#allocation1] ss:$2 sm:$0xff] %v73
    %990 = vst [vmem:[%s963] ss:$2 sm:$0xff] %v74
    %991 = vst [vmem:[%s965] ss:$2 sm:$0xff] %v75
    %992 = vst [vmem:[%s967] ss:$2 sm:$0xff] %v76
    %v993 = vld.sshfl [vmem:[#allocation1] sm:$0xff pattern:$0x75316420]
    %v994 = vld.sshfl [vmem:[#allocation1 + $0x8] sm:$0xff pattern:$0x75316420]
    %v995 = vld.sshfl [vmem:[#allocation1 + $0x10] sm:$0xff pattern:$0x75316420]
    %v996 = vld.sshfl [vmem:[#allocation1 + $0x18] sm:$0xff pattern:$0x75316420]
    %v997 = vld.sshfl [vmem:[#allocation1 + $0x20] sm:$0xff pattern:$0x75316420]
    %v998 = vld.sshfl [vmem:[#allocation1 + $0x28] sm:$0xff pattern:$0x75316420]
    %v999 = vld.sshfl [vmem:[#allocation1 + $0x30] sm:$0xff pattern:$0x75316420]
    %v1000 = vld.sshfl [vmem:[#allocation1 + $0x38] sm:$0xff pattern:$0x75316420]
    %1025 = vrot.lane.b32.xlu0 %v969, 108
    %v1026 = vpop.permute.xlu0 %1025
    %1027 = vrot.lane.b32.xlu0 %v970, 108
    %v1028 = vpop.permute.xlu0 %1027
    %1029 = vrot.lane.b32.xlu0 %v971, 108
    %v1030 = vpop.permute.xlu0 %1029
    %1031 = vrot.lane.b32.xlu0 %v972, 108
    %v1032 = vpop.permute.xlu0 %1031
    %1033 = vrot.lane.b32.xlu0 %v973, 108
    %v1034 = vpop.permute.xlu0 %1033
    %1035 = vrot.lane.b32.xlu0 %v974, 108
    %v1036 = vpop.permute.xlu0 %1035
    %1037 = vrot.lane.b32.xlu0 %v975, 108
    %v1038 = vpop.permute.xlu0 %1037
    %1039 = vrot.lane.b32.xlu0 %v976, 108
    %v1040 = vpop.permute.xlu0 %1039
    %1041 = vrot.lane.b32.xlu0 %v981, 108
    %v1042 = vpop.permute.xlu0 %1041
    %1043 = vrot.lane.b32.xlu0 %v982, 108
    %v1044 = vpop.permute.xlu0 %1043
    %1045 = vrot.lane.b32.xlu0 %v983, 108
    %v1046 = vpop.permute.xlu0 %1045
    %1047 = vrot.lane.b32.xlu0 %v984, 108
    %v1048 = vpop.permute.xlu0 %1047
    %1049 = vrot.lane.b32.xlu0 %v985, 108
    %v1050 = vpop.permute.xlu0 %1049
    %1051 = vrot.lane.b32.xlu0 %v986, 108
    %v1052 = vpop.permute.xlu0 %1051
    %1053 = vrot.lane.b32.xlu0 %v987, 108
    %v1054 = vpop.permute.xlu0 %1053
    %1055 = vrot.lane.b32.xlu0 %v988, 108
    %v1056 = vpop.permute.xlu0 %1055
    %1057 = vrot.lane.b32.xlu0 %v993, 108
    %v1058 = vpop.permute.xlu0 %1057
    %1059 = vrot.lane.b32.xlu0 %v994, 108
    %v1060 = vpop.permute.xlu0 %1059
    %1061 = vrot.lane.b32.xlu0 %v995, 108
    %v1062 = vpop.permute.xlu0 %1061
    %1063 = vrot.lane.b32.xlu0 %v996, 108
    %v1064 = vpop.permute.xlu0 %1063
    %1065 = vrot.lane.b32.xlu0 %v997, 108
    %v1066 = vpop.permute.xlu0 %1065
    %1067 = vrot.lane.b32.xlu0 %v998, 108
    %v1068 = vpop.permute.xlu0 %1067
    %1069 = vrot.lane.b32.xlu0 %v999, 108
    %v1070 = vpop.permute.xlu0 %1069
    %1071 = vrot.lane.b32.xlu0 %v1000, 108
    %v1072 = vpop.permute.xlu0 %1071
    %vm1073 = vcmp.lt.s32.totalorder %v288, 108
    %v1074 = vsel %vm1073, %v1070, %v1072
    %v1075 = vsel %vm1073, %v1068, %v1070
    %v1076 = vsel %vm1073, %v1066, %v1068
    %v1077 = vsel %vm1073, %v1064, %v1066
    %v1078 = vsel %vm1073, %v1062, %v1064
    %v1079 = vsel %vm1073, %v1060, %v1062
    %v1080 = vsel %vm1073, %v1058, %v1060
    %v1081 = vsel %vm1073, %v1056, %v1058
    %v1082 = vsel %vm1073, %v1054, %v1056
    %v1083 = vsel %vm1073, %v1052, %v1054
    %v1084 = vsel %vm1073, %v1050, %v1052
    %v1085 = vsel %vm1073, %v1048, %v1050
    %v1086 = vsel %vm1073, %v1046, %v1048
    %v1087 = vsel %vm1073, %v1044, %v1046
    %v1088 = vsel %vm1073, %v1042, %v1044
    %v1089 = vsel %vm1073, %v1040, %v1042
    %v1090 = vsel %vm1073, %v1038, %v1040
    %v1091 = vsel %vm1073, %v1036, %v1038
    %v1092 = vsel %vm1073, %v1034, %v1036
    %v1093 = vsel %vm1073, %v1032, %v1034
    %v1094 = vsel %vm1073, %v1030, %v1032
    %v1095 = vsel %vm1073, %v1028, %v1030
    %v1096 = vsel %vm1073, %v1026, %v1028
    %v1097 = vsel %vm1073, %v1072, %v1026
    %v1122 = vrot.slane %v1096, 4
    %v1123 = vrot.slane %v1095, 4
    %v1124 = vrot.slane %v1094, 4
    %v1125 = vrot.slane %v1093, 4
    %v1126 = vrot.slane %v1092, 4
    %v1127 = vrot.slane %v1091, 4
    %v1128 = vrot.slane %v1090, 4
    %v1129 = vrot.slane %v1089, 4
    %v1130 = vrot.slane %v1088, 4
    %v1131 = vrot.slane %v1087, 4
    %v1132 = vrot.slane %v1086, 4
    %v1133 = vrot.slane %v1085, 4
    %v1134 = vrot.slane %v1084, 4
    %v1135 = vrot.slane %v1083, 4
    %v1136 = vrot.slane %v1082, 4
    %v1137 = vrot.slane %v1081, 4
    %v1138 = vrot.slane %v1080, 4
    %v1139 = vrot.slane %v1079, 4
    %v1140 = vrot.slane %v1078, 4
    %v1141 = vrot.slane %v1077, 4
    %v1142 = vrot.slane %v1076, 4
    %v1143 = vrot.slane %v1075, 4
    %v1144 = vrot.slane %v1074, 4
    %v1145 = vrot.slane %v1097, 4
    %1170 = vst [vmem:[#allocation2 + $0x180] sm:$0xf0] %v1122
    %1171 = vst [vmem:[#allocation2 + $0x188] sm:$0xf0] %v1123
    %1172 = vst [vmem:[#allocation2 + $0x190] sm:$0xf0] %v1124
    %1173 = vst [vmem:[#allocation2 + $0x198] sm:$0xf0] %v1125
    %1174 = vst [vmem:[#allocation2 + $0x1a0] sm:$0xf0] %v1126
    %1175 = vst [vmem:[#allocation2 + $0x1a8] sm:$0xf0] %v1127
    %1176 = vst [vmem:[#allocation2 + $0x1b0] sm:$0xf0] %v1128
    %1177 = vst [vmem:[#allocation2 + $0x1b8] sm:$0xf0] %v1129
    %1178 = vst [vmem:[#allocation2 + $0x1c0] sm:$0xf0] %v1130
    %1179 = vst [vmem:[#allocation2 + $0x1c8] sm:$0xf0] %v1131
    %1180 = vst [vmem:[#allocation2 + $0x1d0] sm:$0xf0] %v1132
    %1181 = vst [vmem:[#allocation2 + $0x1d8] sm:$0xf0] %v1133
    %1182 = vst [vmem:[#allocation2 + $0x1e0] sm:$0xf0] %v1134
    %1183 = vst [vmem:[#allocation2 + $0x1e8] sm:$0xf0] %v1135
    %1184 = vst [vmem:[#allocation2 + $0x1f0] sm:$0xf0] %v1136
    %1185 = vst [vmem:[#allocation2 + $0x1f8] sm:$0xf0] %v1137
    %1186 = vst [vmem:[#allocation2 + $0x200] sm:$0xf0] %v1138
    %1187 = vst [vmem:[#allocation2 + $0x208] sm:$0xf0] %v1139
    %1188 = vst [vmem:[#allocation2 + $0x210] sm:$0xf0] %v1140
    %1189 = vst [vmem:[#allocation2 + $0x218] sm:$0xf0] %v1141
    %1190 = vst [vmem:[#allocation2 + $0x220] sm:$0xf0] %v1142
    %1191 = vst [vmem:[#allocation2 + $0x228] sm:$0xf0] %v1143
    %1192 = vst [vmem:[#allocation2 + $0x230] sm:$0xf0] %v1144
    %1193 = vst [vmem:[#allocation2 + $0x238] sm:$0xf0] %v1145
    %1194 = vst [vmem:[#allocation1] ss:$2 sm:$0xff] %v65
    %s1195 = scalar_lea.vmem [#allocation1], 16
    %1196 = vst [vmem:[%s1195] ss:$2 sm:$0xff] %v66
    %s1197 = scalar_lea.vmem [#allocation1], 32
    %1198 = vst [vmem:[%s1197] ss:$2 sm:$0xff] %v67
    %s1199 = scalar_lea.vmem [#allocation1], 48
    %1200 = vst [vmem:[%s1199] ss:$2 sm:$0xff] %v68
    %v1201 = vld.sshfl [vmem:[#allocation1] sm:$0xff pattern:$0x75316420]
    %v1202 = vld.sshfl [vmem:[#allocation1 + $0x8] sm:$0xff pattern:$0x75316420]
    %v1203 = vld.sshfl [vmem:[#allocation1 + $0x10] sm:$0xff pattern:$0x75316420]
    %v1204 = vld.sshfl [vmem:[#allocation1 + $0x18] sm:$0xff pattern:$0x75316420]
    %v1205 = vld.sshfl [vmem:[#allocation1 + $0x20] sm:$0xff pattern:$0x75316420]
    %v1206 = vld.sshfl [vmem:[#allocation1 + $0x28] sm:$0xff pattern:$0x75316420]
    %v1207 = vld.sshfl [vmem:[#allocation1 + $0x30] sm:$0xff pattern:$0x75316420]
    %v1208 = vld.sshfl [vmem:[#allocation1 + $0x38] sm:$0xff pattern:$0x75316420]
    %1209 = vst [vmem:[#allocation1] ss:$2 sm:$0xff] %v69
    %1210 = vst [vmem:[%s1195] ss:$2 sm:$0xff] %v70
    %1211 = vst [vmem:[%s1197] ss:$2 sm:$0xff] %v71
    %1212 = vst [vmem:[%s1199] ss:$2 sm:$0xff] %v72
    %v1213 = vld.sshfl [vmem:[#allocation1] sm:$0xff pattern:$0x75316420]
    %v1214 = vld.sshfl [vmem:[#allocation1 + $0x8] sm:$0xff pattern:$0x75316420]
    %v1215 = vld.sshfl [vmem:[#allocation1 + $0x10] sm:$0xff pattern:$0x75316420]
    %v1216 = vld.sshfl [vmem:[#allocation1 + $0x18] sm:$0xff pattern:$0x75316420]
    %v1217 = vld.sshfl [vmem:[#allocation1 + $0x20] sm:$0xff pattern:$0x75316420]
    %v1218 = vld.sshfl [vmem:[#allocation1 + $0x28] sm:$0xff pattern:$0x75316420]
    %v1219 = vld.sshfl [vmem:[#allocation1 + $0x30] sm:$0xff pattern:$0x75316420]
    %v1220 = vld.sshfl [vmem:[#allocation1 + $0x38] sm:$0xff pattern:$0x75316420]
    %1221 = vst [vmem:[#allocation1] ss:$2 sm:$0xff] %v73
    %1222 = vst [vmem:[%s1195] ss:$2 sm:$0xff] %v74
    %1223 = vst [vmem:[%s1197] ss:$2 sm:$0xff] %v75
    %1224 = vst [vmem:[%s1199] ss:$2 sm:$0xff] %v76
    %v1225 = vld.sshfl [vmem:[#allocation1] sm:$0xff pattern:$0x75316420]
    %v1226 = vld.sshfl [vmem:[#allocation1 + $0x8] sm:$0xff pattern:$0x75316420]
    %v1227 = vld.sshfl [vmem:[#allocation1 + $0x10] sm:$0xff pattern:$0x75316420]
    %v1228 = vld.sshfl [vmem:[#allocation1 + $0x18] sm:$0xff pattern:$0x75316420]
    %v1229 = vld.sshfl [vmem:[#allocation1 + $0x20] sm:$0xff pattern:$0x75316420]
    %v1230 = vld.sshfl [vmem:[#allocation1 + $0x28] sm:$0xff pattern:$0x75316420]
    %v1231 = vld.sshfl [vmem:[#allocation1 + $0x30] sm:$0xff pattern:$0x75316420]
    %v1232 = vld.sshfl [vmem:[#allocation1 + $0x38] sm:$0xff pattern:$0x75316420]
    %1257 = vrot.lane.b32.xlu0 %v1201, 92
    %v1258 = vpop.permute.xlu0 %1257
    %1259 = vrot.lane.b32.xlu0 %v1202, 92
    %v1260 = vpop.permute.xlu0 %1259
    %1261 = vrot.lane.b32.xlu0 %v1203, 92
    %v1262 = vpop.permute.xlu0 %1261
    %1263 = vrot.lane.b32.xlu0 %v1204, 92
    %v1264 = vpop.permute.xlu0 %1263
    %1265 = vrot.lane.b32.xlu0 %v1205, 92
    %v1266 = vpop.permute.xlu0 %1265
    %1267 = vrot.lane.b32.xlu0 %v1206, 92
    %v1268 = vpop.permute.xlu0 %1267
    %1269 = vrot.lane.b32.xlu0 %v1207, 92
    %v1270 = vpop.permute.xlu0 %1269
    %1271 = vrot.lane.b32.xlu0 %v1208, 92
    %v1272 = vpop.permute.xlu0 %1271
    %1273 = vrot.lane.b32.xlu0 %v1213, 92
    %v1274 = vpop.permute.xlu0 %1273
    %1275 = vrot.lane.b32.xlu0 %v1214, 92
    %v1276 = vpop.permute.xlu0 %1275
    %1277 = vrot.lane.b32.xlu0 %v1215, 92
    %v1278 = vpop.permute.xlu0 %1277
    %1279 = vrot.lane.b32.xlu0 %v1216, 92
    %v1280 = vpop.permute.xlu0 %1279
    %1281 = vrot.lane.b32.xlu0 %v1217, 92
    %v1282 = vpop.permute.xlu0 %1281
    %1283 = vrot.lane.b32.xlu0 %v1218, 92
    %v1284 = vpop.permute.xlu0 %1283
    %1285 = vrot.lane.b32.xlu0 %v1219, 92
    %v1286 = vpop.permute.xlu0 %1285
    %1287 = vrot.lane.b32.xlu0 %v1220, 92
    %v1288 = vpop.permute.xlu0 %1287
    %1289 = vrot.lane.b32.xlu0 %v1225, 92
    %v1290 = vpop.permute.xlu0 %1289
    %1291 = vrot.lane.b32.xlu0 %v1226, 92
    %v1292 = vpop.permute.xlu0 %1291
    %1293 = vrot.lane.b32.xlu0 %v1227, 92
    %v1294 = vpop.permute.xlu0 %1293
    %1295 = vrot.lane.b32.xlu0 %v1228, 92
    %v1296 = vpop.permute.xlu0 %1295
    %1297 = vrot.lane.b32.xlu0 %v1229, 92
    %v1298 = vpop.permute.xlu0 %1297
    %1299 = vrot.lane.b32.xlu0 %v1230, 92
    %v1300 = vpop.permute.xlu0 %1299
    %1301 = vrot.lane.b32.xlu0 %v1231, 92
    %v1302 = vpop.permute.xlu0 %1301
    %1303 = vrot.lane.b32.xlu0 %v1232, 92
    %v1304 = vpop.permute.xlu0 %1303
    %vm1305 = vcmp.lt.s32.totalorder %v288, 92
    %v1306 = vsel %vm1305, %v1302, %v1304
    %v1307 = vsel %vm1305, %v1300, %v1302
    %v1308 = vsel %vm1305, %v1298, %v1300
    %v1309 = vsel %vm1305, %v1296, %v1298
    %v1310 = vsel %vm1305, %v1294, %v1296
    %v1311 = vsel %vm1305, %v1292, %v1294
    %v1312 = vsel %vm1305, %v1290, %v1292
    %v1313 = vsel %vm1305, %v1288, %v1290
    %v1314 = vsel %vm1305, %v1286, %v1288
    %v1315 = vsel %vm1305, %v1284, %v1286
    %v1316 = vsel %vm1305, %v1282, %v1284
    %v1317 = vsel %vm1305, %v1280, %v1282
    %v1318 = vsel %vm1305, %v1278, %v1280
    %v1319 = vsel %vm1305, %v1276, %v1278
    %v1320 = vsel %vm1305, %v1274, %v1276
    %v1321 = vsel %vm1305, %v1272, %v1274
    %v1322 = vsel %vm1305, %v1270, %v1272
    %v1323 = vsel %vm1305, %v1268, %v1270
    %v1324 = vsel %vm1305, %v1266, %v1268
    %v1325 = vsel %vm1305, %v1264, %v1266
    %v1326 = vsel %vm1305, %v1262, %v1264
    %v1327 = vsel %vm1305, %v1260, %v1262
    %v1328 = vsel %vm1305, %v1258, %v1260
    %v1329 = vsel %vm1305, %v1304, %v1258
    %1330 = vst [vmem:[#allocation2 + $0x240] sm:$0xf] %v1328
    %1331 = vst [vmem:[#allocation2 + $0x248] sm:$0xf] %v1327
    %1332 = vst [vmem:[#allocation2 + $0x250] sm:$0xf] %v1326
    %1333 = vst [vmem:[#allocation2 + $0x258] sm:$0xf] %v1325
    %1334 = vst [vmem:[#allocation2 + $0x260] sm:$0xf] %v1324
    %1335 = vst [vmem:[#allocation2 + $0x268] sm:$0xf] %v1323
    %1336 = vst [vmem:[#allocation2 + $0x270] sm:$0xf] %v1322
    %1337 = vst [vmem:[#allocation2 + $0x278] sm:$0xf] %v1321
    %1338 = vst [vmem:[#allocation2 + $0x280] sm:$0xf] %v1320
    %1339 = vst [vmem:[#allocation2 + $0x288] sm:$0xf] %v1319
    %1340 = vst [vmem:[#allocation2 + $0x290] sm:$0xf] %v1318
    %1341 = vst [vmem:[#allocation2 + $0x298] sm:$0xf] %v1317
    %1342 = vst [vmem:[#allocation2 + $0x2a0] sm:$0xf] %v1316
    %1343 = vst [vmem:[#allocation2 + $0x2a8] sm:$0xf] %v1315
    %1344 = vst [vmem:[#allocation2 + $0x2b0] sm:$0xf] %v1314
    %1345 = vst [vmem:[#allocation2 + $0x2b8] sm:$0xf] %v1313
    %1346 = vst [vmem:[#allocation2 + $0x2c0] sm:$0xf] %v1312
    %1347 = vst [vmem:[#allocation2 + $0x2c8] sm:$0xf] %v1311
    %1348 = vst [vmem:[#allocation2 + $0x2d0] sm:$0xf] %v1310
    %1349 = vst [vmem:[#allocation2 + $0x2d8] sm:$0xf] %v1309
    %1350 = vst [vmem:[#allocation2 + $0x2e0] sm:$0xf] %v1308
    %1351 = vst [vmem:[#allocation2 + $0x2e8] sm:$0xf] %v1307
    %1352 = vst [vmem:[#allocation2 + $0x2f0] sm:$0xf] %v1306
    %1353 = vst [vmem:[#allocation2 + $0x2f8] sm:$0xf] %v1329
    %1354 = vst [vmem:[#allocation1] ss:$2 sm:$0xff] %v65
    %s1355 = scalar_lea.vmem [#allocation1], 16
    %1356 = vst [vmem:[%s1355] ss:$2 sm:$0xff] %v66
    %s1357 = scalar_lea.vmem [#allocation1], 32
    %1358 = vst [vmem:[%s1357] ss:$2 sm:$0xff] %v67
    %s1359 = scalar_lea.vmem [#allocation1], 48
    %1360 = vst [vmem:[%s1359] ss:$2 sm:$0xff] %v68
    %v1361 = vld.sshfl [vmem:[#allocation1] sm:$0xff pattern:$0x75316420]
    %v1362 = vld.sshfl [vmem:[#allocation1 + $0x8] sm:$0xff pattern:$0x75316420]
    %v1363 = vld.sshfl [vmem:[#allocation1 + $0x10] sm:$0xff pattern:$0x75316420]
    %v1364 = vld.sshfl [vmem:[#allocation1 + $0x18] sm:$0xff pattern:$0x75316420]
    %v1365 = vld.sshfl [vmem:[#allocation1 + $0x20] sm:$0xff pattern:$0x75316420]
    %v1366 = vld.sshfl [vmem:[#allocation1 + $0x28] sm:$0xff pattern:$0x75316420]
    %v1367 = vld.sshfl [vmem:[#allocation1 + $0x30] sm:$0xff pattern:$0x75316420]
    %v1368 = vld.sshfl [vmem:[#allocation1 + $0x38] sm:$0xff pattern:$0x75316420]
    %1369 = vst [vmem:[#allocation1] ss:$2 sm:$0xff] %v69
    %1370 = vst [vmem:[%s1355] ss:$2 sm:$0xff] %v70
    %1371 = vst [vmem:[%s1357] ss:$2 sm:$0xff] %v71
    %1372 = vst [vmem:[%s1359] ss:$2 sm:$0xff] %v72
    %v1373 = vld.sshfl [vmem:[#allocation1] sm:$0xff pattern:$0x75316420]
    %v1374 = vld.sshfl [vmem:[#allocation1 + $0x8] sm:$0xff pattern:$0x75316420]
    %v1375 = vld.sshfl [vmem:[#allocation1 + $0x10] sm:$0xff pattern:$0x75316420]
    %v1376 = vld.sshfl [vmem:[#allocation1 + $0x18] sm:$0xff pattern:$0x75316420]
    %v1377 = vld.sshfl [vmem:[#allocation1 + $0x20] sm:$0xff pattern:$0x75316420]
    %v1378 = vld.sshfl [vmem:[#allocation1 + $0x28] sm:$0xff pattern:$0x75316420]
    %v1379 = vld.sshfl [vmem:[#allocation1 + $0x30] sm:$0xff pattern:$0x75316420]
    %v1380 = vld.sshfl [vmem:[#allocation1 + $0x38] sm:$0xff pattern:$0x75316420]
    %1381 = vst [vmem:[#allocation1] ss:$2 sm:$0xff] %v73
    %1382 = vst [vmem:[%s1355] ss:$2 sm:$0xff] %v74
    %1383 = vst [vmem:[%s1357] ss:$2 sm:$0xff] %v75
    %1384 = vst [vmem:[%s1359] ss:$2 sm:$0xff] %v76
    %v1385 = vld.sshfl [vmem:[#allocation1] sm:$0xff pattern:$0x75316420]
    %v1386 = vld.sshfl [vmem:[#allocation1 + $0x8] sm:$0xff pattern:$0x75316420]
    %v1387 = vld.sshfl [vmem:[#allocation1 + $0x10] sm:$0xff pattern:$0x75316420]
    %v1388 = vld.sshfl [vmem:[#allocation1 + $0x18] sm:$0xff pattern:$0x75316420]
    %v1389 = vld.sshfl [vmem:[#allocation1 + $0x20] sm:$0xff pattern:$0x75316420]
    %v1390 = vld.sshfl [vmem:[#allocation1 + $0x28] sm:$0xff pattern:$0x75316420]
    %v1391 = vld.sshfl [vmem:[#allocation1 + $0x30] sm:$0xff pattern:$0x75316420]
    %v1392 = vld.sshfl [vmem:[#allocation1 + $0x38] sm:$0xff pattern:$0x75316420]
    %1417 = vrot.lane.b32.xlu0 %v1361, 91
    %v1418 = vpop.permute.xlu0 %1417
    %1419 = vrot.lane.b32.xlu0 %v1362, 91
    %v1420 = vpop.permute.xlu0 %1419
    %1421 = vrot.lane.b32.xlu0 %v1363, 91
    %v1422 = vpop.permute.xlu0 %1421
    %1423 = vrot.lane.b32.xlu0 %v1364, 91
    %v1424 = vpop.permute.xlu0 %1423
    %1425 = vrot.lane.b32.xlu0 %v1365, 91
    %v1426 = vpop.permute.xlu0 %1425
    %1427 = vrot.lane.b32.xlu0 %v1366, 91
    %v1428 = vpop.permute.xlu0 %1427
    %1429 = vrot.lane.b32.xlu0 %v1367, 91
    %v1430 = vpop.permute.xlu0 %1429
    %1431 = vrot.lane.b32.xlu0 %v1368, 91
    %v1432 = vpop.permute.xlu0 %1431
    %1433 = vrot.lane.b32.xlu0 %v1373, 91
    %v1434 = vpop.permute.xlu0 %1433
    %1435 = vrot.lane.b32.xlu0 %v1374, 91
    %v1436 = vpop.permute.xlu0 %1435
    %1437 = vrot.lane.b32.xlu0 %v1375, 91
    %v1438 = vpop.permute.xlu0 %1437
    %1439 = vrot.lane.b32.xlu0 %v1376, 91
    %v1440 = vpop.permute.xlu0 %1439
    %1441 = vrot.lane.b32.xlu0 %v1377, 91
    %v1442 = vpop.permute.xlu0 %1441
    %1443 = vrot.lane.b32.xlu0 %v1378, 91
    %v1444 = vpop.permute.xlu0 %1443
    %1445 = vrot.lane.b32.xlu0 %v1379, 91
    %v1446 = vpop.permute.xlu0 %1445
    %1447 = vrot.lane.b32.xlu0 %v1380, 91
    %v1448 = vpop.permute.xlu0 %1447
    %1449 = vrot.lane.b32.xlu0 %v1385, 91
    %v1450 = vpop.permute.xlu0 %1449
    %1451 = vrot.lane.b32.xlu0 %v1386, 91
    %v1452 = vpop.permute.xlu0 %1451
    %1453 = vrot.lane.b32.xlu0 %v1387, 91
    %v1454 = vpop.permute.xlu0 %1453
    %1455 = vrot.lane.b32.xlu0 %v1388, 91
    %v1456 = vpop.permute.xlu0 %1455
    %1457 = vrot.lane.b32.xlu0 %v1389, 91
    %v1458 = vpop.permute.xlu0 %1457
    %1459 = vrot.lane.b32.xlu0 %v1390, 91
    %v1460 = vpop.permute.xlu0 %1459
    %1461 = vrot.lane.b32.xlu0 %v1391, 91
    %v1462 = vpop.permute.xlu0 %1461
    %1463 = vrot.lane.b32.xlu0 %v1392, 91
    %v1464 = vpop.permute.xlu0 %1463
    %vm1465 = vcmp.lt.s32.totalorder %v288, 91
    %v1466 = vsel %vm1465, %v1462, %v1464
    %v1467 = vsel %vm1465, %v1460, %v1462
    %v1468 = vsel %vm1465, %v1458, %v1460
    %v1469 = vsel %vm1465, %v1456, %v1458
    %v1470 = vsel %vm1465, %v1454, %v1456
    %v1471 = vsel %vm1465, %v1452, %v1454
    %v1472 = vsel %vm1465, %v1450, %v1452
    %v1473 = vsel %vm1465, %v1448, %v1450
    %v1474 = vsel %vm1465, %v1446, %v1448
    %v1475 = vsel %vm1465, %v1444, %v1446
    %v1476 = vsel %vm1465, %v1442, %v1444
    %v1477 = vsel %vm1465, %v1440, %v1442
    %v1478 = vsel %vm1465, %v1438, %v1440
    %v1479 = vsel %vm1465, %v1436, %v1438
    %v1480 = vsel %vm1465, %v1434, %v1436
    %v1481 = vsel %vm1465, %v1432, %v1434
    %v1482 = vsel %vm1465, %v1430, %v1432
    %v1483 = vsel %vm1465, %v1428, %v1430
    %v1484 = vsel %vm1465, %v1426, %v1428
    %v1485 = vsel %vm1465, %v1424, %v1426
    %v1486 = vsel %vm1465, %v1422, %v1424
    %v1487 = vsel %vm1465, %v1420, %v1422
    %v1488 = vsel %vm1465, %v1418, %v1420
    %v1489 = vsel %vm1465, %v1464, %v1418
    %v1514 = vrot.slane %v1488, 4
    %v1515 = vrot.slane %v1487, 4
    %v1516 = vrot.slane %v1486, 4
    %v1517 = vrot.slane %v1485, 4
    %v1518 = vrot.slane %v1484, 4
    %v1519 = vrot.slane %v1483, 4
    %v1520 = vrot.slane %v1482, 4
    %v1521 = vrot.slane %v1481, 4
    %v1522 = vrot.slane %v1480, 4
    %v1523 = vrot.slane %v1479, 4
    %v1524 = vrot.slane %v1478, 4
    %v1525 = vrot.slane %v1477, 4
    %v1526 = vrot.slane %v1476, 4
    %v1527 = vrot.slane %v1475, 4
    %v1528 = vrot.slane %v1474, 4
    %v1529 = vrot.slane %v1473, 4
    %v1530 = vrot.slane %v1472, 4
    %v1531 = vrot.slane %v1471, 4
    %v1532 = vrot.slane %v1470, 4
    %v1533 = vrot.slane %v1469, 4
    %v1534 = vrot.slane %v1468, 4
    %v1535 = vrot.slane %v1467, 4
    %v1536 = vrot.slane %v1466, 4
    %v1537 = vrot.slane %v1489, 4
    %1562 = vst [vmem:[#allocation2 + $0x240] sm:$0xf0] %v1514
    %1563 = vst [vmem:[#allocation2 + $0x248] sm:$0xf0] %v1515
    %1564 = vst [vmem:[#allocation2 + $0x250] sm:$0xf0] %v1516
    %1565 = vst [vmem:[#allocation2 + $0x258] sm:$0xf0] %v1517
    %1566 = vst [vmem:[#allocation2 + $0x260] sm:$0xf0] %v1518
    %1567 = vst [vmem:[#allocation2 + $0x268] sm:$0xf0] %v1519
    %1568 = vst [vmem:[#allocation2 + $0x270] sm:$0xf0] %v1520
    %1569 = vst [vmem:[#allocation2 + $0x278] sm:$0xf0] %v1521
    %1570 = vst [vmem:[#allocation2 + $0x280] sm:$0xf0] %v1522
    %1571 = vst [vmem:[#allocation2 + $0x288] sm:$0xf0] %v1523
    %1572 = vst [vmem:[#allocation2 + $0x290] sm:$0xf0] %v1524
    %1573 = vst [vmem:[#allocation2 + $0x298] sm:$0xf0] %v1525
    %1574 = vst [vmem:[#allocation2 + $0x2a0] sm:$0xf0] %v1526
    %1575 = vst [vmem:[#allocation2 + $0x2a8] sm:$0xf0] %v1527
    %1576 = vst [vmem:[#allocation2 + $0x2b0] sm:$0xf0] %v1528
    %1577 = vst [vmem:[#allocation2 + $0x2b8] sm:$0xf0] %v1529
    %1578 = vst [vmem:[#allocation2 + $0x2c0] sm:$0xf0] %v1530
    %1579 = vst [vmem:[#allocation2 + $0x2c8] sm:$0xf0] %v1531
    %1580 = vst [vmem:[#allocation2 + $0x2d0] sm:$0xf0] %v1532
    %1581 = vst [vmem:[#allocation2 + $0x2d8] sm:$0xf0] %v1533
    %1582 = vst [vmem:[#allocation2 + $0x2e0] sm:$0xf0] %v1534
    %1583 = vst [vmem:[#allocation2 + $0x2e8] sm:$0xf0] %v1535
    %1584 = vst [vmem:[#allocation2 + $0x2f0] sm:$0xf0] %v1536
    %1585 = vst [vmem:[#allocation2 + $0x2f8] sm:$0xf0] %v1537
    %1586 = vst [vmem:[#allocation1] ss:$2 sm:$0xff] %v65
    %s1587 = scalar_lea.vmem [#allocation1], 16
    %1588 = vst [vmem:[%s1587] ss:$2 sm:$0xff] %v66
    %s1589 = scalar_lea.vmem [#allocation1], 32
    %1590 = vst [vmem:[%s1589] ss:$2 sm:$0xff] %v67
    %s1591 = scalar_lea.vmem [#allocation1], 48
    %1592 = vst [vmem:[%s1591] ss:$2 sm:$0xff] %v68
    %v1593 = vld.sshfl [vmem:[#allocation1] sm:$0xff pattern:$0x75316420]
    %v1594 = vld.sshfl [vmem:[#allocation1 + $0x8] sm:$0xff pattern:$0x75316420]
    %v1595 = vld.sshfl [vmem:[#allocation1 + $0x10] sm:$0xff pattern:$0x75316420]
    %v1596 = vld.sshfl [vmem:[#allocation1 + $0x18] sm:$0xff pattern:$0x75316420]
    %v1597 = vld.sshfl [vmem:[#allocation1 + $0x20] sm:$0xff pattern:$0x75316420]
    %v1598 = vld.sshfl [vmem:[#allocation1 + $0x28] sm:$0xff pattern:$0x75316420]
    %v1599 = vld.sshfl [vmem:[#allocation1 + $0x30] sm:$0xff pattern:$0x75316420]
    %v1600 = vld.sshfl [vmem:[#allocation1 + $0x38] sm:$0xff pattern:$0x75316420]
    %1601 = vst [vmem:[#allocation1] ss:$2 sm:$0xff] %v69
    %1602 = vst [vmem:[%s1587] ss:$2 sm:$0xff] %v70
    %1603 = vst [vmem:[%s1589] ss:$2 sm:$0xff] %v71
    %1604 = vst [vmem:[%s1591] ss:$2 sm:$0xff] %v72
    %v1605 = vld.sshfl [vmem:[#allocation1] sm:$0xff pattern:$0x75316420]
    %v1606 = vld.sshfl [vmem:[#allocation1 + $0x8] sm:$0xff pattern:$0x75316420]
    %v1607 = vld.sshfl [vmem:[#allocation1 + $0x10] sm:$0xff pattern:$0x75316420]
    %v1608 = vld.sshfl [vmem:[#allocation1 + $0x18] sm:$0xff pattern:$0x75316420]
    %v1609 = vld.sshfl [vmem:[#allocation1 + $0x20] sm:$0xff pattern:$0x75316420]
    %v1610 = vld.sshfl [vmem:[#allocation1 + $0x28] sm:$0xff pattern:$0x75316420]
    %v1611 = vld.sshfl [vmem:[#allocation1 + $0x30] sm:$0xff pattern:$0x75316420]
    %v1612 = vld.sshfl [vmem:[#allocation1 + $0x38] sm:$0xff pattern:$0x75316420]
    %1613 = vst [vmem:[#allocation1] ss:$2 sm:$0xff] %v73
    %1614 = vst [vmem:[%s1587] ss:$2 sm:$0xff] %v74
    %1615 = vst [vmem:[%s1589] ss:$2 sm:$0xff] %v75
    %1616 = vst [vmem:[%s1591] ss:$2 sm:$0xff] %v76
    %v1617 = vld.sshfl [vmem:[#allocation1] sm:$0xff pattern:$0x75316420]
    %v1618 = vld.sshfl [vmem:[#allocation1 + $0x8] sm:$0xff pattern:$0x75316420]
    %v1619 = vld.sshfl [vmem:[#allocation1 + $0x10] sm:$0xff pattern:$0x75316420]
    %v1620 = vld.sshfl [vmem:[#allocation1 + $0x18] sm:$0xff pattern:$0x75316420]
    %v1621 = vld.sshfl [vmem:[#allocation1 + $0x20] sm:$0xff pattern:$0x75316420]
    %v1622 = vld.sshfl [vmem:[#allocation1 + $0x28] sm:$0xff pattern:$0x75316420]
    %v1623 = vld.sshfl [vmem:[#allocation1 + $0x30] sm:$0xff pattern:$0x75316420]
    %v1624 = vld.sshfl [vmem:[#allocation1 + $0x38] sm:$0xff pattern:$0x75316420]
    %1649 = vrot.lane.b32.xlu0 %v1593, 90
    %v1650 = vpop.permute.xlu0 %1649
    %1651 = vrot.lane.b32.xlu0 %v1594, 90
    %v1652 = vpop.permute.xlu0 %1651
    %1653 = vrot.lane.b32.xlu0 %v1595, 90
    %v1654 = vpop.permute.xlu0 %1653
    %1655 = vrot.lane.b32.xlu0 %v1596, 90
    %v1656 = vpop.permute.xlu0 %1655
    %1657 = vrot.lane.b32.xlu0 %v1597, 90
    %v1658 = vpop.permute.xlu0 %1657
    %1659 = vrot.lane.b32.xlu0 %v1598, 90
    %v1660 = vpop.permute.xlu0 %1659
    %1661 = vrot.lane.b32.xlu0 %v1599, 90
    %v1662 = vpop.permute.xlu0 %1661
    %1663 = vrot.lane.b32.xlu0 %v1600, 90
    %v1664 = vpop.permute.xlu0 %1663
    %1665 = vrot.lane.b32.xlu0 %v1605, 90
    %v1666 = vpop.permute.xlu0 %1665
    %1667 = vrot.lane.b32.xlu0 %v1606, 90
    %v1668 = vpop.permute.xlu0 %1667
    %1669 = vrot.lane.b32.xlu0 %v1607, 90
    %v1670 = vpop.permute.xlu0 %1669
    %1671 = vrot.lane.b32.xlu0 %v1608, 90
    %v1672 = vpop.permute.xlu0 %1671
    %1673 = vrot.lane.b32.xlu0 %v1609, 90
    %v1674 = vpop.permute.xlu0 %1673
    %1675 = vrot.lane.b32.xlu0 %v1610, 90
    %v1676 = vpop.permute.xlu0 %1675
    %1677 = vrot.lane.b32.xlu0 %v1611, 90
    %v1678 = vpop.permute.xlu0 %1677
    %1679 = vrot.lane.b32.xlu0 %v1612, 90
    %v1680 = vpop.permute.xlu0 %1679
    %1681 = vrot.lane.b32.xlu0 %v1617, 90
    %v1682 = vpop.permute.xlu0 %1681
    %1683 = vrot.lane.b32.xlu0 %v1618, 90
    %v1684 = vpop.permute.xlu0 %1683
    %1685 = vrot.lane.b32.xlu0 %v1619, 90
    %v1686 = vpop.permute.xlu0 %1685
    %1687 = vrot.lane.b32.xlu0 %v1620, 90
    %v1688 = vpop.permute.xlu0 %1687
    %1689 = vrot.lane.b32.xlu0 %v1621, 90
    %v1690 = vpop.permute.xlu0 %1689
    %1691 = vrot.lane.b32.xlu0 %v1622, 90
    %v1692 = vpop.permute.xlu0 %1691
    %1693 = vrot.lane.b32.xlu0 %v1623, 90
    %v1694 = vpop.permute.xlu0 %1693
    %1695 = vrot.lane.b32.xlu0 %v1624, 90
    %v1696 = vpop.permute.xlu0 %1695
    %vm1697 = vcmp.lt.s32.totalorder %v288, 90
    %v1698 = vsel %vm1697, %v1694, %v1696
    %v1699 = vsel %vm1697, %v1692, %v1694
    %v1700 = vsel %vm1697, %v1690, %v1692
    %v1701 = vsel %vm1697, %v1688, %v1690
    %v1702 = vsel %vm1697, %v1686, %v1688
    %v1703 = vsel %vm1697, %v1684, %v1686
    %v1704 = vsel %vm1697, %v1682, %v1684
    %v1705 = vsel %vm1697, %v1680, %v1682
    %v1706 = vsel %vm1697, %v1678, %v1680
    %v1707 = vsel %vm1697, %v1676, %v1678
    %v1708 = vsel %vm1697, %v1674, %v1676
    %v1709 = vsel %vm1697, %v1672, %v1674
    %v1710 = vsel %vm1697, %v1670, %v1672
    %v1711 = vsel %vm1697, %v1668, %v1670
    %v1712 = vsel %vm1697, %v1666, %v1668
    %v1713 = vsel %vm1697, %v1664, %v1666
    %v1714 = vsel %vm1697, %v1662, %v1664
    %v1715 = vsel %vm1697, %v1660, %v1662
    %v1716 = vsel %vm1697, %v1658, %v1660
    %v1717 = vsel %vm1697, %v1656, %v1658
    %v1718 = vsel %vm1697, %v1654, %v1656
    %v1719 = vsel %vm1697, %v1652, %v1654
    %v1720 = vsel %vm1697, %v1650, %v1652
    %v1721 = vsel %vm1697, %v1696, %v1650
    %1722 = vst [vmem:[#allocation2 + $0x300] sm:$0xf] %v1720
    %1723 = vst [vmem:[#allocation2 + $0x308] sm:$0xf] %v1719
    %1724 = vst [vmem:[#allocation2 + $0x310] sm:$0xf] %v1718
    %1725 = vst [vmem:[#allocation2 + $0x318] sm:$0xf] %v1717
    %1726 = vst [vmem:[#allocation2 + $0x320] sm:$0xf] %v1716
    %1727 = vst [vmem:[#allocation2 + $0x328] sm:$0xf] %v1715
    %1728 = vst [vmem:[#allocation2 + $0x330] sm:$0xf] %v1714
    %1729 = vst [vmem:[#allocation2 + $0x338] sm:$0xf] %v1713
    %1730 = vst [vmem:[#allocation2 + $0x340] sm:$0xf] %v1712
    %1731 = vst [vmem:[#allocation2 + $0x348] sm:$0xf] %v1711
    %1732 = vst [vmem:[#allocation2 + $0x350] sm:$0xf] %v1710
    %1733 = vst [vmem:[#allocation2 + $0x358] sm:$0xf] %v1709
    %1734 = vst [vmem:[#allocation2 + $0x360] sm:$0xf] %v1708
    %1735 = vst [vmem:[#allocation2 + $0x368] sm:$0xf] %v1707
    %1736 = vst [vmem:[#allocation2 + $0x370] sm:$0xf] %v1706
    %1737 = vst [vmem:[#allocation2 + $0x378] sm:$0xf] %v1705
    %1738 = vst [vmem:[#allocation2 + $0x380] sm:$0xf] %v1704
    %1739 = vst [vmem:[#allocation2 + $0x388] sm:$0xf] %v1703
    %1740 = vst [vmem:[#allocation2 + $0x390] sm:$0xf] %v1702
    %1741 = vst [vmem:[#allocation2 + $0x398] sm:$0xf] %v1701
    %1742 = vst [vmem:[#allocation2 + $0x3a0] sm:$0xf] %v1700
    %1743 = vst [vmem:[#allocation2 + $0x3a8] sm:$0xf] %v1699
    %1744 = vst [vmem:[#allocation2 + $0x3b0] sm:$0xf] %v1698
    %1745 = vst [vmem:[#allocation2 + $0x3b8] sm:$0xf] %v1721
    %v1746 = vld [vmem:[%s1] sm:$0xff]
    %v1747 = vld [vmem:[#allocation2] sm:$0xff]
    %v1748 = vld [vmem:[#allocation2 + $0x8] sm:$0xff]
    %v1749 = vld [vmem:[#allocation2 + $0x10] sm:$0xff]
    %v1750 = vld [vmem:[#allocation2 + $0x18] sm:$0xff]
    %v1751 = vld [vmem:[#allocation2 + $0x20] sm:$0xff]
    %v1752 = vld [vmem:[#allocation2 + $0x28] sm:$0xff]
    %v1753 = vld [vmem:[#allocation2 + $0x30] sm:$0xff]
    %v1754 = vld [vmem:[#allocation2 + $0x38] sm:$0xff]
    %v1755 = vld [vmem:[#allocation2 + $0x40] sm:$0xff]
    %v1756 = vld [vmem:[#allocation2 + $0x48] sm:$0xff]
    %v1757 = vld [vmem:[#allocation2 + $0x50] sm:$0xff]
    %v1758 = vld [vmem:[#allocation2 + $0x58] sm:$0xff]
    %v1759 = vld [vmem:[#allocation2 + $0x60] sm:$0xff]
    %v1760 = vld [vmem:[#allocation2 + $0x68] sm:$0xff]
    %v1761 = vld [vmem:[#allocation2 + $0x70] sm:$0xff]
    %v1762 = vld [vmem:[#allocation2 + $0x78] sm:$0xff]
    %v1763 = vld [vmem:[#allocation2 + $0x80] sm:$0xff]
    %v1764 = vld [vmem:[#allocation2 + $0x88] sm:$0xff]
    %v1765 = vld [vmem:[#allocation2 + $0x90] sm:$0xff]
    %v1766 = vld [vmem:[#allocation2 + $0x98] sm:$0xff]
    %v1767 = vld [vmem:[#allocation2 + $0xa0] sm:$0xff]
    %v1768 = vld [vmem:[#allocation2 + $0xa8] sm:$0xff]
    %v1769 = vld [vmem:[#allocation2 + $0xb0] sm:$0xff]
    %v1770 = vld [vmem:[#allocation2 + $0xb8] sm:$0xff]
    %v1771 = vld [vmem:[#allocation2 + $0xc0] sm:$0xff]
    %v1772 = vld [vmem:[#allocation2 + $0xc8] sm:$0xff]
    %v1773 = vld [vmem:[#allocation2 + $0xd0] sm:$0xff]
    %v1774 = vld [vmem:[#allocation2 + $0xd8] sm:$0xff]
    %v1775 = vld [vmem:[#allocation2 + $0xe0] sm:$0xff]
    %v1776 = vld [vmem:[#allocation2 + $0xe8] sm:$0xff]
    %v1777 = vld [vmem:[#allocation2 + $0xf0] sm:$0xff]
    %v1778 = vld [vmem:[#allocation2 + $0xf8] sm:$0xff]
    %v1779 = vld [vmem:[#allocation2 + $0x100] sm:$0xff]
    %v1780 = vld [vmem:[#allocation2 + $0x108] sm:$0xff]
    %v1781 = vld [vmem:[#allocation2 + $0x110] sm:$0xff]
    %v1782 = vld [vmem:[#allocation2 + $0x118] sm:$0xff]
    %v1783 = vld [vmem:[#allocation2 + $0x120] sm:$0xff]
    %v1784 = vld [vmem:[#allocation2 + $0x128] sm:$0xff]
    %v1785 = vld [vmem:[#allocation2 + $0x130] sm:$0xff]
    %v1786 = vld [vmem:[#allocation2 + $0x138] sm:$0xff]
    %v1787 = vld [vmem:[#allocation2 + $0x140] sm:$0xff]
    %v1788 = vld [vmem:[#allocation2 + $0x148] sm:$0xff]
    %v1789 = vld [vmem:[#allocation2 + $0x150] sm:$0xff]
    %v1790 = vld [vmem:[#allocation2 + $0x158] sm:$0xff]
    %v1791 = vld [vmem:[#allocation2 + $0x160] sm:$0xff]
    %v1792 = vld [vmem:[#allocation2 + $0x168] sm:$0xff]
    %v1793 = vld [vmem:[#allocation2 + $0x170] sm:$0xff]
    %v1794 = vld [vmem:[#allocation2 + $0x178] sm:$0xff]
    %v1795 = vld [vmem:[#allocation2 + $0x180] sm:$0xff]
    %v1796 = vld [vmem:[#allocation2 + $0x188] sm:$0xff]
    %v1797 = vld [vmem:[#allocation2 + $0x190] sm:$0xff]
    %v1798 = vld [vmem:[#allocation2 + $0x198] sm:$0xff]
    %v1799 = vld [vmem:[#allocation2 + $0x1a0] sm:$0xff]
    %v1800 = vld [vmem:[#allocation2 + $0x1a8] sm:$0xff]
    %v1801 = vld [vmem:[#allocation2 + $0x1b0] sm:$0xff]
    %v1802 = vld [vmem:[#allocation2 + $0x1b8] sm:$0xff]
    %v1803 = vld [vmem:[#allocation2 + $0x1c0] sm:$0xff]
    %v1804 = vld [vmem:[#allocation2 + $0x1c8] sm:$0xff]
    %v1805 = vld [vmem:[#allocation2 + $0x1d0] sm:$0xff]
    %v1806 = vld [vmem:[#allocation2 + $0x1d8] sm:$0xff]
    %v1807 = vld [vmem:[#allocation2 + $0x1e0] sm:$0xff]
    %v1808 = vld [vmem:[#allocation2 + $0x1e8] sm:$0xff]
    %v1809 = vld [vmem:[#allocation2 + $0x1f0] sm:$0xff]
    %v1810 = vld [vmem:[#allocation2 + $0x1f8] sm:$0xff]
    %v1811 = vld [vmem:[#allocation2 + $0x200] sm:$0xff]
    %v1812 = vld [vmem:[#allocation2 + $0x208] sm:$0xff]
    %v1813 = vld [vmem:[#allocation2 + $0x210] sm:$0xff]
    %v1814 = vld [vmem:[#allocation2 + $0x218] sm:$0xff]
    %v1815 = vld [vmem:[#allocation2 + $0x220] sm:$0xff]
    %v1816 = vld [vmem:[#allocation2 + $0x228] sm:$0xff]
    %v1817 = vld [vmem:[#allocation2 + $0x230] sm:$0xff]
    %v1818 = vld [vmem:[#allocation2 + $0x238] sm:$0xff]
    %v1819 = vld [vmem:[#allocation2 + $0x240] sm:$0xff]
    %v1820 = vld [vmem:[#allocation2 + $0x248] sm:$0xff]
    %v1821 = vld [vmem:[#allocation2 + $0x250] sm:$0xff]
    %v1822 = vld [vmem:[#allocation2 + $0x258] sm:$0xff]
    %v1823 = vld [vmem:[#allocation2 + $0x260] sm:$0xff]
    %v1824 = vld [vmem:[#allocation2 + $0x268] sm:$0xff]
    %v1825 = vld [vmem:[#allocation2 + $0x270] sm:$0xff]
    %v1826 = vld [vmem:[#allocation2 + $0x278] sm:$0xff]
    %v1827 = vld [vmem:[#allocation2 + $0x280] sm:$0xff]
    %v1828 = vld [vmem:[#allocation2 + $0x288] sm:$0xff]
    %v1829 = vld [vmem:[#allocation2 + $0x290] sm:$0xff]
    %v1830 = vld [vmem:[#allocation2 + $0x298] sm:$0xff]
    %v1831 = vld [vmem:[#allocation2 + $0x2a0] sm:$0xff]
    %v1832 = vld [vmem:[#allocation2 + $0x2a8] sm:$0xff]
    %v1833 = vld [vmem:[#allocation2 + $0x2b0] sm:$0xff]
    %v1834 = vld [vmem:[#allocation2 + $0x2b8] sm:$0xff]
    %v1835 = vld [vmem:[#allocation2 + $0x2c0] sm:$0xff]
    %v1836 = vld [vmem:[#allocation2 + $0x2c8] sm:$0xff]
    %v1837 = vld [vmem:[#allocation2 + $0x2d0] sm:$0xff]
    %v1838 = vld [vmem:[#allocation2 + $0x2d8] sm:$0xff]
    %v1839 = vld [vmem:[#allocation2 + $0x2e0] sm:$0xff]
    %v1840 = vld [vmem:[#allocation2 + $0x2e8] sm:$0xff]
    %v1841 = vld [vmem:[#allocation2 + $0x2f0] sm:$0xff]
    %v1842 = vld [vmem:[#allocation2 + $0x2f8] sm:$0xff]
    %v1843 = vld [vmem:[#allocation2 + $0x300] sm:$0xf]
    %v1844 = vld [vmem:[#allocation2 + $0x308] sm:$0xf]
    %v1845 = vld [vmem:[#allocation2 + $0x310] sm:$0xf]
    %v1846 = vld [vmem:[#allocation2 + $0x318] sm:$0xf]
    %v1847 = vld [vmem:[#allocation2 + $0x320] sm:$0xf]
    %v1848 = vld [vmem:[#allocation2 + $0x328] sm:$0xf]
    %v1849 = vld [vmem:[#allocation2 + $0x330] sm:$0xf]
    %v1850 = vld [vmem:[#allocation2 + $0x338] sm:$0xf]
    %v1851 = vld [vmem:[#allocation2 + $0x340] sm:$0xf]
    %v1852 = vld [vmem:[#allocation2 + $0x348] sm:$0xf]
    %v1853 = vld [vmem:[#allocation2 + $0x350] sm:$0xf]
    %v1854 = vld [vmem:[#allocation2 + $0x358] sm:$0xf]
    %v1855 = vld [vmem:[#allocation2 + $0x360] sm:$0xf]
    %v1856 = vld [vmem:[#allocation2 + $0x368] sm:$0xf]
    %v1857 = vld [vmem:[#allocation2 + $0x370] sm:$0xf]
    %v1858 = vld [vmem:[#allocation2 + $0x378] sm:$0xf]
    %v1859 = vld [vmem:[#allocation2 + $0x380] sm:$0xf]
    %v1860 = vld [vmem:[#allocation2 + $0x388] sm:$0xf]
    %v1861 = vld [vmem:[#allocation2 + $0x390] sm:$0xf]
    %v1862 = vld [vmem:[#allocation2 + $0x398] sm:$0xf]
    %v1863 = vld [vmem:[#allocation2 + $0x3a0] sm:$0xf]
    %v1864 = vld [vmem:[#allocation2 + $0x3a8] sm:$0xf]
    %v1865 = vld [vmem:[#allocation2 + $0x3b0] sm:$0xf]
    %v1866 = vld [vmem:[#allocation2 + $0x3b8] sm:$0xf]
    %v1867 = vld [vmem:[%s2] sm:$0xff]
    %1869 = vset.pattern.permute.xlu0 0
    %1870 = vperm.xlu0 %1869, %v1867
    %v1871 = vpop.permute.xlu0 %1870
    %vm1873 = vcmask 293888
    %v1875 = vsel %vm1873, %v1746, 0
    %vm1877 = vcmask 1043456
    %v1879 = vsel %vm1877, %v1843, 0
    %v1882 = vsel %vm1877, %v1844, 0
    %v1885 = vsel %vm1877, %v1845, 0
    %v1888 = vsel %vm1877, %v1846, 0
    %v1891 = vsel %vm1877, %v1847, 0
    %v1894 = vsel %vm1877, %v1848, 0
    %v1897 = vsel %vm1877, %v1849, 0
    %v1900 = vsel %vm1877, %v1850, 0
    %v1903 = vsel %vm1877, %v1851, 0
    %v1906 = vsel %vm1877, %v1852, 0
    %v1909 = vsel %vm1877, %v1853, 0
    %v1912 = vsel %vm1877, %v1854, 0
    %v1915 = vsel %vm1877, %v1855, 0
    %v1918 = vsel %vm1877, %v1856, 0
    %v1921 = vsel %vm1877, %v1857, 0
    %v1924 = vsel %vm1877, %v1858, 0
    %v1927 = vsel %vm1877, %v1859, 0
    %v1930 = vsel %vm1877, %v1860, 0
    %v1933 = vsel %vm1877, %v1861, 0
    %v1936 = vsel %vm1877, %v1862, 0
    %v1939 = vsel %vm1877, %v1863, 0
    %v1942 = vsel %vm1877, %v1864, 0
    %v1945 = vsel %vm1877, %v1865, 0
    %v1948 = vsel %vm1877, %v1866, 0
    %1950 = vmatpush.msra.mxu0 0.0
    %1951 = vmatpush.msra.mxu0 0.0
    %1952 = vmatpush.msra.mxu0 0.0
    %1953 = vmatpush.msra.mxu0 0.0
    %1954 = vmatpush.msra.mxu0 0.0
    %1955 = vmatpush.msra.mxu0 0.0
    %1956 = vmatpush.msra.mxu0 0.0
    %1957 = vmatpush.msra.mxu0 0.0
    %1958 = vmatpush.msra.mxu0 0.0
    %1959 = vmatpush.msra.mxu0 0.0
    %1960 = vmatpush.msra.mxu0 0.0
    %1961 = vmatpush.msra.mxu0 %v1879
    %1962 = vmatpush.msra.mxu0 %v1819
    %1963 = vmatpush.msra.mxu0 %v1795
    %1964 = vmatpush.msra.mxu0 %v1771
    %1965 = vmatpush.msra.mxu0 %v1747
    %1966 = vmatmul.f32.gmra.mxu0 %v1875
    %v1967 = vpop.f32.mrf.mxu0
    %v1968 = vadd.f32 %v1871, %v1967
    %1969 = vdwg.mxu0
    %1970 = vmatpush.msra.mxu0 0.0
    %1971 = vmatpush.msra.mxu0 0.0
    %1972 = vmatpush.msra.mxu0 0.0
    %1973 = vmatpush.msra.mxu0 0.0
    %1974 = vmatpush.msra.mxu0 0.0
    %1975 = vmatpush.msra.mxu0 0.0
    %1976 = vmatpush.msra.mxu0 0.0
    %1977 = vmatpush.msra.mxu0 0.0
    %1978 = vmatpush.msra.mxu0 0.0
    %1979 = vmatpush.msra.mxu0 0.0
    %1980 = vmatpush.msra.mxu0 0.0
    %1981 = vmatpush.msra.mxu0 %v1882
    %1982 = vmatpush.msra.mxu0 %v1820
    %1983 = vmatpush.msra.mxu0 %v1796
    %1984 = vmatpush.msra.mxu0 %v1772
    %1985 = vmatpush.msra.mxu0 %v1748
    %1986 = vmatmul.f32.gmra.mxu0 %v1875
    %v1987 = vpop.f32.mrf.mxu0
    %v1988 = vadd.f32 %v1871, %v1987
    %1989 = vdwg.mxu0
    %1990 = vmatpush.msra.mxu0 0.0
    %1991 = vmatpush.msra.mxu0 0.0
    %1992 = vmatpush.msra.mxu0 0.0
    %1993 = vmatpush.msra.mxu0 0.0
    %1994 = vmatpush.msra.mxu0 0.0
    %1995 = vmatpush.msra.mxu0 0.0
    %1996 = vmatpush.msra.mxu0 0.0
    %1997 = vmatpush.msra.mxu0 0.0
    %1998 = vmatpush.msra.mxu0 0.0
    %1999 = vmatpush.msra.mxu0 0.0
    %2000 = vmatpush.msra.mxu0 0.0
    %2001 = vmatpush.msra.mxu0 %v1885
    %2002 = vmatpush.msra.mxu0 %v1821
    %2003 = vmatpush.msra.mxu0 %v1797
    %2004 = vmatpush.msra.mxu0 %v1773
    %2005 = vmatpush.msra.mxu0 %v1749
    %2006 = vmatmul.f32.gmra.mxu0 %v1875
    %v2007 = vpop.f32.mrf.mxu0
    %v2008 = vadd.f32 %v1871, %v2007
    %2009 = vdwg.mxu0
    %2010 = vmatpush.msra.mxu0 0.0
    %2011 = vmatpush.msra.mxu0 0.0
    %2012 = vmatpush.msra.mxu0 0.0
    %2013 = vmatpush.msra.mxu0 0.0
    %2014 = vmatpush.msra.mxu0 0.0
    %2015 = vmatpush.msra.mxu0 0.0
    %2016 = vmatpush.msra.mxu0 0.0
    %2017 = vmatpush.msra.mxu0 0.0
    %2018 = vmatpush.msra.mxu0 0.0
    %2019 = vmatpush.msra.mxu0 0.0
    %2020 = vmatpush.msra.mxu0 0.0
    %2021 = vmatpush.msra.mxu0 %v1888
    %2022 = vmatpush.msra.mxu0 %v1822
    %2023 = vmatpush.msra.mxu0 %v1798
    %2024 = vmatpush.msra.mxu0 %v1774
    %2025 = vmatpush.msra.mxu0 %v1750
    %2026 = vmatmul.f32.gmra.mxu0 %v1875
    %v2027 = vpop.f32.mrf.mxu0
    %v2028 = vadd.f32 %v1871, %v2027
    %2029 = vdwg.mxu0
    %2030 = vmatpush.msra.mxu0 0.0
    %2031 = vmatpush.msra.mxu0 0.0
    %2032 = vmatpush.msra.mxu0 0.0
    %2033 = vmatpush.msra.mxu0 0.0
    %2034 = vmatpush.msra.mxu0 0.0
    %2035 = vmatpush.msra.mxu0 0.0
    %2036 = vmatpush.msra.mxu0 0.0
    %2037 = vmatpush.msra.mxu0 0.0
    %2038 = vmatpush.msra.mxu0 0.0
    %2039 = vmatpush.msra.mxu0 0.0
    %2040 = vmatpush.msra.mxu0 0.0
    %2041 = vmatpush.msra.mxu0 %v1891
    %2042 = vmatpush.msra.mxu0 %v1823
    %2043 = vmatpush.msra.mxu0 %v1799
    %2044 = vmatpush.msra.mxu0 %v1775
    %2045 = vmatpush.msra.mxu0 %v1751
    %2046 = vmatmul.f32.gmra.mxu0 %v1875
    %v2047 = vpop.f32.mrf.mxu0
    %v2048 = vadd.f32 %v1871, %v2047
    %2049 = vdwg.mxu0
    %2050 = vmatpush.msra.mxu0 0.0
    %2051 = vmatpush.msra.mxu0 0.0
    %2052 = vmatpush.msra.mxu0 0.0
    %2053 = vmatpush.msra.mxu0 0.0
    %2054 = vmatpush.msra.mxu0 0.0
    %2055 = vmatpush.msra.mxu0 0.0
    %2056 = vmatpush.msra.mxu0 0.0
    %2057 = vmatpush.msra.mxu0 0.0
    %2058 = vmatpush.msra.mxu0 0.0
    %2059 = vmatpush.msra.mxu0 0.0
    %2060 = vmatpush.msra.mxu0 0.0
    %2061 = vmatpush.msra.mxu0 %v1894
    %2062 = vmatpush.msra.mxu0 %v1824
    %2063 = vmatpush.msra.mxu0 %v1800
    %2064 = vmatpush.msra.mxu0 %v1776
    %2065 = vmatpush.msra.mxu0 %v1752
    %2066 = vmatmul.f32.gmra.mxu0 %v1875
    %v2067 = vpop.f32.mrf.mxu0
    %v2068 = vadd.f32 %v1871, %v2067
    %2069 = vdwg.mxu0
    %2070 = vmatpush.msra.mxu0 0.0
    %2071 = vmatpush.msra.mxu0 0.0
    %2072 = vmatpush.msra.mxu0 0.0
    %2073 = vmatpush.msra.mxu0 0.0
    %2074 = vmatpush.msra.mxu0 0.0
    %2075 = vmatpush.msra.mxu0 0.0
    %2076 = vmatpush.msra.mxu0 0.0
    %2077 = vmatpush.msra.mxu0 0.0
    %2078 = vmatpush.msra.mxu0 0.0
    %2079 = vmatpush.msra.mxu0 0.0
    %2080 = vmatpush.msra.mxu0 0.0
    %2081 = vmatpush.msra.mxu0 %v1897
    %2082 = vmatpush.msra.mxu0 %v1825
    %2083 = vmatpush.msra.mxu0 %v1801
    %2084 = vmatpush.msra.mxu0 %v1777
    %2085 = vmatpush.msra.mxu0 %v1753
    %2086 = vmatmul.f32.gmra.mxu0 %v1875
    %v2087 = vpop.f32.mrf.mxu0
    %v2088 = vadd.f32 %v1871, %v2087
    %2089 = vdwg.mxu0
    %2090 = vmatpush.msra.mxu0 0.0
    %2091 = vmatpush.msra.mxu0 0.0
    %2092 = vmatpush.msra.mxu0 0.0
    %2093 = vmatpush.msra.mxu0 0.0
    %2094 = vmatpush.msra.mxu0 0.0
    %2095 = vmatpush.msra.mxu0 0.0
    %2096 = vmatpush.msra.mxu0 0.0
    %2097 = vmatpush.msra.mxu0 0.0
    %2098 = vmatpush.msra.mxu0 0.0
    %2099 = vmatpush.msra.mxu0 0.0
    %2100 = vmatpush.msra.mxu0 0.0
    %2101 = vmatpush.msra.mxu0 %v1900
    %2102 = vmatpush.msra.mxu0 %v1826
    %2103 = vmatpush.msra.mxu0 %v1802
    %2104 = vmatpush.msra.mxu0 %v1778
    %2105 = vmatpush.msra.mxu0 %v1754
    %2106 = vmatmul.f32.gmra.mxu0 %v1875
    %v2107 = vpop.f32.mrf.mxu0
    %v2108 = vadd.f32 %v1871, %v2107
    %2109 = vdwg.mxu0
    %2110 = vmatpush.msra.mxu0 0.0
    %2111 = vmatpush.msra.mxu0 0.0
    %2112 = vmatpush.msra.mxu0 0.0
    %2113 = vmatpush.msra.mxu0 0.0
    %2114 = vmatpush.msra.mxu0 0.0
    %2115 = vmatpush.msra.mxu0 0.0
    %2116 = vmatpush.msra.mxu0 0.0
    %2117 = vmatpush.msra.mxu0 0.0
    %2118 = vmatpush.msra.mxu0 0.0
    %2119 = vmatpush.msra.mxu0 0.0
    %2120 = vmatpush.msra.mxu0 0.0
    %2121 = vmatpush.msra.mxu0 %v1903
    %2122 = vmatpush.msra.mxu0 %v1827
    %2123 = vmatpush.msra.mxu0 %v1803
    %2124 = vmatpush.msra.mxu0 %v1779
    %2125 = vmatpush.msra.mxu0 %v1755
    %2126 = vmatmul.f32.gmra.mxu0 %v1875
    %v2127 = vpop.f32.mrf.mxu0
    %v2128 = vadd.f32 %v1871, %v2127
    %2129 = vdwg.mxu0
    %2130 = vmatpush.msra.mxu0 0.0
    %2131 = vmatpush.msra.mxu0 0.0
    %2132 = vmatpush.msra.mxu0 0.0
    %2133 = vmatpush.msra.mxu0 0.0
    %2134 = vmatpush.msra.mxu0 0.0
    %2135 = vmatpush.msra.mxu0 0.0
    %2136 = vmatpush.msra.mxu0 0.0
    %2137 = vmatpush.msra.mxu0 0.0
    %2138 = vmatpush.msra.mxu0 0.0
    %2139 = vmatpush.msra.mxu0 0.0
    %2140 = vmatpush.msra.mxu0 0.0
    %2141 = vmatpush.msra.mxu0 %v1906
    %2142 = vmatpush.msra.mxu0 %v1828
    %2143 = vmatpush.msra.mxu0 %v1804
    %2144 = vmatpush.msra.mxu0 %v1780
    %2145 = vmatpush.msra.mxu0 %v1756
    %2146 = vmatmul.f32.gmra.mxu0 %v1875
    %v2147 = vpop.f32.mrf.mxu0
    %v2148 = vadd.f32 %v1871, %v2147
    %2149 = vdwg.mxu0
    %2150 = vmatpush.msra.mxu0 0.0
    %2151 = vmatpush.msra.mxu0 0.0
    %2152 = vmatpush.msra.mxu0 0.0
    %2153 = vmatpush.msra.mxu0 0.0
    %2154 = vmatpush.msra.mxu0 0.0
    %2155 = vmatpush.msra.mxu0 0.0
    %2156 = vmatpush.msra.mxu0 0.0
    %2157 = vmatpush.msra.mxu0 0.0
    %2158 = vmatpush.msra.mxu0 0.0
    %2159 = vmatpush.msra.mxu0 0.0
    %2160 = vmatpush.msra.mxu0 0.0
    %2161 = vmatpush.msra.mxu0 %v1909
    %2162 = vmatpush.msra.mxu0 %v1829
    %2163 = vmatpush.msra.mxu0 %v1805
    %2164 = vmatpush.msra.mxu0 %v1781
    %2165 = vmatpush.msra.mxu0 %v1757
    %2166 = vmatmul.f32.gmra.mxu0 %v1875
    %v2167 = vpop.f32.mrf.mxu0
    %v2168 = vadd.f32 %v1871, %v2167
    %2169 = vdwg.mxu0
    %2170 = vmatpush.msra.mxu0 0.0
    %2171 = vmatpush.msra.mxu0 0.0
    %2172 = vmatpush.msra.mxu0 0.0
    %2173 = vmatpush.msra.mxu0 0.0
    %2174 = vmatpush.msra.mxu0 0.0
    %2175 = vmatpush.msra.mxu0 0.0
    %2176 = vmatpush.msra.mxu0 0.0
    %2177 = vmatpush.msra.mxu0 0.0
    %2178 = vmatpush.msra.mxu0 0.0
    %2179 = vmatpush.msra.mxu0 0.0
    %2180 = vmatpush.msra.mxu0 0.0
    %2181 = vmatpush.msra.mxu0 %v1912
    %2182 = vmatpush.msra.mxu0 %v1830
    %2183 = vmatpush.msra.mxu0 %v1806
    %2184 = vmatpush.msra.mxu0 %v1782
    %2185 = vmatpush.msra.mxu0 %v1758
    %2186 = vmatmul.f32.gmra.mxu0 %v1875
    %v2187 = vpop.f32.mrf.mxu0
    %v2188 = vadd.f32 %v1871, %v2187
    %2189 = vdwg.mxu0
    %2190 = vmatpush.msra.mxu0 0.0
    %2191 = vmatpush.msra.mxu0 0.0
    %2192 = vmatpush.msra.mxu0 0.0
    %2193 = vmatpush.msra.mxu0 0.0
    %2194 = vmatpush.msra.mxu0 0.0
    %2195 = vmatpush.msra.mxu0 0.0
    %2196 = vmatpush.msra.mxu0 0.0
    %2197 = vmatpush.msra.mxu0 0.0
    %2198 = vmatpush.msra.mxu0 0.0
    %2199 = vmatpush.msra.mxu0 0.0
    %2200 = vmatpush.msra.mxu0 0.0
    %2201 = vmatpush.msra.mxu0 %v1915
    %2202 = vmatpush.msra.mxu0 %v1831
    %2203 = vmatpush.msra.mxu0 %v1807
    %2204 = vmatpush.msra.mxu0 %v1783
    %2205 = vmatpush.msra.mxu0 %v1759
    %2206 = vmatmul.f32.gmra.mxu0 %v1875
    %v2207 = vpop.f32.mrf.mxu0
    %v2208 = vadd.f32 %v1871, %v2207
    %2209 = vdwg.mxu0
    %2210 = vmatpush.msra.mxu0 0.0
    %2211 = vmatpush.msra.mxu0 0.0
    %2212 = vmatpush.msra.mxu0 0.0
    %2213 = vmatpush.msra.mxu0 0.0
    %2214 = vmatpush.msra.mxu0 0.0
    %2215 = vmatpush.msra.mxu0 0.0
    %2216 = vmatpush.msra.mxu0 0.0
    %2217 = vmatpush.msra.mxu0 0.0
    %2218 = vmatpush.msra.mxu0 0.0
    %2219 = vmatpush.msra.mxu0 0.0
    %2220 = vmatpush.msra.mxu0 0.0
    %2221 = vmatpush.msra.mxu0 %v1918
    %2222 = vmatpush.msra.mxu0 %v1832
    %2223 = vmatpush.msra.mxu0 %v1808
    %2224 = vmatpush.msra.mxu0 %v1784
    %2225 = vmatpush.msra.mxu0 %v1760
    %2226 = vmatmul.f32.gmra.mxu0 %v1875
    %v2227 = vpop.f32.mrf.mxu0
    %v2228 = vadd.f32 %v1871, %v2227
    %2229 = vdwg.mxu0
    %2230 = vmatpush.msra.mxu0 0.0
    %2231 = vmatpush.msra.mxu0 0.0
    %2232 = vmatpush.msra.mxu0 0.0
    %2233 = vmatpush.msra.mxu0 0.0
    %2234 = vmatpush.msra.mxu0 0.0
    %2235 = vmatpush.msra.mxu0 0.0
    %2236 = vmatpush.msra.mxu0 0.0
    %2237 = vmatpush.msra.mxu0 0.0
    %2238 = vmatpush.msra.mxu0 0.0
    %2239 = vmatpush.msra.mxu0 0.0
    %2240 = vmatpush.msra.mxu0 0.0
    %2241 = vmatpush.msra.mxu0 %v1921
    %2242 = vmatpush.msra.mxu0 %v1833
    %2243 = vmatpush.msra.mxu0 %v1809
    %2244 = vmatpush.msra.mxu0 %v1785
    %2245 = vmatpush.msra.mxu0 %v1761
    %2246 = vmatmul.f32.gmra.mxu0 %v1875
    %v2247 = vpop.f32.mrf.mxu0
    %v2248 = vadd.f32 %v1871, %v2247
    %2249 = vdwg.mxu0
    %2250 = vmatpush.msra.mxu0 0.0
    %2251 = vmatpush.msra.mxu0 0.0
    %2252 = vmatpush.msra.mxu0 0.0
    %2253 = vmatpush.msra.mxu0 0.0
    %2254 = vmatpush.msra.mxu0 0.0
    %2255 = vmatpush.msra.mxu0 0.0
    %2256 = vmatpush.msra.mxu0 0.0
    %2257 = vmatpush.msra.mxu0 0.0
    %2258 = vmatpush.msra.mxu0 0.0
    %2259 = vmatpush.msra.mxu0 0.0
    %2260 = vmatpush.msra.mxu0 0.0
    %2261 = vmatpush.msra.mxu0 %v1924
    %2262 = vmatpush.msra.mxu0 %v1834
    %2263 = vmatpush.msra.mxu0 %v1810
    %2264 = vmatpush.msra.mxu0 %v1786
    %2265 = vmatpush.msra.mxu0 %v1762
    %2266 = vmatmul.f32.gmra.mxu0 %v1875
    %v2267 = vpop.f32.mrf.mxu0
    %v2268 = vadd.f32 %v1871, %v2267
    %2269 = vdwg.mxu0
    %2270 = vmatpush.msra.mxu0 0.0
    %2271 = vmatpush.msra.mxu0 0.0
    %2272 = vmatpush.msra.mxu0 0.0
    %2273 = vmatpush.msra.mxu0 0.0
    %2274 = vmatpush.msra.mxu0 0.0
    %2275 = vmatpush.msra.mxu0 0.0
    %2276 = vmatpush.msra.mxu0 0.0
    %2277 = vmatpush.msra.mxu0 0.0
    %2278 = vmatpush.msra.mxu0 0.0
    %2279 = vmatpush.msra.mxu0 0.0
    %2280 = vmatpush.msra.mxu0 0.0
    %2281 = vmatpush.msra.mxu0 %v1927
    %2282 = vmatpush.msra.mxu0 %v1835
    %2283 = vmatpush.msra.mxu0 %v1811
    %2284 = vmatpush.msra.mxu0 %v1787
    %2285 = vmatpush.msra.mxu0 %v1763
    %2286 = vmatmul.f32.gmra.mxu0 %v1875
    %v2287 = vpop.f32.mrf.mxu0
    %v2288 = vadd.f32 %v1871, %v2287
    %2289 = vdwg.mxu0
    %2290 = vmatpush.msra.mxu0 0.0
    %2291 = vmatpush.msra.mxu0 0.0
    %2292 = vmatpush.msra.mxu0 0.0
    %2293 = vmatpush.msra.mxu0 0.0
    %2294 = vmatpush.msra.mxu0 0.0
    %2295 = vmatpush.msra.mxu0 0.0
    %2296 = vmatpush.msra.mxu0 0.0
    %2297 = vmatpush.msra.mxu0 0.0
    %2298 = vmatpush.msra.mxu0 0.0
    %2299 = vmatpush.msra.mxu0 0.0
    %2300 = vmatpush.msra.mxu0 0.0
    %2301 = vmatpush.msra.mxu0 %v1930
    %2302 = vmatpush.msra.mxu0 %v1836
    %2303 = vmatpush.msra.mxu0 %v1812
    %2304 = vmatpush.msra.mxu0 %v1788
    %2305 = vmatpush.msra.mxu0 %v1764
    %2306 = vmatmul.f32.gmra.mxu0 %v1875
    %v2307 = vpop.f32.mrf.mxu0
    %v2308 = vadd.f32 %v1871, %v2307
    %2309 = vdwg.mxu0
    %2310 = vmatpush.msra.mxu0 0.0
    %2311 = vmatpush.msra.mxu0 0.0
    %2312 = vmatpush.msra.mxu0 0.0
    %2313 = vmatpush.msra.mxu0 0.0
    %2314 = vmatpush.msra.mxu0 0.0
    %2315 = vmatpush.msra.mxu0 0.0
    %2316 = vmatpush.msra.mxu0 0.0
    %2317 = vmatpush.msra.mxu0 0.0
    %2318 = vmatpush.msra.mxu0 0.0
    %2319 = vmatpush.msra.mxu0 0.0
    %2320 = vmatpush.msra.mxu0 0.0
    %2321 = vmatpush.msra.mxu0 %v1933
    %2322 = vmatpush.msra.mxu0 %v1837
    %2323 = vmatpush.msra.mxu0 %v1813
    %2324 = vmatpush.msra.mxu0 %v1789
    %2325 = vmatpush.msra.mxu0 %v1765
    %2326 = vmatmul.f32.gmra.mxu0 %v1875
    %v2327 = vpop.f32.mrf.mxu0
    %v2328 = vadd.f32 %v1871, %v2327
    %2329 = vdwg.mxu0
    %2330 = vmatpush.msra.mxu0 0.0
    %2331 = vmatpush.msra.mxu0 0.0
    %2332 = vmatpush.msra.mxu0 0.0
    %2333 = vmatpush.msra.mxu0 0.0
    %2334 = vmatpush.msra.mxu0 0.0
    %2335 = vmatpush.msra.mxu0 0.0
    %2336 = vmatpush.msra.mxu0 0.0
    %2337 = vmatpush.msra.mxu0 0.0
    %2338 = vmatpush.msra.mxu0 0.0
    %2339 = vmatpush.msra.mxu0 0.0
    %2340 = vmatpush.msra.mxu0 0.0
    %2341 = vmatpush.msra.mxu0 %v1936
    %2342 = vmatpush.msra.mxu0 %v1838
    %2343 = vmatpush.msra.mxu0 %v1814
    %2344 = vmatpush.msra.mxu0 %v1790
    %2345 = vmatpush.msra.mxu0 %v1766
    %2346 = vmatmul.f32.gmra.mxu0 %v1875
    %v2347 = vpop.f32.mrf.mxu0
    %v2348 = vadd.f32 %v1871, %v2347
    %2349 = vdwg.mxu0
    %2350 = vmatpush.msra.mxu0 0.0
    %2351 = vmatpush.msra.mxu0 0.0
    %2352 = vmatpush.msra.mxu0 0.0
    %2353 = vmatpush.msra.mxu0 0.0
    %2354 = vmatpush.msra.mxu0 0.0
    %2355 = vmatpush.msra.mxu0 0.0
    %2356 = vmatpush.msra.mxu0 0.0
    %2357 = vmatpush.msra.mxu0 0.0
    %2358 = vmatpush.msra.mxu0 0.0
    %2359 = vmatpush.msra.mxu0 0.0
    %2360 = vmatpush.msra.mxu0 0.0
    %2361 = vmatpush.msra.mxu0 %v1939
    %2362 = vmatpush.msra.mxu0 %v1839
    %2363 = vmatpush.msra.mxu0 %v1815
    %2364 = vmatpush.msra.mxu0 %v1791
    %2365 = vmatpush.msra.mxu0 %v1767
    %2366 = vmatmul.f32.gmra.mxu0 %v1875
    %v2367 = vpop.f32.mrf.mxu0
    %v2368 = vadd.f32 %v1871, %v2367
    %2369 = vdwg.mxu0
    %2370 = vmatpush.msra.mxu0 0.0
    %2371 = vmatpush.msra.mxu0 0.0
    %2372 = vmatpush.msra.mxu0 0.0
    %2373 = vmatpush.msra.mxu0 0.0
    %2374 = vmatpush.msra.mxu0 0.0
    %2375 = vmatpush.msra.mxu0 0.0
    %2376 = vmatpush.msra.mxu0 0.0
    %2377 = vmatpush.msra.mxu0 0.0
    %2378 = vmatpush.msra.mxu0 0.0
    %2379 = vmatpush.msra.mxu0 0.0
    %2380 = vmatpush.msra.mxu0 0.0
    %2381 = vmatpush.msra.mxu0 %v1942
    %2382 = vmatpush.msra.mxu0 %v1840
    %2383 = vmatpush.msra.mxu0 %v1816
    %2384 = vmatpush.msra.mxu0 %v1792
    %2385 = vmatpush.msra.mxu0 %v1768
    %2386 = vmatmul.f32.gmra.mxu0 %v1875
    %v2387 = vpop.f32.mrf.mxu0
    %v2388 = vadd.f32 %v1871, %v2387
    %2389 = vdwg.mxu0
    %2390 = vmatpush.msra.mxu0 0.0
    %2391 = vmatpush.msra.mxu0 0.0
    %2392 = vmatpush.msra.mxu0 0.0
    %2393 = vmatpush.msra.mxu0 0.0
    %2394 = vmatpush.msra.mxu0 0.0
    %2395 = vmatpush.msra.mxu0 0.0
    %2396 = vmatpush.msra.mxu0 0.0
    %2397 = vmatpush.msra.mxu0 0.0
    %2398 = vmatpush.msra.mxu0 0.0
    %2399 = vmatpush.msra.mxu0 0.0
    %2400 = vmatpush.msra.mxu0 0.0
    %2401 = vmatpush.msra.mxu0 %v1945
    %2402 = vmatpush.msra.mxu0 %v1841
    %2403 = vmatpush.msra.mxu0 %v1817
    %2404 = vmatpush.msra.mxu0 %v1793
    %2405 = vmatpush.msra.mxu0 %v1769
    %2406 = vmatmul.f32.gmra.mxu0 %v1875
    %v2407 = vpop.f32.mrf.mxu0
    %v2408 = vadd.f32 %v1871, %v2407
    %2409 = vdwg.mxu0
    %2410 = vmatpush.msra.mxu0 0.0
    %2411 = vmatpush.msra.mxu0 0.0
    %2412 = vmatpush.msra.mxu0 0.0
    %2413 = vmatpush.msra.mxu0 0.0
    %2414 = vmatpush.msra.mxu0 0.0
    %2415 = vmatpush.msra.mxu0 0.0
    %2416 = vmatpush.msra.mxu0 0.0
    %2417 = vmatpush.msra.mxu0 0.0
    %2418 = vmatpush.msra.mxu0 0.0
    %2419 = vmatpush.msra.mxu0 0.0
    %2420 = vmatpush.msra.mxu0 0.0
    %2421 = vmatpush.msra.mxu0 %v1948
    %2422 = vmatpush.msra.mxu0 %v1842
    %2423 = vmatpush.msra.mxu0 %v1818
    %2424 = vmatpush.msra.mxu0 %v1794
    %2425 = vmatpush.msra.mxu0 %v1770
    %2426 = vmatmul.f32.gmra.mxu0 %v1875
    %v2427 = vpop.f32.mrf.mxu0
    %v2428 = vadd.f32 %v1871, %v2427
    %2429 = vdwg.mxu0
    %v2430 = vmax.f32 %v1968, 0.0
    %v2431 = vmax.f32 %v1988, 0.0
    %v2432 = vmax.f32 %v2008, 0.0
    %v2433 = vmax.f32 %v2028, 0.0
    %v2434 = vmax.f32 %v2048, 0.0
    %v2435 = vmax.f32 %v2068, 0.0
    %v2436 = vmax.f32 %v2088, 0.0
    %v2437 = vmax.f32 %v2108, 0.0
    %v2438 = vmax.f32 %v2128, 0.0
    %v2439 = vmax.f32 %v2148, 0.0
    %v2440 = vmax.f32 %v2168, 0.0
    %v2441 = vmax.f32 %v2188, 0.0
    %v2442 = vmax.f32 %v2208, 0.0
    %v2443 = vmax.f32 %v2228, 0.0
    %v2444 = vmax.f32 %v2248, 0.0
    %v2445 = vmax.f32 %v2268, 0.0
    %v2446 = vmax.f32 %v2288, 0.0
    %v2447 = vmax.f32 %v2308, 0.0
    %v2448 = vmax.f32 %v2328, 0.0
    %v2449 = vmax.f32 %v2348, 0.0
    %v2450 = vmax.f32 %v2368, 0.0
    %v2451 = vmax.f32 %v2388, 0.0
    %v2452 = vmax.f32 %v2408, 0.0
    %v2453 = vmax.f32 %v2428, 0.0
    %v2454 = vld [vmem:[#allocation8] sm:$0xff]
    %v2455 = vld [vmem:[#allocation8 + $0x8] sm:$0xff]
    %v2456 = vld [vmem:[#allocation8 + $0x10] sm:$0xff]
    %v2457 = vld [vmem:[#allocation8 + $0x18] sm:$0xff]
    %v2458 = vld [vmem:[#allocation8 + $0x20] sm:$0xff]
    %v2459 = vld [vmem:[#allocation8 + $0x28] sm:$0xff]
    %v2460 = vld [vmem:[#allocation8 + $0x30] sm:$0xff]
    %v2461 = vld [vmem:[#allocation8 + $0x38] sm:$0xff]
    %v2462 = vld [vmem:[#allocation8 + $0x40] sm:$0xff]
    %v2463 = vld [vmem:[#allocation8 + $0x48] sm:$0xff]
    %v2464 = vld [vmem:[#allocation8 + $0x50] sm:$0xff]
    %v2465 = vld [vmem:[#allocation8 + $0x58] sm:$0xff]
    %v2466 = vld [vmem:[#allocation8 + $0x60] sm:$0xff]
    %v2467 = vld [vmem:[#allocation8 + $0x68] sm:$0xff]
    %v2468 = vld [vmem:[#allocation8 + $0x70] sm:$0xff]
    %v2469 = vld [vmem:[#allocation8 + $0x78] sm:$0xff]
    %v2470 = vld [vmem:[#allocation8 + $0x80] sm:$0xff]
    %v2471 = vld [vmem:[#allocation8 + $0x88] sm:$0xff]
    %v2472 = vld [vmem:[#allocation8 + $0x90] sm:$0xff]
    %v2473 = vld [vmem:[#allocation8 + $0x98] sm:$0xff]
    %v2474 = vld [vmem:[#allocation8 + $0xa0] sm:$0xff]
    %v2475 = vld [vmem:[#allocation8 + $0xa8] sm:$0xff]
    %v2476 = vld [vmem:[#allocation8 + $0xb0] sm:$0xff]
    %v2477 = vld [vmem:[#allocation8 + $0xb8] sm:$0xff]
    %2478 = vmatpush.xpose.msra.mxu0 0.0
    %2479 = vmatpush.xpose.msra.mxu0 0.0
    %2480 = vmatpush.xpose.msra.mxu0 0.0
    %2481 = vmatpush.xpose.msra.mxu0 0.0
    %2482 = vmatpush.xpose.msra.mxu0 0.0
    %2483 = vmatpush.xpose.msra.mxu0 0.0
    %2484 = vmatpush.xpose.msra.mxu0 0.0
    %2485 = vmatpush.xpose.msra.mxu0 0.0
    %2486 = vmatpush.xpose.msra.mxu0 0.0
    %2487 = vmatpush.xpose.msra.mxu0 0.0
    %2488 = vmatpush.xpose.msra.mxu0 0.0
    %2489 = vmatpush.xpose.msra.mxu0 0.0
    %2490 = vmatpush.xpose.msra.mxu0 0.0
    %2491 = vmatpush.xpose.msra.mxu0 0.0
    %2492 = vmatpush.xpose.msra.mxu0 0.0
    %2493 = vmatpush.xpose.msra.mxu0 %v2430
    %2494 = vmatmul.f32.gmra.mxu0 %v2454
    %v2495 = vpop.f32.mrf.mxu0
    %v2496 = vadd.f32 0.0, %v2495
    %2497 = vdwg.mxu0
    %2498 = vmatpush.xpose.msra.mxu0 0.0
    %2499 = vmatpush.xpose.msra.mxu0 0.0
    %2500 = vmatpush.xpose.msra.mxu0 0.0
    %2501 = vmatpush.xpose.msra.mxu0 0.0
    %2502 = vmatpush.xpose.msra.mxu0 0.0
    %2503 = vmatpush.xpose.msra.mxu0 0.0
    %2504 = vmatpush.xpose.msra.mxu0 0.0
    %2505 = vmatpush.xpose.msra.mxu0 0.0
    %2506 = vmatpush.xpose.msra.mxu0 0.0
    %2507 = vmatpush.xpose.msra.mxu0 0.0
    %2508 = vmatpush.xpose.msra.mxu0 0.0
    %2509 = vmatpush.xpose.msra.mxu0 0.0
    %2510 = vmatpush.xpose.msra.mxu0 0.0
    %2511 = vmatpush.xpose.msra.mxu0 0.0
    %2512 = vmatpush.xpose.msra.mxu0 0.0
    %2513 = vmatpush.xpose.msra.mxu0 %v2431
    %2514 = vmatmul.f32.gmra.mxu0 %v2455
    %v2515 = vpop.f32.mrf.mxu0
    %v2516 = vadd.f32 %v2496, %v2515
    %2517 = vdwg.mxu0
    %2518 = vmatpush.xpose.msra.mxu0 0.0
    %2519 = vmatpush.xpose.msra.mxu0 0.0
    %2520 = vmatpush.xpose.msra.mxu0 0.0
    %2521 = vmatpush.xpose.msra.mxu0 0.0
    %2522 = vmatpush.xpose.msra.mxu0 0.0
    %2523 = vmatpush.xpose.msra.mxu0 0.0
    %2524 = vmatpush.xpose.msra.mxu0 0.0
    %2525 = vmatpush.xpose.msra.mxu0 0.0
    %2526 = vmatpush.xpose.msra.mxu0 0.0
    %2527 = vmatpush.xpose.msra.mxu0 0.0
    %2528 = vmatpush.xpose.msra.mxu0 0.0
    %2529 = vmatpush.xpose.msra.mxu0 0.0
    %2530 = vmatpush.xpose.msra.mxu0 0.0
    %2531 = vmatpush.xpose.msra.mxu0 0.0
    %2532 = vmatpush.xpose.msra.mxu0 0.0
    %2533 = vmatpush.xpose.msra.mxu0 %v2432
    %2534 = vmatmul.f32.gmra.mxu0 %v2456
    %v2535 = vpop.f32.mrf.mxu0
    %v2536 = vadd.f32 %v2516, %v2535
    %2537 = vdwg.mxu0
    %2538 = vmatpush.xpose.msra.mxu0 0.0
    %2539 = vmatpush.xpose.msra.mxu0 0.0
    %2540 = vmatpush.xpose.msra.mxu0 0.0
    %2541 = vmatpush.xpose.msra.mxu0 0.0
    %2542 = vmatpush.xpose.msra.mxu0 0.0
    %2543 = vmatpush.xpose.msra.mxu0 0.0
    %2544 = vmatpush.xpose.msra.mxu0 0.0
    %2545 = vmatpush.xpose.msra.mxu0 0.0
    %2546 = vmatpush.xpose.msra.mxu0 0.0
    %2547 = vmatpush.xpose.msra.mxu0 0.0
    %2548 = vmatpush.xpose.msra.mxu0 0.0
    %2549 = vmatpush.xpose.msra.mxu0 0.0
    %2550 = vmatpush.xpose.msra.mxu0 0.0
    %2551 = vmatpush.xpose.msra.mxu0 0.0
    %2552 = vmatpush.xpose.msra.mxu0 0.0
    %2553 = vmatpush.xpose.msra.mxu0 %v2433
    %2554 = vmatmul.f32.gmra.mxu0 %v2457
    %v2555 = vpop.f32.mrf.mxu0
    %v2556 = vadd.f32 %v2536, %v2555
    %2557 = vdwg.mxu0
    %2558 = vmatpush.xpose.msra.mxu0 0.0
    %2559 = vmatpush.xpose.msra.mxu0 0.0
    %2560 = vmatpush.xpose.msra.mxu0 0.0
    %2561 = vmatpush.xpose.msra.mxu0 0.0
    %2562 = vmatpush.xpose.msra.mxu0 0.0
    %2563 = vmatpush.xpose.msra.mxu0 0.0
    %2564 = vmatpush.xpose.msra.mxu0 0.0
    %2565 = vmatpush.xpose.msra.mxu0 0.0
    %2566 = vmatpush.xpose.msra.mxu0 0.0
    %2567 = vmatpush.xpose.msra.mxu0 0.0
    %2568 = vmatpush.xpose.msra.mxu0 0.0
    %2569 = vmatpush.xpose.msra.mxu0 0.0
    %2570 = vmatpush.xpose.msra.mxu0 0.0
    %2571 = vmatpush.xpose.msra.mxu0 0.0
    %2572 = vmatpush.xpose.msra.mxu0 0.0
    %2573 = vmatpush.xpose.msra.mxu0 %v2434
    %2574 = vmatmul.f32.gmra.mxu0 %v2458
    %v2575 = vpop.f32.mrf.mxu0
    %v2576 = vadd.f32 %v2556, %v2575
    %2577 = vdwg.mxu0
    %2578 = vmatpush.xpose.msra.mxu0 0.0
    %2579 = vmatpush.xpose.msra.mxu0 0.0
    %2580 = vmatpush.xpose.msra.mxu0 0.0
    %2581 = vmatpush.xpose.msra.mxu0 0.0
    %2582 = vmatpush.xpose.msra.mxu0 0.0
    %2583 = vmatpush.xpose.msra.mxu0 0.0
    %2584 = vmatpush.xpose.msra.mxu0 0.0
    %2585 = vmatpush.xpose.msra.mxu0 0.0
    %2586 = vmatpush.xpose.msra.mxu0 0.0
    %2587 = vmatpush.xpose.msra.mxu0 0.0
    %2588 = vmatpush.xpose.msra.mxu0 0.0
    %2589 = vmatpush.xpose.msra.mxu0 0.0
    %2590 = vmatpush.xpose.msra.mxu0 0.0
    %2591 = vmatpush.xpose.msra.mxu0 0.0
    %2592 = vmatpush.xpose.msra.mxu0 0.0
    %2593 = vmatpush.xpose.msra.mxu0 %v2435
    %2594 = vmatmul.f32.gmra.mxu0 %v2459
    %v2595 = vpop.f32.mrf.mxu0
    %v2596 = vadd.f32 %v2576, %v2595
    %2597 = vdwg.mxu0
    %2598 = vmatpush.xpose.msra.mxu0 0.0
    %2599 = vmatpush.xpose.msra.mxu0 0.0
    %2600 = vmatpush.xpose.msra.mxu0 0.0
    %2601 = vmatpush.xpose.msra.mxu0 0.0
    %2602 = vmatpush.xpose.msra.mxu0 0.0
    %2603 = vmatpush.xpose.msra.mxu0 0.0
    %2604 = vmatpush.xpose.msra.mxu0 0.0
    %2605 = vmatpush.xpose.msra.mxu0 0.0
    %2606 = vmatpush.xpose.msra.mxu0 0.0
    %2607 = vmatpush.xpose.msra.mxu0 0.0
    %2608 = vmatpush.xpose.msra.mxu0 0.0
    %2609 = vmatpush.xpose.msra.mxu0 0.0
    %2610 = vmatpush.xpose.msra.mxu0 0.0
    %2611 = vmatpush.xpose.msra.mxu0 0.0
    %2612 = vmatpush.xpose.msra.mxu0 0.0
    %2613 = vmatpush.xpose.msra.mxu0 %v2436
    %2614 = vmatmul.f32.gmra.mxu0 %v2460
    %v2615 = vpop.f32.mrf.mxu0
    %v2616 = vadd.f32 %v2596, %v2615
    %2617 = vdwg.mxu0
    %2618 = vmatpush.xpose.msra.mxu0 0.0
    %2619 = vmatpush.xpose.msra.mxu0 0.0
    %2620 = vmatpush.xpose.msra.mxu0 0.0
    %2621 = vmatpush.xpose.msra.mxu0 0.0
    %2622 = vmatpush.xpose.msra.mxu0 0.0
    %2623 = vmatpush.xpose.msra.mxu0 0.0
    %2624 = vmatpush.xpose.msra.mxu0 0.0
    %2625 = vmatpush.xpose.msra.mxu0 0.0
    %2626 = vmatpush.xpose.msra.mxu0 0.0
    %2627 = vmatpush.xpose.msra.mxu0 0.0
    %2628 = vmatpush.xpose.msra.mxu0 0.0
    %2629 = vmatpush.xpose.msra.mxu0 0.0
    %2630 = vmatpush.xpose.msra.mxu0 0.0
    %2631 = vmatpush.xpose.msra.mxu0 0.0
    %2632 = vmatpush.xpose.msra.mxu0 0.0
    %2633 = vmatpush.xpose.msra.mxu0 %v2437
    %2634 = vmatmul.f32.gmra.mxu0 %v2461
    %v2635 = vpop.f32.mrf.mxu0
    %v2636 = vadd.f32 %v2616, %v2635
    %2637 = vdwg.mxu0
    %2638 = vmatpush.xpose.msra.mxu0 0.0
    %2639 = vmatpush.xpose.msra.mxu0 0.0
    %2640 = vmatpush.xpose.msra.mxu0 0.0
    %2641 = vmatpush.xpose.msra.mxu0 0.0
    %2642 = vmatpush.xpose.msra.mxu0 0.0
    %2643 = vmatpush.xpose.msra.mxu0 0.0
    %2644 = vmatpush.xpose.msra.mxu0 0.0
    %2645 = vmatpush.xpose.msra.mxu0 0.0
    %2646 = vmatpush.xpose.msra.mxu0 0.0
    %2647 = vmatpush.xpose.msra.mxu0 0.0
    %2648 = vmatpush.xpose.msra.mxu0 0.0
    %2649 = vmatpush.xpose.msra.mxu0 0.0
    %2650 = vmatpush.xpose.msra.mxu0 0.0
    %2651 = vmatpush.xpose.msra.mxu0 0.0
    %2652 = vmatpush.xpose.msra.mxu0 0.0
    %2653 = vmatpush.xpose.msra.mxu0 %v2438
    %2654 = vmatmul.f32.gmra.mxu0 %v2462
    %v2655 = vpop.f32.mrf.mxu0
    %v2656 = vadd.f32 %v2636, %v2655
    %2657 = vdwg.mxu0
    %2658 = vmatpush.xpose.msra.mxu0 0.0
    %2659 = vmatpush.xpose.msra.mxu0 0.0
    %2660 = vmatpush.xpose.msra.mxu0 0.0
    %2661 = vmatpush.xpose.msra.mxu0 0.0
    %2662 = vmatpush.xpose.msra.mxu0 0.0
    %2663 = vmatpush.xpose.msra.mxu0 0.0
    %2664 = vmatpush.xpose.msra.mxu0 0.0
    %2665 = vmatpush.xpose.msra.mxu0 0.0
    %2666 = vmatpush.xpose.msra.mxu0 0.0
    %2667 = vmatpush.xpose.msra.mxu0 0.0
    %2668 = vmatpush.xpose.msra.mxu0 0.0
    %2669 = vmatpush.xpose.msra.mxu0 0.0
    %2670 = vmatpush.xpose.msra.mxu0 0.0
    %2671 = vmatpush.xpose.msra.mxu0 0.0
    %2672 = vmatpush.xpose.msra.mxu0 0.0
    %2673 = vmatpush.xpose.msra.mxu0 %v2439
    %2674 = vmatmul.f32.gmra.mxu0 %v2463
    %v2675 = vpop.f32.mrf.mxu0
    %v2676 = vadd.f32 %v2656, %v2675
    %2677 = vdwg.mxu0
    %2678 = vmatpush.xpose.msra.mxu0 0.0
    %2679 = vmatpush.xpose.msra.mxu0 0.0
    %2680 = vmatpush.xpose.msra.mxu0 0.0
    %2681 = vmatpush.xpose.msra.mxu0 0.0
    %2682 = vmatpush.xpose.msra.mxu0 0.0
    %2683 = vmatpush.xpose.msra.mxu0 0.0
    %2684 = vmatpush.xpose.msra.mxu0 0.0
    %2685 = vmatpush.xpose.msra.mxu0 0.0
    %2686 = vmatpush.xpose.msra.mxu0 0.0
    %2687 = vmatpush.xpose.msra.mxu0 0.0
    %2688 = vmatpush.xpose.msra.mxu0 0.0
    %2689 = vmatpush.xpose.msra.mxu0 0.0
    %2690 = vmatpush.xpose.msra.mxu0 0.0
    %2691 = vmatpush.xpose.msra.mxu0 0.0
    %2692 = vmatpush.xpose.msra.mxu0 0.0
    %2693 = vmatpush.xpose.msra.mxu0 %v2440
    %2694 = vmatmul.f32.gmra.mxu0 %v2464
    %v2695 = vpop.f32.mrf.mxu0
    %v2696 = vadd.f32 %v2676, %v2695
    %2697 = vdwg.mxu0
    %2698 = vmatpush.xpose.msra.mxu0 0.0
    %2699 = vmatpush.xpose.msra.mxu0 0.0
    %2700 = vmatpush.xpose.msra.mxu0 0.0
    %2701 = vmatpush.xpose.msra.mxu0 0.0
    %2702 = vmatpush.xpose.msra.mxu0 0.0
    %2703 = vmatpush.xpose.msra.mxu0 0.0
    %2704 = vmatpush.xpose.msra.mxu0 0.0
    %2705 = vmatpush.xpose.msra.mxu0 0.0
    %2706 = vmatpush.xpose.msra.mxu0 0.0
    %2707 = vmatpush.xpose.msra.mxu0 0.0
    %2708 = vmatpush.xpose.msra.mxu0 0.0
    %2709 = vmatpush.xpose.msra.mxu0 0.0
    %2710 = vmatpush.xpose.msra.mxu0 0.0
    %2711 = vmatpush.xpose.msra.mxu0 0.0
    %2712 = vmatpush.xpose.msra.mxu0 0.0
    %2713 = vmatpush.xpose.msra.mxu0 %v2441
    %2714 = vmatmul.f32.gmra.mxu0 %v2465
    %v2715 = vpop.f32.mrf.mxu0
    %v2716 = vadd.f32 %v2696, %v2715
    %2717 = vdwg.mxu0
    %2718 = vmatpush.xpose.msra.mxu0 0.0
    %2719 = vmatpush.xpose.msra.mxu0 0.0
    %2720 = vmatpush.xpose.msra.mxu0 0.0
    %2721 = vmatpush.xpose.msra.mxu0 0.0
    %2722 = vmatpush.xpose.msra.mxu0 0.0
    %2723 = vmatpush.xpose.msra.mxu0 0.0
    %2724 = vmatpush.xpose.msra.mxu0 0.0
    %2725 = vmatpush.xpose.msra.mxu0 0.0
    %2726 = vmatpush.xpose.msra.mxu0 0.0
    %2727 = vmatpush.xpose.msra.mxu0 0.0
    %2728 = vmatpush.xpose.msra.mxu0 0.0
    %2729 = vmatpush.xpose.msra.mxu0 0.0
    %2730 = vmatpush.xpose.msra.mxu0 0.0
    %2731 = vmatpush.xpose.msra.mxu0 0.0
    %2732 = vmatpush.xpose.msra.mxu0 0.0
    %2733 = vmatpush.xpose.msra.mxu0 %v2442
    %2734 = vmatmul.f32.gmra.mxu0 %v2466
    %v2735 = vpop.f32.mrf.mxu0
    %v2736 = vadd.f32 %v2716, %v2735
    %2737 = vdwg.mxu0
    %2738 = vmatpush.xpose.msra.mxu0 0.0
    %2739 = vmatpush.xpose.msra.mxu0 0.0
    %2740 = vmatpush.xpose.msra.mxu0 0.0
    %2741 = vmatpush.xpose.msra.mxu0 0.0
    %2742 = vmatpush.xpose.msra.mxu0 0.0
    %2743 = vmatpush.xpose.msra.mxu0 0.0
    %2744 = vmatpush.xpose.msra.mxu0 0.0
    %2745 = vmatpush.xpose.msra.mxu0 0.0
    %2746 = vmatpush.xpose.msra.mxu0 0.0
    %2747 = vmatpush.xpose.msra.mxu0 0.0
    %2748 = vmatpush.xpose.msra.mxu0 0.0
    %2749 = vmatpush.xpose.msra.mxu0 0.0
    %2750 = vmatpush.xpose.msra.mxu0 0.0
    %2751 = vmatpush.xpose.msra.mxu0 0.0
    %2752 = vmatpush.xpose.msra.mxu0 0.0
    %2753 = vmatpush.xpose.msra.mxu0 %v2443
    %2754 = vmatmul.f32.gmra.mxu0 %v2467
    %v2755 = vpop.f32.mrf.mxu0
    %v2756 = vadd.f32 %v2736, %v2755
    %2757 = vdwg.mxu0
    %2758 = vmatpush.xpose.msra.mxu0 0.0
    %2759 = vmatpush.xpose.msra.mxu0 0.0
    %2760 = vmatpush.xpose.msra.mxu0 0.0
    %2761 = vmatpush.xpose.msra.mxu0 0.0
    %2762 = vmatpush.xpose.msra.mxu0 0.0
    %2763 = vmatpush.xpose.msra.mxu0 0.0
    %2764 = vmatpush.xpose.msra.mxu0 0.0
    %2765 = vmatpush.xpose.msra.mxu0 0.0
    %2766 = vmatpush.xpose.msra.mxu0 0.0
    %2767 = vmatpush.xpose.msra.mxu0 0.0
    %2768 = vmatpush.xpose.msra.mxu0 0.0
    %2769 = vmatpush.xpose.msra.mxu0 0.0
    %2770 = vmatpush.xpose.msra.mxu0 0.0
    %2771 = vmatpush.xpose.msra.mxu0 0.0
    %2772 = vmatpush.xpose.msra.mxu0 0.0
    %2773 = vmatpush.xpose.msra.mxu0 %v2444
    %2774 = vmatmul.f32.gmra.mxu0 %v2468
    %v2775 = vpop.f32.mrf.mxu0
    %v2776 = vadd.f32 %v2756, %v2775
    %2777 = vdwg.mxu0
    %2778 = vmatpush.xpose.msra.mxu0 0.0
    %2779 = vmatpush.xpose.msra.mxu0 0.0
    %2780 = vmatpush.xpose.msra.mxu0 0.0
    %2781 = vmatpush.xpose.msra.mxu0 0.0
    %2782 = vmatpush.xpose.msra.mxu0 0.0
    %2783 = vmatpush.xpose.msra.mxu0 0.0
    %2784 = vmatpush.xpose.msra.mxu0 0.0
    %2785 = vmatpush.xpose.msra.mxu0 0.0
    %2786 = vmatpush.xpose.msra.mxu0 0.0
    %2787 = vmatpush.xpose.msra.mxu0 0.0
    %2788 = vmatpush.xpose.msra.mxu0 0.0
    %2789 = vmatpush.xpose.msra.mxu0 0.0
    %2790 = vmatpush.xpose.msra.mxu0 0.0
    %2791 = vmatpush.xpose.msra.mxu0 0.0
    %2792 = vmatpush.xpose.msra.mxu0 0.0
    %2793 = vmatpush.xpose.msra.mxu0 %v2445
    %2794 = vmatmul.f32.gmra.mxu0 %v2469
    %v2795 = vpop.f32.mrf.mxu0
    %v2796 = vadd.f32 %v2776, %v2795
    %2797 = vdwg.mxu0
    %2798 = vmatpush.xpose.msra.mxu0 0.0
    %2799 = vmatpush.xpose.msra.mxu0 0.0
    %2800 = vmatpush.xpose.msra.mxu0 0.0
    %2801 = vmatpush.xpose.msra.mxu0 0.0
    %2802 = vmatpush.xpose.msra.mxu0 0.0
    %2803 = vmatpush.xpose.msra.mxu0 0.0
    %2804 = vmatpush.xpose.msra.mxu0 0.0
    %2805 = vmatpush.xpose.msra.mxu0 0.0
    %2806 = vmatpush.xpose.msra.mxu0 0.0
    %2807 = vmatpush.xpose.msra.mxu0 0.0
    %2808 = vmatpush.xpose.msra.mxu0 0.0
    %2809 = vmatpush.xpose.msra.mxu0 0.0
    %2810 = vmatpush.xpose.msra.mxu0 0.0
    %2811 = vmatpush.xpose.msra.mxu0 0.0
    %2812 = vmatpush.xpose.msra.mxu0 0.0
    %2813 = vmatpush.xpose.msra.mxu0 %v2446
    %2814 = vmatmul.f32.gmra.mxu0 %v2470
    %v2815 = vpop.f32.mrf.mxu0
    %v2816 = vadd.f32 %v2796, %v2815
    %2817 = vdwg.mxu0
    %2818 = vmatpush.xpose.msra.mxu0 0.0
    %2819 = vmatpush.xpose.msra.mxu0 0.0
    %2820 = vmatpush.xpose.msra.mxu0 0.0
    %2821 = vmatpush.xpose.msra.mxu0 0.0
    %2822 = vmatpush.xpose.msra.mxu0 0.0
    %2823 = vmatpush.xpose.msra.mxu0 0.0
    %2824 = vmatpush.xpose.msra.mxu0 0.0
    %2825 = vmatpush.xpose.msra.mxu0 0.0
    %2826 = vmatpush.xpose.msra.mxu0 0.0
    %2827 = vmatpush.xpose.msra.mxu0 0.0
    %2828 = vmatpush.xpose.msra.mxu0 0.0
    %2829 = vmatpush.xpose.msra.mxu0 0.0
    %2830 = vmatpush.xpose.msra.mxu0 0.0
    %2831 = vmatpush.xpose.msra.mxu0 0.0
    %2832 = vmatpush.xpose.msra.mxu0 0.0
    %2833 = vmatpush.xpose.msra.mxu0 %v2447
    %2834 = vmatmul.f32.gmra.mxu0 %v2471
    %v2835 = vpop.f32.mrf.mxu0
    %v2836 = vadd.f32 %v2816, %v2835
    %2837 = vdwg.mxu0
    %2838 = vmatpush.xpose.msra.mxu0 0.0
    %2839 = vmatpush.xpose.msra.mxu0 0.0
    %2840 = vmatpush.xpose.msra.mxu0 0.0
    %2841 = vmatpush.xpose.msra.mxu0 0.0
    %2842 = vmatpush.xpose.msra.mxu0 0.0
    %2843 = vmatpush.xpose.msra.mxu0 0.0
    %2844 = vmatpush.xpose.msra.mxu0 0.0
    %2845 = vmatpush.xpose.msra.mxu0 0.0
    %2846 = vmatpush.xpose.msra.mxu0 0.0
    %2847 = vmatpush.xpose.msra.mxu0 0.0
    %2848 = vmatpush.xpose.msra.mxu0 0.0
    %2849 = vmatpush.xpose.msra.mxu0 0.0
    %2850 = vmatpush.xpose.msra.mxu0 0.0
    %2851 = vmatpush.xpose.msra.mxu0 0.0
    %2852 = vmatpush.xpose.msra.mxu0 0.0
    %2853 = vmatpush.xpose.msra.mxu0 %v2448
    %2854 = vmatmul.f32.gmra.mxu0 %v2472
    %v2855 = vpop.f32.mrf.mxu0
    %v2856 = vadd.f32 %v2836, %v2855
    %2857 = vdwg.mxu0
    %2858 = vmatpush.xpose.msra.mxu0 0.0
    %2859 = vmatpush.xpose.msra.mxu0 0.0
    %2860 = vmatpush.xpose.msra.mxu0 0.0
    %2861 = vmatpush.xpose.msra.mxu0 0.0
    %2862 = vmatpush.xpose.msra.mxu0 0.0
    %2863 = vmatpush.xpose.msra.mxu0 0.0
    %2864 = vmatpush.xpose.msra.mxu0 0.0
    %2865 = vmatpush.xpose.msra.mxu0 0.0
    %2866 = vmatpush.xpose.msra.mxu0 0.0
    %2867 = vmatpush.xpose.msra.mxu0 0.0
    %2868 = vmatpush.xpose.msra.mxu0 0.0
    %2869 = vmatpush.xpose.msra.mxu0 0.0
    %2870 = vmatpush.xpose.msra.mxu0 0.0
    %2871 = vmatpush.xpose.msra.mxu0 0.0
    %2872 = vmatpush.xpose.msra.mxu0 0.0
    %2873 = vmatpush.xpose.msra.mxu0 %v2449
    %2874 = vmatmul.f32.gmra.mxu0 %v2473
    %v2875 = vpop.f32.mrf.mxu0
    %v2876 = vadd.f32 %v2856, %v2875
    %2877 = vdwg.mxu0
    %2878 = vmatpush.xpose.msra.mxu0 0.0
    %2879 = vmatpush.xpose.msra.mxu0 0.0
    %2880 = vmatpush.xpose.msra.mxu0 0.0
    %2881 = vmatpush.xpose.msra.mxu0 0.0
    %2882 = vmatpush.xpose.msra.mxu0 0.0
    %2883 = vmatpush.xpose.msra.mxu0 0.0
    %2884 = vmatpush.xpose.msra.mxu0 0.0
    %2885 = vmatpush.xpose.msra.mxu0 0.0
    %2886 = vmatpush.xpose.msra.mxu0 0.0
    %2887 = vmatpush.xpose.msra.mxu0 0.0
    %2888 = vmatpush.xpose.msra.mxu0 0.0
    %2889 = vmatpush.xpose.msra.mxu0 0.0
    %2890 = vmatpush.xpose.msra.mxu0 0.0
    %2891 = vmatpush.xpose.msra.mxu0 0.0
    %2892 = vmatpush.xpose.msra.mxu0 0.0
    %2893 = vmatpush.xpose.msra.mxu0 %v2450
    %2894 = vmatmul.f32.gmra.mxu0 %v2474
    %v2895 = vpop.f32.mrf.mxu0
    %v2896 = vadd.f32 %v2876, %v2895
    %2897 = vdwg.mxu0
    %2898 = vmatpush.xpose.msra.mxu0 0.0
    %2899 = vmatpush.xpose.msra.mxu0 0.0
    %2900 = vmatpush.xpose.msra.mxu0 0.0
    %2901 = vmatpush.xpose.msra.mxu0 0.0
    %2902 = vmatpush.xpose.msra.mxu0 0.0
    %2903 = vmatpush.xpose.msra.mxu0 0.0
    %2904 = vmatpush.xpose.msra.mxu0 0.0
    %2905 = vmatpush.xpose.msra.mxu0 0.0
    %2906 = vmatpush.xpose.msra.mxu0 0.0
    %2907 = vmatpush.xpose.msra.mxu0 0.0
    %2908 = vmatpush.xpose.msra.mxu0 0.0
    %2909 = vmatpush.xpose.msra.mxu0 0.0
    %2910 = vmatpush.xpose.msra.mxu0 0.0
    %2911 = vmatpush.xpose.msra.mxu0 0.0
    %2912 = vmatpush.xpose.msra.mxu0 0.0
    %2913 = vmatpush.xpose.msra.mxu0 %v2451
    %2914 = vmatmul.f32.gmra.mxu0 %v2475
    %v2915 = vpop.f32.mrf.mxu0
    %v2916 = vadd.f32 %v2896, %v2915
    %2917 = vdwg.mxu0
    %2918 = vmatpush.xpose.msra.mxu0 0.0
    %2919 = vmatpush.xpose.msra.mxu0 0.0
    %2920 = vmatpush.xpose.msra.mxu0 0.0
    %2921 = vmatpush.xpose.msra.mxu0 0.0
    %2922 = vmatpush.xpose.msra.mxu0 0.0
    %2923 = vmatpush.xpose.msra.mxu0 0.0
    %2924 = vmatpush.xpose.msra.mxu0 0.0
    %2925 = vmatpush.xpose.msra.mxu0 0.0
    %2926 = vmatpush.xpose.msra.mxu0 0.0
    %2927 = vmatpush.xpose.msra.mxu0 0.0
    %2928 = vmatpush.xpose.msra.mxu0 0.0
    %2929 = vmatpush.xpose.msra.mxu0 0.0
    %2930 = vmatpush.xpose.msra.mxu0 0.0
    %2931 = vmatpush.xpose.msra.mxu0 0.0
    %2932 = vmatpush.xpose.msra.mxu0 0.0
    %2933 = vmatpush.xpose.msra.mxu0 %v2452
    %2934 = vmatmul.f32.gmra.mxu0 %v2476
    %v2935 = vpop.f32.mrf.mxu0
    %v2936 = vadd.f32 %v2916, %v2935
    %2937 = vdwg.mxu0
    %2938 = vmatpush.xpose.msra.mxu0 0.0
    %2939 = vmatpush.xpose.msra.mxu0 0.0
    %2940 = vmatpush.xpose.msra.mxu0 0.0
    %2941 = vmatpush.xpose.msra.mxu0 0.0
    %2942 = vmatpush.xpose.msra.mxu0 0.0
    %2943 = vmatpush.xpose.msra.mxu0 0.0
    %2944 = vmatpush.xpose.msra.mxu0 0.0
    %2945 = vmatpush.xpose.msra.mxu0 0.0
    %2946 = vmatpush.xpose.msra.mxu0 0.0
    %2947 = vmatpush.xpose.msra.mxu0 0.0
    %2948 = vmatpush.xpose.msra.mxu0 0.0
    %2949 = vmatpush.xpose.msra.mxu0 0.0
    %2950 = vmatpush.xpose.msra.mxu0 0.0
    %2951 = vmatpush.xpose.msra.mxu0 0.0
    %2952 = vmatpush.xpose.msra.mxu0 0.0
    %2953 = vmatpush.xpose.msra.mxu0 %v2453
    %2954 = vmatmul.f32.gmra.mxu0 %v2477
    %v2955 = vpop.f32.mrf.mxu0
    %v2956 = vadd.f32 %v2936, %v2955
    %2957 = vdwg.mxu0
    %v2958 = vld [vmem:[#allocation6] sm:$0xff]
    %v2959 = vld [vmem:[%s4] sm:$0x1]
    %v2961 = vperm.slane %v2959, 0
    %vm2963 = vcmask 64512
    %v2965 = vsel %vm2963, %v2956, 0
    %2967 = vmatpush.msra.mxu0 0.0
    %2968 = vmatpush.msra.mxu0 0.0
    %2969 = vmatpush.msra.mxu0 0.0
    %2970 = vmatpush.msra.mxu0 0.0
    %2971 = vmatpush.msra.mxu0 0.0
    %2972 = vmatpush.msra.mxu0 0.0
    %2973 = vmatpush.msra.mxu0 0.0
    %2974 = vmatpush.msra.mxu0 0.0
    %2975 = vmatpush.msra.mxu0 0.0
    %2976 = vmatpush.msra.mxu0 0.0
    %2977 = vmatpush.msra.mxu0 0.0
    %2978 = vmatpush.msra.mxu0 0.0
    %2979 = vmatpush.msra.mxu0 0.0
    %2980 = vmatpush.msra.mxu0 0.0
    %2981 = vmatpush.msra.mxu0 0.0
    %2982 = vmatpush.msra.mxu0 %v2958
    %2983 = vmatmul.f32.gmra.mxu0 %v2965
    %v2984 = vpop.f32.mrf.mxu0
    %v2985 = vadd.f32 %v2961, %v2984
    %2986 = vdwg.mxu0
    %2987 = vmax.xlane.f32.xlu0 %v2985
    %v2988 = vpop.xlane.xlu0 %2987
    %v2989 = vsub.f32 %v2985, %v2988
    %v2990 = vmul.f32 %v2989, 1.442695
    %v2991 = vpow.pop %v2990
    %2992 = vadd.xlane.f32.xlu0 %v2991
    %v2993 = vpop.xlane.xlu0 %2992
    %v2994 = vrcp.pop %v2993
    %v2995 = vmul.f32 %v2993, %v2994
    %v2996 = vsub.f32 2.0, %v2995
    %v2997 = vmul.f32 %v2994, %v2996
    %v2998 = vmul.f32 %v2991, %v2997
    %2999 = vst [vmem:[#allocation9] sm:$0xff] %v2998
    // Predicated region
    $region38: #{tpu_custom_call.1} parent=1 // pred_check
      _
    $region39: #{tpu_custom_call.1} parent=1 // pred_check_branch
      %3001 = sbr.rel (0) target = $region41
    $region40: #{tpu_custom_call.1} parent=1 // pred_region
      %3003 = vsyncadd [#allocation5], 0
      %s3005 = sshll.u32 [#allocation9], 4
      %s3006 = int_to_ptr.vmem [resolvable:$true] %s3005
      %s3007 = sshll.u32 %s6, 4
      %s3008 = int_to_ptr.hbm [resolvable:$true] %s3007
      %3010 = dma.vmem_to_hbm [thread:$0]  %s3006, 128, %s3008, [#allocation5]
    $region41: #{tpu_custom_call.1} parent=1 // pred_fallthru
      _
    // Predicated region
    $region42: #{tpu_custom_call.1} parent=1 // pred_check
      _
    $region43: #{tpu_custom_call.1} parent=1 // pred_check_branch
      %3012 = sbr.rel (0) target = $region45
    $region44: #{tpu_custom_call.1} parent=1 // pred_region
      %3014 = dma.done [#allocation5], 128
    $region45: #{tpu_custom_call.1} parent=1 // pred_fallthru
      _
    %3015 = vsyncpa [#allocation4], 1
    %3016 = vsyncpa [#allocation7], 1
    %3017 = vsyncpa [#allocation5], 1

</llo_original>
